<compile_context>
chip_gen: v5e
topology: v5e:2x2
jax: 0.10.0
libtpu: 0.0.40
codegen_flags: <defaults>
</compile_context>

<pallas_src>
import functools
import math

import jax
import jax.numpy as jnp
from jax import lax
from jax.experimental import pallas as pl
from jax.experimental.pallas import tpu as pltpu

EPS = 1e-6


# ------------------------------- in-kernel building blocks -------------------------------

def _layer_norm(x, a, b):
    # x: [R, D]; a, b: [1, D].  Matches the torch module exactly:
    #   std = x.std(-1)  (unbiased, /(D-1));  out = a*(x-mean)/sqrt(std**2+eps)+b
    # which is a*(x-mean)*rsqrt(var_unbiased + eps) + b.
    d = x.shape[-1]
    mean = jnp.mean(x, axis=-1, keepdims=True)
    diff = x - mean
    var = jnp.sum(diff * diff, axis=-1, keepdims=True) * (1.0 / (d - 1))
    return a * diff * lax.rsqrt(var + EPS) + b


def _linear(x_f32, w_bf16, b_f32):
    # bf16 operands into the MXU, f32 accumulation, f32 bias add on the VPU.
    return jnp.dot(x_f32.astype(jnp.bfloat16), w_bf16,
                   preferred_element_type=jnp.float32) + b_f32


def _attend(ctx_ref, q, k, v, bias, wo, bo, *, n_heads, bb, tq, tk):
    # q: [Bb*Tq, D] f32 (already scaled by 1/sqrt(dk)), k/v: [Bb*Tk, D] f32,
    # bias: [Bb, Mq, Tk] additive mask bias (Mq in {1, Tq}),
    # wo: [D, D] bf16, bo: [1, D] f32, ctx_ref: [Bb*Tq, D] f32 VMEM scratch.
    d = q.shape[-1]
    dk = d // n_heads
    qb = q.astype(jnp.bfloat16)
    kb = k.astype(jnp.bfloat16)
    vb = v.astype(jnp.bfloat16)
    contract_last = (((1,), (1,)), ((), ()))  # q @ k^T without materializing k^T

    for b in range(bb):                       # static unroll over the batch block
        rq = slice(b * tq, (b + 1) * tq)
        rk = slice(b * tk, (b + 1) * tk)
        bias_b = bias[b]                      # [Mq, Tk]; broadcasts over query rows
        for h in range(n_heads):              # static unroll over heads (lane slices)
            sl = slice(h * dk, (h + 1) * dk)
            s = lax.dot_general(qb[rq, sl], kb[rk, sl], contract_last,
                                preferred_element_type=jnp.float32)   # [Tq, Tk] f32
            s = s + bias_b
            m = jnp.max(s, axis=-1, keepdims=True)
            p = jnp.exp(s - m)
            p = p / jnp.sum(p, axis=-1, keepdims=True)   # exact division (ref fidelity)
            # head context lands in its lane slice of the scratch
            ctx_ref[rq, sl] = jnp.dot(p.astype(jnp.bfloat16), vb[rk, sl],
                                      preferred_element_type=jnp.float32)
    # ONE full-depth (D) output projection for all heads / batch rows
    return _linear(ctx_ref[...], wo, bo)


# ------------------------------- fused decoder kernel -------------------------------

def _decoder_kernel(x_ref, mem_ref, smask_ref, tmask_ref,
                    sa_wqkv_ref, sa_bqkv_ref, sa_wo_ref, sa_bo_ref,
                    ca_wq_ref, ca_bq_ref, ca_wkv_ref, ca_bkv_ref,
                    ca_wo_ref, ca_bo_ref,
                    ff_w1_ref, ff_b1_ref, ff_w2_ref, ff_b2_ref,
                    ln_a_ref, ln_b_ref, fnorm_a_ref, fnorm_b_ref,
                    o_ref,
                    x_scratch, ctx_scratch,
                    *, n_heads, bb, tq, s_len):
    l = pl.program_id(1)
    n_layers = pl.num_programs(1)
    d = x_scratch.shape[-1]
    dk = d // n_heads
    scale = 1.0 / math.sqrt(dk)

    # Layer 0: load the input block into the residual carry (flattened rows).
    @pl.when(l == 0)
    def _():
        x_scratch[...] = x_ref[...].reshape(bb * tq, d).astype(jnp.float32)

    # Additive mask biases: once per grid step, hoisted out of the head loops.
    tbias = jnp.where(tmask_ref[...] == 0, -1e9, 0.0).astype(jnp.float32)  # [Bb,T,T]
    sbias = jnp.where(smask_ref[...] == 0, -1e9, 0.0).astype(jnp.float32)  # [Bb,1,S]

    mem2d = mem_ref[...].reshape(bb * s_len, d).astype(jnp.float32)

    ln_a = ln_a_ref[...]   # [3, D] — per-sublayer LayerNorm params of this layer
    ln_b = ln_b_ref[...]

    x = x_scratch[...]     # [Bb*T, D] f32 residual stream

    # ---- sublayer 0: self-attention, x + attn(norm(x))  (dropout = identity in eval)
    y = _layer_norm(x, ln_a[0:1], ln_b[0:1])
    qkv = _linear(y, sa_wqkv_ref[...], sa_bqkv_ref[...])        # one [*,D]x[D,3D] pass
    x = x + _attend(ctx_scratch,
                    qkv[:, 0:d] * scale, qkv[:, d:2 * d], qkv[:, 2 * d:3 * d],
                    tbias, sa_wo_ref[...], sa_bo_ref[...],
                    n_heads=n_heads, bb=bb, tq=tq, tk=tq)

    # ---- sublayer 1: source attention over encoder memory
    y = _layer_norm(x, ln_a[1:2], ln_b[1:2])
    q = _linear(y, ca_wq_ref[...], ca_bq_ref[...]) * scale
    kv = _linear(mem2d, ca_wkv_ref[...], ca_bkv_ref[...])       # one [*,D]x[D,2D] pass
    x = x + _attend(ctx_scratch,
                    q, kv[:, 0:d], kv[:, d:2 * d],
                    sbias, ca_wo_ref[...], ca_bo_ref[...],
                    n_heads=n_heads, bb=bb, tq=tq, tk=s_len)

    # ---- sublayer 2: position-wise feed-forward
    y = _layer_norm(x, ln_a[2:3], ln_b[2:3])
    h1 = jnp.maximum(_linear(y, ff_w1_ref[...], ff_b1_ref[...]), 0.0)
    x = x + _linear(h1, ff_w2_ref[...], ff_b2_ref[...])

    x_scratch[...] = x   # carry to the next layer step

    @pl.when(l == n_layers - 1)
    def _():
        o_ref[...] = _layer_norm(x, fnorm_a_ref[...], fnorm_b_ref[...]
                                 ).reshape(bb, tq, d).astype(o_ref.dtype)


# ------------------------------- wrapper -------------------------------

def decoder_forward(params, x, memory, src_mask, tgt_mask, *, n_heads, b_block=None):
    B, T, D = x.shape
    S = memory.shape[1]
    N = params['sa_wqkv'].shape[0]
    Dff = params['ff_w1'].shape[-1]

    if b_block is None:
        # keep grid axis 0 length >= 2 when possible so both v7x TCs stay busy
        b_block = max(1, B // 2)
    assert B % b_block == 0

    def per_batch(tail):
        nd = len(tail)
        return pl.BlockSpec((b_block,) + tail, lambda b, l: (b,) + (0,) * nd)

    def per_layer(tail):
        nd = len(tail)
        return pl.BlockSpec((None,) + tail, lambda b, l: (l,) + (0,) * nd)

    def const(shape):
        return pl.BlockSpec(shape, lambda b, l: (0,) * len(shape))

    in_specs = [
        per_batch((T, D)),                              # x
        per_batch((S, D)),                              # memory
        per_batch((1, S)),                              # src_mask (compact)
        per_batch((T, T)),                              # tgt_mask
        per_layer((D, 3 * D)), per_layer((1, 3 * D)),   # self-attn fused q|k|v
        per_layer((D, D)),     per_layer((1, D)),       # self-attn out proj
        per_layer((D, D)),     per_layer((1, D)),       # src-attn q
        per_layer((D, 2 * D)), per_layer((1, 2 * D)),   # src-attn fused k|v
        per_layer((D, D)),     per_layer((1, D)),       # src-attn out proj
        per_layer((D, Dff)),   per_layer((1, Dff)),     # ffn layer 1
        per_layer((Dff, D)),   per_layer((1, D)),       # ffn layer 2
        per_layer((3, D)),     per_layer((3, D)),       # per-sublayer layernorms
        const((1, D)),         const((1, D)),           # final layernorm
    ]

    # VMEM budget: streamed (double-buffered) per-step blocks + headroom,
    # clamped to be safe across v5e/v6e (128 MiB) and v7x (64 MiB per TC).
    def nbytes(shape, dtype):
        return math.prod(shape) * jnp.dtype(dtype).itemsize

    per_step = (
        nbytes((D, 3 * D), jnp.bfloat16) + nbytes((1, 3 * D), jnp.float32) +
        3 * nbytes((D, D), jnp.bfloat16) + 3 * nbytes((1, D), jnp.float32) +
        nbytes((D, 2 * D), jnp.bfloat16) + nbytes((1, 2 * D), jnp.float32) +
        nbytes((D, Dff), jnp.bfloat16) + nbytes((1, Dff), jnp.float32) +
        nbytes((Dff, D), jnp.bfloat16) + nbytes((1, D), jnp.float32) +
        2 * nbytes((3, D), jnp.float32) + 2 * nbytes((1, D), jnp.float32) +
        2 * nbytes((b_block, T, D), x.dtype) + nbytes((b_block, S, D), memory.dtype) +
        nbytes((b_block, 1, S), src_mask.dtype) + nbytes((b_block, T, T), tgt_mask.dtype)
    )
    vmem_limit = int(min(64 * 1024 * 1024,
                         max(16 * 1024 * 1024, 2 * per_step + 4 * 1024 * 1024)))

    kernel = functools.partial(_decoder_kernel, n_heads=n_heads,
                               bb=b_block, tq=T, s_len=S)
    return pl.pallas_call(
        kernel,
        grid=(B // b_block, N),
        in_specs=in_specs,
        out_specs=per_batch((T, D)),
        out_shape=jax.ShapeDtypeStruct((B, T, D), x.dtype),
        scratch_shapes=[
            pltpu.VMEM((b_block * T, D), jnp.float32),   # residual carry across layers
            pltpu.VMEM((b_block * T, D), jnp.float32),   # per-head context assembly
        ],
        compiler_params=pltpu.CompilerParams(
            dimension_semantics=("parallel", "arbitrary"),  # batch parallel, layers sequential
            vmem_limit_bytes=vmem_limit,
        ),
    )(x, memory, src_mask, tgt_mask,
      params['sa_wqkv'], params['sa_bqkv'], params['sa_wo'], params['sa_bo'],
      params['ca_wq'], params['ca_bq'], params['ca_wkv'], params['ca_bkv'],
      params['ca_wo'], params['ca_bo'],
      params['ff_w1'], params['ff_b1'], params['ff_w2'], params['ff_b2'],
      params['ln_a'], params['ln_b'], params['fnorm_a'], params['fnorm_b'])


# ------------------------------- deterministic init -------------------------------

def _init_linear(key, out_dim, in_dim):
    kw, kb = jax.random.split(key)
    lim = 1.0 / math.sqrt(in_dim)
    w = jax.random.uniform(kw, (out_dim, in_dim), jnp.float32, -lim, lim)  # torch [out, in]
    b = jax.random.uniform(kb, (out_dim,), jnp.float32, -lim, lim)
    return w, b


def init_params(key, d_model, d_ff, n_layers):
    k_self, k_src, k_ff1, k_ff2 = jax.random.split(key, 4)

    def attn_weights(k):
        ks = jax.random.split(k, 4)
        return [_init_linear(ks[i], d_model, d_model) for i in range(4)]  # q, k, v, o

    (sq, sk, sv, so) = attn_weights(k_self)
    (cq, ck, cv, co) = attn_weights(k_src)
    w1, b1 = _init_linear(k_ff1, d_ff, d_model)
    w2, b2 = _init_linear(k_ff2, d_model, d_ff)

    bf = lambda a: a.astype(jnp.bfloat16)          # weights in bf16 (MXU-native, half DMA)

    def stack(a):
        # clones() deepcopies one layer -> all N layers start with identical weights
        return jnp.stack([a] * n_layers, axis=0)

    sa_wqkv = bf(jnp.concatenate([sq[0].T, sk[0].T, sv[0].T], axis=1))       # [D, 3D]
    sa_bqkv = jnp.concatenate([sq[1], sk[1], sv[1]]).reshape(1, 3 * d_model)  # f32
    ca_wkv = bf(jnp.concatenate([ck[0].T, cv[0].T], axis=1))                  # [D, 2D]
    ca_bkv = jnp.concatenate([ck[1], cv[1]]).reshape(1, 2 * d_model)

    return dict(
        sa_wqkv=stack(sa_wqkv), sa_bqkv=stack(sa_bqkv),
        sa_wo=stack(bf(so[0].T)), sa_bo=stack(so[1].reshape(1, d_model)),
        ca_wq=stack(bf(cq[0].T)), ca_bq=stack(cq[1].reshape(1, d_model)),
        ca_wkv=stack(ca_wkv), ca_bkv=stack(ca_bkv),
        ca_wo=stack(bf(co[0].T)), ca_bo=stack(co[1].reshape(1, d_model)),
        ff_w1=stack(bf(w1.T)), ff_b1=stack(b1.reshape(1, d_ff)),
        ff_w2=stack(bf(w2.T)), ff_b2=stack(b2.reshape(1, d_model)),
        ln_a=jnp.ones((n_layers, 3, d_model), jnp.float32),
        ln_b=jnp.zeros((n_layers, 3, d_model), jnp.float32),
        fnorm_a=jnp.ones((1, d_model), jnp.float32),
        fnorm_b=jnp.zeros((1, d_model), jnp.float32),
    )


# ------------------------------- main -------------------------------

if __name__ == "__main__":
    # small but lane-dense shapes: D=128 keeps all loads/stores full-width
    B, T, S = 2, 8, 16                 # batch, target seq, source (memory) seq
    d_model, n_heads, d_ff, n_layers = 128, 4, 256, 2

    key = jax.random.PRNGKey(0)
    k_p, k_x, k_m = jax.random.split(key, 3)
    params = init_params(k_p, d_model, d_ff, n_layers)

    x = jax.random.normal(k_x, (B, T, d_model), jnp.float32)
    memory = jax.random.normal(k_m, (B, S, d_model), jnp.float32)
    src_mask = jnp.ones((B, 1, S), jnp.float32)
    tgt_mask = jnp.broadcast_to(jnp.tril(jnp.ones((T, T), jnp.float32)), (B, T, T))

    out = decoder_forward(params, x, memory, src_mask, tgt_mask, n_heads=n_heads)
    out = jax.block_until_ready(out)
    assert out.shape == (B, T, d_model)
    print("KERNEL_OK")
</pallas_src>

<mosaic_0001>
module attributes {stable_mosaic.version = 11 : i64} {
  func.func @_decoder_kernel(%arg0: i32, %arg1: i32, %arg2: memref<1x8x128xf32, #tpu.memory_space<vmem>>, %arg3: memref<1x16x128xf32, #tpu.memory_space<vmem>>, %arg4: memref<1x1x16xf32, #tpu.memory_space<vmem>>, %arg5: memref<1x8x8xf32, #tpu.memory_space<vmem>>, %arg6: memref<1x128x384xbf16, #tpu.memory_space<vmem>>, %arg7: memref<1x1x384xf32, #tpu.memory_space<vmem>>, %arg8: memref<1x128x128xbf16, #tpu.memory_space<vmem>>, %arg9: memref<1x1x128xf32, #tpu.memory_space<vmem>>, %arg10: memref<1x128x128xbf16, #tpu.memory_space<vmem>>, %arg11: memref<1x1x128xf32, #tpu.memory_space<vmem>>, %arg12: memref<1x128x256xbf16, #tpu.memory_space<vmem>>, %arg13: memref<1x1x256xf32, #tpu.memory_space<vmem>>, %arg14: memref<1x128x128xbf16, #tpu.memory_space<vmem>>, %arg15: memref<1x1x128xf32, #tpu.memory_space<vmem>>, %arg16: memref<1x128x256xbf16, #tpu.memory_space<vmem>>, %arg17: memref<1x1x256xf32, #tpu.memory_space<vmem>>, %arg18: memref<1x256x128xbf16, #tpu.memory_space<vmem>>, %arg19: memref<1x1x128xf32, #tpu.memory_space<vmem>>, %arg20: memref<1x3x128xf32, #tpu.memory_space<vmem>>, %arg21: memref<1x3x128xf32, #tpu.memory_space<vmem>>, %arg22: memref<1x128xf32, #tpu.memory_space<vmem>>, %arg23: memref<1x128xf32, #tpu.memory_space<vmem>>, %arg24: memref<1x8x128xf32, #tpu.memory_space<vmem>>, %arg25: memref<8x128xf32, #tpu.memory_space<vmem>>, %arg26: memref<8x128xf32, #tpu.memory_space<vmem>>) attributes {dimension_semantics = [#tpu.dimension_semantics<parallel>, #tpu.dimension_semantics<arbitrary>], iteration_bounds = array<i64: 2, 2>, scalar_prefetch = 0 : i64, scratch_operands = 2 : i64, tpu.core_type = #tpu.core_type<tc>, window_params = [{transform_indices = @transform_0, window_bounds = array<i64: 1, 8, 128>}, {transform_indices = @transform_1, window_bounds = array<i64: 1, 16, 128>}, {transform_indices = @transform_2, window_bounds = array<i64: 1, 1, 16>}, {transform_indices = @transform_3, window_bounds = array<i64: 1, 8, 8>}, {transform_indices = @transform_4, window_bounds = array<i64: 1, 128, 384>}, {transform_indices = @transform_5, window_bounds = array<i64: 1, 1, 384>}, {transform_indices = @transform_6, window_bounds = array<i64: 1, 128, 128>}, {transform_indices = @transform_7, window_bounds = array<i64: 1, 1, 128>}, {transform_indices = @transform_8, window_bounds = array<i64: 1, 128, 128>}, {transform_indices = @transform_9, window_bounds = array<i64: 1, 1, 128>}, {transform_indices = @transform_10, window_bounds = array<i64: 1, 128, 256>}, {transform_indices = @transform_11, window_bounds = array<i64: 1, 1, 256>}, {transform_indices = @transform_12, window_bounds = array<i64: 1, 128, 128>}, {transform_indices = @transform_13, window_bounds = array<i64: 1, 1, 128>}, {transform_indices = @transform_14, window_bounds = array<i64: 1, 128, 256>}, {transform_indices = @transform_15, window_bounds = array<i64: 1, 1, 256>}, {transform_indices = @transform_16, window_bounds = array<i64: 1, 256, 128>}, {transform_indices = @transform_17, window_bounds = array<i64: 1, 1, 128>}, {transform_indices = @transform_18, window_bounds = array<i64: 1, 3, 128>}, {transform_indices = @transform_19, window_bounds = array<i64: 1, 3, 128>}, {pipeline_mode = #tpu.pipeline_mode<synchronous>, transform_indices = @transform_20, window_bounds = array<i64: 1, 128>}, {pipeline_mode = #tpu.pipeline_mode<synchronous>, transform_indices = @transform_21, window_bounds = array<i64: 1, 128>}, {transform_indices = @transform_22, window_bounds = array<i64: 1, 8, 128>}]} {
    %c0_i32 = arith.constant 0 : i32
    %0 = arith.cmpi eq, %arg1, %c0_i32 : i32
    %1 = arith.extui %0 : i1 to i32
    %c0_i32_0 = arith.constant 0 : i32
    %2 = arith.cmpi ne, %1, %c0_i32_0 : i32
    scf.if %2 {
      %c0_141 = arith.constant 0 : index
      %c0_142 = arith.constant 0 : index
      %c0_143 = arith.constant 0 : index
      %312 = vector.load %arg2[%c0_141, %c0_142, %c0_143] : memref<1x8x128xf32, #tpu.memory_space<vmem>>, vector<1x8x128xf32>
      %313 = vector.shape_cast %312 : vector<1x8x128xf32> to vector<8x128xf32>
      %c0_144 = arith.constant 0 : index
      %c0_145 = arith.constant 0 : index
      %314 = vector.load %arg25[%c0_144, %c0_145] : memref<8x128xf32, #tpu.memory_space<vmem>>, vector<8x128xf32>
      tpu.vector_store %arg25[%c0_144, %c0_145], %313 {strides = array<i32>} : memref<8x128xf32, #tpu.memory_space<vmem>>, vector<8x128xf32>,
    } else {
    }
    %c0 = arith.constant 0 : index
    %c0_1 = arith.constant 0 : index
    %c0_2 = arith.constant 0 : index
    %3 = vector.load %arg5[%c0, %c0_1, %c0_2] : memref<1x8x8xf32, #tpu.memory_space<vmem>>, vector<1x8x8xf32>
    %cst = arith.constant 0.000000e+00 : f32
    %4 = vector.broadcast %cst : f32 to vector<1x8x8xf32>
    %5 = arith.cmpf oeq, %3, %4 : vector<1x8x8xf32>
    %cst_3 = arith.constant -1.000000e+09 : f32
    %cst_4 = arith.constant 0.000000e+00 : f32
    %6 = vector.broadcast %cst_3 : f32 to vector<1x8x8xf32>
    %7 = vector.broadcast %cst_4 : f32 to vector<1x8x8xf32>
    %8 = arith.select %5, %6, %7 : vector<1x8x8xi1>, vector<1x8x8xf32>
    %c0_5 = arith.constant 0 : index
    %c0_6 = arith.constant 0 : index
    %c0_7 = arith.constant 0 : index
    %9 = vector.load %arg4[%c0_5, %c0_6, %c0_7] : memref<1x1x16xf32, #tpu.memory_space<vmem>>, vector<1x1x16xf32>
    %cst_8 = arith.constant 0.000000e+00 : f32
    %10 = vector.broadcast %cst_8 : f32 to vector<1x1x16xf32>
    %11 = arith.cmpf oeq, %9, %10 : vector<1x1x16xf32>
    %cst_9 = arith.constant -1.000000e+09 : f32
    %cst_10 = arith.constant 0.000000e+00 : f32
    %12 = vector.broadcast %cst_9 : f32 to vector<1x1x16xf32>
    %13 = vector.broadcast %cst_10 : f32 to vector<1x1x16xf32>
    %14 = arith.select %11, %12, %13 : vector<1x1x16xi1>, vector<1x1x16xf32>
    %c0_11 = arith.constant 0 : index
    %c0_12 = arith.constant 0 : index
    %c0_13 = arith.constant 0 : index
    %15 = vector.load %arg3[%c0_11, %c0_12, %c0_13] : memref<1x16x128xf32, #tpu.memory_space<vmem>>, vector<1x16x128xf32>
    %16 = vector.shape_cast %15 : vector<1x16x128xf32> to vector<16x128xf32>
    %c0_14 = arith.constant 0 : index
    %c0_15 = arith.constant 0 : index
    %c0_16 = arith.constant 0 : index
    %17 = vector.load %arg20[%c0_14, %c0_15, %c0_16] : memref<1x3x128xf32, #tpu.memory_space<vmem>>, vector<1x3x128xf32>
    %18 = vector.shape_cast %17 : vector<1x3x128xf32> to vector<3x128xf32>
    %c0_17 = arith.constant 0 : index
    %c0_18 = arith.constant 0 : index
    %c0_19 = arith.constant 0 : index
    %19 = vector.load %arg21[%c0_17, %c0_18, %c0_19] : memref<1x3x128xf32, #tpu.memory_space<vmem>>, vector<1x3x128xf32>
    %20 = vector.shape_cast %19 : vector<1x3x128xf32> to vector<3x128xf32>
    %c0_20 = arith.constant 0 : index
    %c0_21 = arith.constant 0 : index
    %21 = vector.load %arg25[%c0_20, %c0_21] : memref<8x128xf32, #tpu.memory_space<vmem>>, vector<8x128xf32>
    %22 = vector.extract_strided_slice %18 {offsets = [0, 0], sizes = [1, 128], strides = [1, 1]} : vector<3x128xf32> to vector<1x128xf32>
    %23 = vector.extract_strided_slice %20 {offsets = [0, 0], sizes = [1, 128], strides = [1, 1]} : vector<3x128xf32> to vector<1x128xf32>
    %cst_22 = arith.constant dense<0.000000e+00> : vector<8xf32>
    %24 = vector.multi_reduction <add>, %21, %cst_22 [1] : vector<8x128xf32> to vector<8xf32>
    %25 = vector.shape_cast %24 : vector<8xf32> to vector<8x1xf32>
    %cst_23 = arith.constant 1.280000e+02 : f32
    %26 = vector.broadcast %cst_23 : f32 to vector<8x1xf32>
    %27 = arith.divf %25, %26 : vector<8x1xf32>
    %28 = vector.broadcast %27 : vector<8x1xf32> to vector<8x128xf32>
    %29 = arith.subf %21, %28 : vector<8x128xf32>
    %30 = arith.mulf %29, %29 : vector<8x128xf32>
    %cst_24 = arith.constant dense<0.000000e+00> : vector<8xf32>
    %31 = vector.multi_reduction <add>, %30, %cst_24 [1] : vector<8x128xf32> to vector<8xf32>
    %32 = vector.shape_cast %31 : vector<8xf32> to vector<8x1xf32>
    %cst_25 = arith.constant 0.00787401571 : f32
    %33 = vector.broadcast %cst_25 : f32 to vector<8x1xf32>
    %34 = arith.mulf %32, %33 : vector<8x1xf32>
    %35 = vector.broadcast %22 : vector<1x128xf32> to vector<8x128xf32>
    %36 = arith.mulf %35, %29 : vector<8x128xf32>
    %cst_26 = arith.constant 9.99999997E-7 : f32
    %37 = vector.broadcast %cst_26 : f32 to vector<8x1xf32>
    %38 = arith.addf %34, %37 : vector<8x1xf32>
    %39 = math.rsqrt %38 : vector<8x1xf32>
    %40 = vector.broadcast %39 : vector<8x1xf32> to vector<8x128xf32>
    %41 = arith.mulf %36, %40 : vector<8x128xf32>
    %42 = vector.broadcast %23 : vector<1x128xf32> to vector<8x128xf32>
    %43 = arith.addf %41, %42 : vector<8x128xf32>
    %c0_27 = arith.constant 0 : index
    %c0_28 = arith.constant 0 : index
    %c0_29 = arith.constant 0 : index
    %44 = vector.load %arg6[%c0_27, %c0_28, %c0_29] : memref<1x128x384xbf16, #tpu.memory_space<vmem>>, vector<1x128x384xbf16>
    %45 = vector.shape_cast %44 : vector<1x128x384xbf16> to vector<128x384xbf16>
    %c0_30 = arith.constant 0 : index
    %c0_31 = arith.constant 0 : index
    %c0_32 = arith.constant 0 : index
    %46 = vector.load %arg7[%c0_30, %c0_31, %c0_32] : memref<1x1x384xf32, #tpu.memory_space<vmem>>, vector<1x1x384xf32>
    %47 = vector.shape_cast %46 : vector<1x1x384xf32> to vector<1x384xf32>
    %48 = arith.truncf %43 : vector<8x128xf32> to vector<8x128xbf16>
    %cst_33 = arith.constant dense<0.000000e+00> : vector<8x384xf32>
    %49 = tpu.matmul %48, %45, %cst_33 {dimension_numbers = #tpu.dot_dimension_numbers<[1], [0], [0], [1], [0, 0, 1, 1], [], []>} : vector<8x128xbf16>, vector<128x384xbf16>, vector<8x384xf32> -> vector<8x384xf32>
    %50 = vector.broadcast %47 : vector<1x384xf32> to vector<8x384xf32>
    %51 = arith.addf %49, %50 : vector<8x384xf32>
    %52 = vector.extract_strided_slice %51 {offsets = [0, 0], sizes = [8, 128], strides = [1, 1]} : vector<8x384xf32> to vector<8x128xf32>
    %cst_34 = arith.constant 0.176776692 : f32
    %53 = vector.broadcast %cst_34 : f32 to vector<8x128xf32>
    %54 = arith.mulf %52, %53 : vector<8x128xf32>
    %55 = vector.extract_strided_slice %51 {offsets = [0, 128], sizes = [8, 128], strides = [1, 1]} : vector<8x384xf32> to vector<8x128xf32>
    %56 = vector.extract_strided_slice %51 {offsets = [0, 256], sizes = [8, 128], strides = [1, 1]} : vector<8x384xf32> to vector<8x128xf32>
    %c0_35 = arith.constant 0 : index
    %c0_36 = arith.constant 0 : index
    %c0_37 = arith.constant 0 : index
    %57 = vector.load %arg8[%c0_35, %c0_36, %c0_37] : memref<1x128x128xbf16, #tpu.memory_space<vmem>>, vector<1x128x128xbf16>
    %58 = vector.shape_cast %57 : vector<1x128x128xbf16> to vector<128x128xbf16>
    %c0_38 = arith.constant 0 : index
    %c0_39 = arith.constant 0 : index
    %c0_40 = arith.constant 0 : index
    %59 = vector.load %arg9[%c0_38, %c0_39, %c0_40] : memref<1x1x128xf32, #tpu.memory_space<vmem>>, vector<1x1x128xf32>
    %60 = vector.shape_cast %59 : vector<1x1x128xf32> to vector<1x128xf32>
    %61 = arith.truncf %54 : vector<8x128xf32> to vector<8x128xbf16>
    %62 = arith.truncf %55 : vector<8x128xf32> to vector<8x128xbf16>
    %63 = arith.truncf %56 : vector<8x128xf32> to vector<8x128xbf16>
    %64 = vector.shape_cast %8 : vector<1x8x8xf32> to vector<8x8xf32>
    %65 = vector.extract_strided_slice %61 {offsets = [0, 0], sizes = [8, 32], strides = [1, 1]} : vector<8x128xbf16> to vector<8x32xbf16>
    %66 = vector.extract_strided_slice %62 {offsets = [0, 0], sizes = [8, 32], strides = [1, 1]} : vector<8x128xbf16> to vector<8x32xbf16>
    %cst_41 = arith.constant dense<0.000000e+00> : vector<8x8xf32>
    %67 = tpu.matmul %65, %66, %cst_41 {dimension_numbers = #tpu.dot_dimension_numbers<[1], [1], [0], [0], [0, 0, 1, 0], [], []>} : vector<8x32xbf16>, vector<8x32xbf16>, vector<8x8xf32> -> vector<8x8xf32>
    %68 = arith.addf %67, %64 : vector<8x8xf32>
    %cst_42 = arith.constant dense<0xFF800000> : vector<8xf32>
    %69 = vector.multi_reduction <maximumf>, %68, %cst_42 [1] : vector<8x8xf32> to vector<8xf32>
    %70 = vector.shape_cast %69 : vector<8xf32> to vector<8x1xf32>
    %71 = vector.broadcast %70 : vector<8x1xf32> to vector<8x8xf32>
    %72 = arith.subf %68, %71 : vector<8x8xf32>
    %73 = math.exp %72 : vector<8x8xf32>
    %cst_43 = arith.constant dense<0.000000e+00> : vector<8xf32>
    %74 = vector.multi_reduction <add>, %73, %cst_43 [1] : vector<8x8xf32> to vector<8xf32>
    %75 = vector.shape_cast %74 : vector<8xf32> to vector<8x1xf32>
    %76 = vector.broadcast %75 : vector<8x1xf32> to vector<8x8xf32>
    %77 = arith.divf %73, %76 : vector<8x8xf32>
    %78 = arith.truncf %77 : vector<8x8xf32> to vector<8x8xbf16>
    %79 = vector.extract_strided_slice %63 {offsets = [0, 0], sizes = [8, 32], strides = [1, 1]} : vector<8x128xbf16> to vector<8x32xbf16>
    %cst_44 = arith.constant dense<0.000000e+00> : vector<8x32xf32>
    %80 = tpu.matmul %78, %79, %cst_44 {dimension_numbers = #tpu.dot_dimension_numbers<[1], [0], [0], [1], [0, 0, 1, 1], [], []>} : vector<8x8xbf16>, vector<8x32xbf16>, vector<8x32xf32> -> vector<8x32xf32>
    %c0_45 = arith.constant 0 : index
    %c0_46 = arith.constant 0 : index
    %81 = vector.load %arg26[%c0_45, %c0_46] : memref<8x128xf32, #tpu.memory_space<vmem>>, vector<8x32xf32>
    tpu.vector_store %arg26[%c0_45, %c0_46], %80 {strides = array<i32>} : memref<8x128xf32, #tpu.memory_space<vmem>>, vector<8x32xf32>,
    %82 = vector.extract_strided_slice %61 {offsets = [0, 32], sizes = [8, 32], strides = [1, 1]} : vector<8x128xbf16> to vector<8x32xbf16>
    %83 = vector.extract_strided_slice %62 {offsets = [0, 32], sizes = [8, 32], strides = [1, 1]} : vector<8x128xbf16> to vector<8x32xbf16>
    %cst_47 = arith.constant dense<0.000000e+00> : vector<8x8xf32>
    %84 = tpu.matmul %82, %83, %cst_47 {dimension_numbers = #tpu.dot_dimension_numbers<[1], [1], [0], [0], [0, 0, 1, 0], [], []>} : vector<8x32xbf16>, vector<8x32xbf16>, vector<8x8xf32> -> vector<8x8xf32>
    %85 = arith.addf %84, %64 : vector<8x8xf32>
    %cst_48 = arith.constant dense<0xFF800000> : vector<8xf32>
    %86 = vector.multi_reduction <maximumf>, %85, %cst_48 [1] : vector<8x8xf32> to vector<8xf32>
    %87 = vector.shape_cast %86 : vector<8xf32> to vector<8x1xf32>
    %88 = vector.broadcast %87 : vector<8x1xf32> to vector<8x8xf32>
    %89 = arith.subf %85, %88 : vector<8x8xf32>
    %90 = math.exp %89 : vector<8x8xf32>
    %cst_49 = arith.constant dense<0.000000e+00> : vector<8xf32>
    %91 = vector.multi_reduction <add>, %90, %cst_49 [1] : vector<8x8xf32> to vector<8xf32>
    %92 = vector.shape_cast %91 : vector<8xf32> to vector<8x1xf32>
    %93 = vector.broadcast %92 : vector<8x1xf32> to vector<8x8xf32>
    %94 = arith.divf %90, %93 : vector<8x8xf32>
    %95 = arith.truncf %94 : vector<8x8xf32> to vector<8x8xbf16>
    %96 = vector.extract_strided_slice %63 {offsets = [0, 32], sizes = [8, 32], strides = [1, 1]} : vector<8x128xbf16> to vector<8x32xbf16>
    %cst_50 = arith.constant dense<0.000000e+00> : vector<8x32xf32>
    %97 = tpu.matmul %95, %96, %cst_50 {dimension_numbers = #tpu.dot_dimension_numbers<[1], [0], [0], [1], [0, 0, 1, 1], [], []>} : vector<8x8xbf16>, vector<8x32xbf16>, vector<8x32xf32> -> vector<8x32xf32>
    %c0_51 = arith.constant 0 : index
    %c32 = arith.constant 32 : index
    %98 = vector.load %arg26[%c0_51, %c32] : memref<8x128xf32, #tpu.memory_space<vmem>>, vector<8x32xf32>
    tpu.vector_store %arg26[%c0_51, %c32], %97 {strides = array<i32>} : memref<8x128xf32, #tpu.memory_space<vmem>>, vector<8x32xf32>,
    %99 = vector.extract_strided_slice %61 {offsets = [0, 64], sizes = [8, 32], strides = [1, 1]} : vector<8x128xbf16> to vector<8x32xbf16>
    %100 = vector.extract_strided_slice %62 {offsets = [0, 64], sizes = [8, 32], strides = [1, 1]} : vector<8x128xbf16> to vector<8x32xbf16>
    %cst_52 = arith.constant dense<0.000000e+00> : vector<8x8xf32>
    %101 = tpu.matmul %99, %100, %cst_52 {dimension_numbers = #tpu.dot_dimension_numbers<[1], [1], [0], [0], [0, 0, 1, 0], [], []>} : vector<8x32xbf16>, vector<8x32xbf16>, vector<8x8xf32> -> vector<8x8xf32>
    %102 = arith.addf %101, %64 : vector<8x8xf32>
    %cst_53 = arith.constant dense<0xFF800000> : vector<8xf32>
    %103 = vector.multi_reduction <maximumf>, %102, %cst_53 [1] : vector<8x8xf32> to vector<8xf32>
    %104 = vector.shape_cast %103 : vector<8xf32> to vector<8x1xf32>
    %105 = vector.broadcast %104 : vector<8x1xf32> to vector<8x8xf32>
    %106 = arith.subf %102, %105 : vector<8x8xf32>
    %107 = math.exp %106 : vector<8x8xf32>
    %cst_54 = arith.constant dense<0.000000e+00> : vector<8xf32>
    %108 = vector.multi_reduction <add>, %107, %cst_54 [1] : vector<8x8xf32> to vector<8xf32>
    %109 = vector.shape_cast %108 : vector<8xf32> to vector<8x1xf32>
    %110 = vector.broadcast %109 : vector<8x1xf32> to vector<8x8xf32>
    %111 = arith.divf %107, %110 : vector<8x8xf32>
    %112 = arith.truncf %111 : vector<8x8xf32> to vector<8x8xbf16>
    %113 = vector.extract_strided_slice %63 {offsets = [0, 64], sizes = [8, 32], strides = [1, 1]} : vector<8x128xbf16> to vector<8x32xbf16>
    %cst_55 = arith.constant dense<0.000000e+00> : vector<8x32xf32>
    %114 = tpu.matmul %112, %113, %cst_55 {dimension_numbers = #tpu.dot_dimension_numbers<[1], [0], [0], [1], [0, 0, 1, 1], [], []>} : vector<8x8xbf16>, vector<8x32xbf16>, vector<8x32xf32> -> vector<8x32xf32>
    %c0_56 = arith.constant 0 : index
    %c64 = arith.constant 64 : index
    %115 = vector.load %arg26[%c0_56, %c64] : memref<8x128xf32, #tpu.memory_space<vmem>>, vector<8x32xf32>
    tpu.vector_store %arg26[%c0_56, %c64], %114 {strides = array<i32>} : memref<8x128xf32, #tpu.memory_space<vmem>>, vector<8x32xf32>,
    %116 = vector.extract_strided_slice %61 {offsets = [0, 96], sizes = [8, 32], strides = [1, 1]} : vector<8x128xbf16> to vector<8x32xbf16>
    %117 = vector.extract_strided_slice %62 {offsets = [0, 96], sizes = [8, 32], strides = [1, 1]} : vector<8x128xbf16> to vector<8x32xbf16>
    %cst_57 = arith.constant dense<0.000000e+00> : vector<8x8xf32>
    %118 = tpu.matmul %116, %117, %cst_57 {dimension_numbers = #tpu.dot_dimension_numbers<[1], [1], [0], [0], [0, 0, 1, 0], [], []>} : vector<8x32xbf16>, vector<8x32xbf16>, vector<8x8xf32> -> vector<8x8xf32>
    %119 = arith.addf %118, %64 : vector<8x8xf32>
    %cst_58 = arith.constant dense<0xFF800000> : vector<8xf32>
    %120 = vector.multi_reduction <maximumf>, %119, %cst_58 [1] : vector<8x8xf32> to vector<8xf32>
    %121 = vector.shape_cast %120 : vector<8xf32> to vector<8x1xf32>
    %122 = vector.broadcast %121 : vector<8x1xf32> to vector<8x8xf32>
    %123 = arith.subf %119, %122 : vector<8x8xf32>
    %124 = math.exp %123 : vector<8x8xf32>
    %cst_59 = arith.constant dense<0.000000e+00> : vector<8xf32>
    %125 = vector.multi_reduction <add>, %124, %cst_59 [1] : vector<8x8xf32> to vector<8xf32>
    %126 = vector.shape_cast %125 : vector<8xf32> to vector<8x1xf32>
    %127 = vector.broadcast %126 : vector<8x1xf32> to vector<8x8xf32>
    %128 = arith.divf %124, %127 : vector<8x8xf32>
    %129 = arith.truncf %128 : vector<8x8xf32> to vector<8x8xbf16>
    %130 = vector.extract_strided_slice %63 {offsets = [0, 96], sizes = [8, 32], strides = [1, 1]} : vector<8x128xbf16> to vector<8x32xbf16>
    %cst_60 = arith.constant dense<0.000000e+00> : vector<8x32xf32>
    %131 = tpu.matmul %129, %130, %cst_60 {dimension_numbers = #tpu.dot_dimension_numbers<[1], [0], [0], [1], [0, 0, 1, 1], [], []>} : vector<8x8xbf16>, vector<8x32xbf16>, vector<8x32xf32> -> vector<8x32xf32>
    %c0_61 = arith.constant 0 : index
    %c96 = arith.constant 96 : index
    %132 = vector.load %arg26[%c0_61, %c96] : memref<8x128xf32, #tpu.memory_space<vmem>>, vector<8x32xf32>
    tpu.vector_store %arg26[%c0_61, %c96], %131 {strides = array<i32>} : memref<8x128xf32, #tpu.memory_space<vmem>>, vector<8x32xf32>,
    %c0_62 = arith.constant 0 : index
    %c0_63 = arith.constant 0 : index
    %133 = vector.load %arg26[%c0_62, %c0_63] : memref<8x128xf32, #tpu.memory_space<vmem>>, vector<8x128xf32>
    %134 = arith.truncf %133 : vector<8x128xf32> to vector<8x128xbf16>
    %cst_64 = arith.constant dense<0.000000e+00> : vector<8x128xf32>
    %135 = tpu.matmul %134, %58, %cst_64 {dimension_numbers = #tpu.dot_dimension_numbers<[1], [0], [0], [1], [0, 0, 1, 1], [], []>} : vector<8x128xbf16>, vector<128x128xbf16>, vector<8x128xf32> -> vector<8x128xf32>
    %136 = vector.broadcast %60 : vector<1x128xf32> to vector<8x128xf32>
    %137 = arith.addf %135, %136 : vector<8x128xf32>
    %138 = arith.addf %21, %137 : vector<8x128xf32>
    %139 = vector.extract_strided_slice %18 {offsets = [1, 0], sizes = [1, 128], strides = [1, 1]} : vector<3x128xf32> to vector<1x128xf32>
    %140 = vector.extract_strided_slice %20 {offsets = [1, 0], sizes = [1, 128], strides = [1, 1]} : vector<3x128xf32> to vector<1x128xf32>
    %cst_65 = arith.constant dense<0.000000e+00> : vector<8xf32>
    %141 = vector.multi_reduction <add>, %138, %cst_65 [1] : vector<8x128xf32> to vector<8xf32>
    %142 = vector.shape_cast %141 : vector<8xf32> to vector<8x1xf32>
    %cst_66 = arith.constant 1.280000e+02 : f32
    %143 = vector.broadcast %cst_66 : f32 to vector<8x1xf32>
    %144 = arith.divf %142, %143 : vector<8x1xf32>
    %145 = vector.broadcast %144 : vector<8x1xf32> to vector<8x128xf32>
    %146 = arith.subf %138, %145 : vector<8x128xf32>
    %147 = arith.mulf %146, %146 : vector<8x128xf32>
    %cst_67 = arith.constant dense<0.000000e+00> : vector<8xf32>
    %148 = vector.multi_reduction <add>, %147, %cst_67 [1] : vector<8x128xf32> to vector<8xf32>
    %149 = vector.shape_cast %148 : vector<8xf32> to vector<8x1xf32>
    %cst_68 = arith.constant 0.00787401571 : f32
    %150 = vector.broadcast %cst_68 : f32 to vector<8x1xf32>
    %151 = arith.mulf %149, %150 : vector<8x1xf32>
    %152 = vector.broadcast %139 : vector<1x128xf32> to vector<8x128xf32>
    %153 = arith.mulf %152, %146 : vector<8x128xf32>
    %cst_69 = arith.constant 9.99999997E-7 : f32
    %154 = vector.broadcast %cst_69 : f32 to vector<8x1xf32>
    %155 = arith.addf %151, %154 : vector<8x1xf32>
    %156 = math.rsqrt %155 : vector<8x1xf32>
    %157 = vector.broadcast %156 : vector<8x1xf32> to vector<8x128xf32>
    %158 = arith.mulf %153, %157 : vector<8x128xf32>
    %159 = vector.broadcast %140 : vector<1x128xf32> to vector<8x128xf32>
    %160 = arith.addf %158, %159 : vector<8x128xf32>
    %c0_70 = arith.constant 0 : index
    %c0_71 = arith.constant 0 : index
    %c0_72 = arith.constant 0 : index
    %161 = vector.load %arg10[%c0_70, %c0_71, %c0_72] : memref<1x128x128xbf16, #tpu.memory_space<vmem>>, vector<1x128x128xbf16>
    %162 = vector.shape_cast %161 : vector<1x128x128xbf16> to vector<128x128xbf16>
    %c0_73 = arith.constant 0 : index
    %c0_74 = arith.constant 0 : index
    %c0_75 = arith.constant 0 : index
    %163 = vector.load %arg11[%c0_73, %c0_74, %c0_75] : memref<1x1x128xf32, #tpu.memory_space<vmem>>, vector<1x1x128xf32>
    %164 = vector.shape_cast %163 : vector<1x1x128xf32> to vector<1x128xf32>
    %165 = arith.truncf %160 : vector<8x128xf32> to vector<8x128xbf16>
    %cst_76 = arith.constant dense<0.000000e+00> : vector<8x128xf32>
    %166 = tpu.matmul %165, %162, %cst_76 {dimension_numbers = #tpu.dot_dimension_numbers<[1], [0], [0], [1], [0, 0, 1, 1], [], []>} : vector<8x128xbf16>, vector<128x128xbf16>, vector<8x128xf32> -> vector<8x128xf32>
    %167 = vector.broadcast %164 : vector<1x128xf32> to vector<8x128xf32>
    %168 = arith.addf %166, %167 : vector<8x128xf32>
    %cst_77 = arith.constant 0.176776692 : f32
    %169 = vector.broadcast %cst_77 : f32 to vector<8x128xf32>
    %170 = arith.mulf %168, %169 : vector<8x128xf32>
    %c0_78 = arith.constant 0 : index
    %c0_79 = arith.constant 0 : index
    %c0_80 = arith.constant 0 : index
    %171 = vector.load %arg12[%c0_78, %c0_79, %c0_80] : memref<1x128x256xbf16, #tpu.memory_space<vmem>>, vector<1x128x256xbf16>
    %172 = vector.shape_cast %171 : vector<1x128x256xbf16> to vector<128x256xbf16>
    %c0_81 = arith.constant 0 : index
    %c0_82 = arith.constant 0 : index
    %c0_83 = arith.constant 0 : index
    %173 = vector.load %arg13[%c0_81, %c0_82, %c0_83] : memref<1x1x256xf32, #tpu.memory_space<vmem>>, vector<1x1x256xf32>
    %174 = vector.shape_cast %173 : vector<1x1x256xf32> to vector<1x256xf32>
    %175 = arith.truncf %16 : vector<16x128xf32> to vector<16x128xbf16>
    %cst_84 = arith.constant dense<0.000000e+00> : vector<16x256xf32>
    %176 = tpu.matmul %175, %172, %cst_84 {dimension_numbers = #tpu.dot_dimension_numbers<[1], [0], [0], [1], [0, 0, 1, 1], [], []>} : vector<16x128xbf16>, vector<128x256xbf16>, vector<16x256xf32> -> vector<16x256xf32>
    %177 = vector.broadcast %174 : vector<1x256xf32> to vector<16x256xf32>
    %178 = arith.addf %176, %177 : vector<16x256xf32>
    %179 = vector.extract_strided_slice %178 {offsets = [0, 0], sizes = [16, 128], strides = [1, 1]} : vector<16x256xf32> to vector<16x128xf32>
    %180 = vector.extract_strided_slice %178 {offsets = [0, 128], sizes = [16, 128], strides = [1, 1]} : vector<16x256xf32> to vector<16x128xf32>
    %c0_85 = arith.constant 0 : index
    %c0_86 = arith.constant 0 : index
    %c0_87 = arith.constant 0 : index
    %181 = vector.load %arg14[%c0_85, %c0_86, %c0_87] : memref<1x128x128xbf16, #tpu.memory_space<vmem>>, vector<1x128x128xbf16>
    %182 = vector.shape_cast %181 : vector<1x128x128xbf16> to vector<128x128xbf16>
    %c0_88 = arith.constant 0 : index
    %c0_89 = arith.constant 0 : index
    %c0_90 = arith.constant 0 : index
    %183 = vector.load %arg15[%c0_88, %c0_89, %c0_90] : memref<1x1x128xf32, #tpu.memory_space<vmem>>, vector<1x1x128xf32>
    %184 = vector.shape_cast %183 : vector<1x1x128xf32> to vector<1x128xf32>
    %185 = arith.truncf %170 : vector<8x128xf32> to vector<8x128xbf16>
    %186 = arith.truncf %179 : vector<16x128xf32> to vector<16x128xbf16>
    %187 = arith.truncf %180 : vector<16x128xf32> to vector<16x128xbf16>
    %188 = vector.shape_cast %14 : vector<1x1x16xf32> to vector<1x16xf32>
    %189 = vector.extract_strided_slice %185 {offsets = [0, 0], sizes = [8, 32], strides = [1, 1]} : vector<8x128xbf16> to vector<8x32xbf16>
    %190 = vector.extract_strided_slice %186 {offsets = [0, 0], sizes = [16, 32], strides = [1, 1]} : vector<16x128xbf16> to vector<16x32xbf16>
    %cst_91 = arith.constant dense<0.000000e+00> : vector<8x16xf32>
    %191 = tpu.matmul %189, %190, %cst_91 {dimension_numbers = #tpu.dot_dimension_numbers<[1], [1], [0], [0], [0, 0, 1, 0], [], []>} : vector<8x32xbf16>, vector<16x32xbf16>, vector<8x16xf32> -> vector<8x16xf32>
    %192 = vector.broadcast %188 : vector<1x16xf32> to vector<8x16xf32>
    %193 = arith.addf %191, %192 : vector<8x16xf32>
    %cst_92 = arith.constant dense<0xFF800000> : vector<8xf32>
    %194 = vector.multi_reduction <maximumf>, %193, %cst_92 [1] : vector<8x16xf32> to vector<8xf32>
    %195 = vector.shape_cast %194 : vector<8xf32> to vector<8x1xf32>
    %196 = vector.broadcast %195 : vector<8x1xf32> to vector<8x16xf32>
    %197 = arith.subf %193, %196 : vector<8x16xf32>
    %198 = math.exp %197 : vector<8x16xf32>
    %cst_93 = arith.constant dense<0.000000e+00> : vector<8xf32>
    %199 = vector.multi_reduction <add>, %198, %cst_93 [1] : vector<8x16xf32> to vector<8xf32>
    %200 = vector.shape_cast %199 : vector<8xf32> to vector<8x1xf32>
    %201 = vector.broadcast %200 : vector<8x1xf32> to vector<8x16xf32>
    %202 = arith.divf %198, %201 : vector<8x16xf32>
    %203 = arith.truncf %202 : vector<8x16xf32> to vector<8x16xbf16>
    %204 = vector.extract_strided_slice %187 {offsets = [0, 0], sizes = [16, 32], strides = [1, 1]} : vector<16x128xbf16> to vector<16x32xbf16>
    %cst_94 = arith.constant dense<0.000000e+00> : vector<8x32xf32>
    %205 = tpu.matmul %203, %204, %cst_94 {dimension_numbers = #tpu.dot_dimension_numbers<[1], [0], [0], [1], [0, 0, 1, 1], [], []>} : vector<8x16xbf16>, vector<16x32xbf16>, vector<8x32xf32> -> vector<8x32xf32>
    %c0_95 = arith.constant 0 : index
    %c0_96 = arith.constant 0 : index
    %206 = vector.load %arg26[%c0_95, %c0_96] : memref<8x128xf32, #tpu.memory_space<vmem>>, vector<8x32xf32>
    tpu.vector_store %arg26[%c0_95, %c0_96], %205 {strides = array<i32>} : memref<8x128xf32, #tpu.memory_space<vmem>>, vector<8x32xf32>,
    %207 = vector.extract_strided_slice %185 {offsets = [0, 32], sizes = [8, 32], strides = [1, 1]} : vector<8x128xbf16> to vector<8x32xbf16>
    %208 = vector.extract_strided_slice %186 {offsets = [0, 32], sizes = [16, 32], strides = [1, 1]} : vector<16x128xbf16> to vector<16x32xbf16>
    %cst_97 = arith.constant dense<0.000000e+00> : vector<8x16xf32>
    %209 = tpu.matmul %207, %208, %cst_97 {dimension_numbers = #tpu.dot_dimension_numbers<[1], [1], [0], [0], [0, 0, 1, 0], [], []>} : vector<8x32xbf16>, vector<16x32xbf16>, vector<8x16xf32> -> vector<8x16xf32>
    %210 = vector.broadcast %188 : vector<1x16xf32> to vector<8x16xf32>
    %211 = arith.addf %209, %210 : vector<8x16xf32>
    %cst_98 = arith.constant dense<0xFF800000> : vector<8xf32>
    %212 = vector.multi_reduction <maximumf>, %211, %cst_98 [1] : vector<8x16xf32> to vector<8xf32>
    %213 = vector.shape_cast %212 : vector<8xf32> to vector<8x1xf32>
    %214 = vector.broadcast %213 : vector<8x1xf32> to vector<8x16xf32>
    %215 = arith.subf %211, %214 : vector<8x16xf32>
    %216 = math.exp %215 : vector<8x16xf32>
    %cst_99 = arith.constant dense<0.000000e+00> : vector<8xf32>
    %217 = vector.multi_reduction <add>, %216, %cst_99 [1] : vector<8x16xf32> to vector<8xf32>
    %218 = vector.shape_cast %217 : vector<8xf32> to vector<8x1xf32>
    %219 = vector.broadcast %218 : vector<8x1xf32> to vector<8x16xf32>
    %220 = arith.divf %216, %219 : vector<8x16xf32>
    %221 = arith.truncf %220 : vector<8x16xf32> to vector<8x16xbf16>
    %222 = vector.extract_strided_slice %187 {offsets = [0, 32], sizes = [16, 32], strides = [1, 1]} : vector<16x128xbf16> to vector<16x32xbf16>
    %cst_100 = arith.constant dense<0.000000e+00> : vector<8x32xf32>
    %223 = tpu.matmul %221, %222, %cst_100 {dimension_numbers = #tpu.dot_dimension_numbers<[1], [0], [0], [1], [0, 0, 1, 1], [], []>} : vector<8x16xbf16>, vector<16x32xbf16>, vector<8x32xf32> -> vector<8x32xf32>
    %c0_101 = arith.constant 0 : index
    %c32_102 = arith.constant 32 : index
    %224 = vector.load %arg26[%c0_101, %c32_102] : memref<8x128xf32, #tpu.memory_space<vmem>>, vector<8x32xf32>
    tpu.vector_store %arg26[%c0_101, %c32_102], %223 {strides = array<i32>} : memref<8x128xf32, #tpu.memory_space<vmem>>, vector<8x32xf32>,
    %225 = vector.extract_strided_slice %185 {offsets = [0, 64], sizes = [8, 32], strides = [1, 1]} : vector<8x128xbf16> to vector<8x32xbf16>
    %226 = vector.extract_strided_slice %186 {offsets = [0, 64], sizes = [16, 32], strides = [1, 1]} : vector<16x128xbf16> to vector<16x32xbf16>
    %cst_103 = arith.constant dense<0.000000e+00> : vector<8x16xf32>
    %227 = tpu.matmul %225, %226, %cst_103 {dimension_numbers = #tpu.dot_dimension_numbers<[1], [1], [0], [0], [0, 0, 1, 0], [], []>} : vector<8x32xbf16>, vector<16x32xbf16>, vector<8x16xf32> -> vector<8x16xf32>
    %228 = vector.broadcast %188 : vector<1x16xf32> to vector<8x16xf32>
    %229 = arith.addf %227, %228 : vector<8x16xf32>
    %cst_104 = arith.constant dense<0xFF800000> : vector<8xf32>
    %230 = vector.multi_reduction <maximumf>, %229, %cst_104 [1] : vector<8x16xf32> to vector<8xf32>
    %231 = vector.shape_cast %230 : vector<8xf32> to vector<8x1xf32>
    %232 = vector.broadcast %231 : vector<8x1xf32> to vector<8x16xf32>
    %233 = arith.subf %229, %232 : vector<8x16xf32>
    %234 = math.exp %233 : vector<8x16xf32>
    %cst_105 = arith.constant dense<0.000000e+00> : vector<8xf32>
    %235 = vector.multi_reduction <add>, %234, %cst_105 [1] : vector<8x16xf32> to vector<8xf32>
    %236 = vector.shape_cast %235 : vector<8xf32> to vector<8x1xf32>
    %237 = vector.broadcast %236 : vector<8x1xf32> to vector<8x16xf32>
    %238 = arith.divf %234, %237 : vector<8x16xf32>
    %239 = arith.truncf %238 : vector<8x16xf32> to vector<8x16xbf16>
    %240 = vector.extract_strided_slice %187 {offsets = [0, 64], sizes = [16, 32], strides = [1, 1]} : vector<16x128xbf16> to vector<16x32xbf16>
    %cst_106 = arith.constant dense<0.000000e+00> : vector<8x32xf32>
    %241 = tpu.matmul %239, %240, %cst_106 {dimension_numbers = #tpu.dot_dimension_numbers<[1], [0], [0], [1], [0, 0, 1, 1], [], []>} : vector<8x16xbf16>, vector<16x32xbf16>, vector<8x32xf32> -> vector<8x32xf32>
    %c0_107 = arith.constant 0 : index
    %c64_108 = arith.constant 64 : index
    %242 = vector.load %arg26[%c0_107, %c64_108] : memref<8x128xf32, #tpu.memory_space<vmem>>, vector<8x32xf32>
    tpu.vector_store %arg26[%c0_107, %c64_108], %241 {strides = array<i32>} : memref<8x128xf32, #tpu.memory_space<vmem>>, vector<8x32xf32>,
    %243 = vector.extract_strided_slice %185 {offsets = [0, 96], sizes = [8, 32], strides = [1, 1]} : vector<8x128xbf16> to vector<8x32xbf16>
    %244 = vector.extract_strided_slice %186 {offsets = [0, 96], sizes = [16, 32], strides = [1, 1]} : vector<16x128xbf16> to vector<16x32xbf16>
    %cst_109 = arith.constant dense<0.000000e+00> : vector<8x16xf32>
    %245 = tpu.matmul %243, %244, %cst_109 {dimension_numbers = #tpu.dot_dimension_numbers<[1], [1], [0], [0], [0, 0, 1, 0], [], []>} : vector<8x32xbf16>, vector<16x32xbf16>, vector<8x16xf32> -> vector<8x16xf32>
    %246 = vector.broadcast %188 : vector<1x16xf32> to vector<8x16xf32>
    %247 = arith.addf %245, %246 : vector<8x16xf32>
    %cst_110 = arith.constant dense<0xFF800000> : vector<8xf32>
    %248 = vector.multi_reduction <maximumf>, %247, %cst_110 [1] : vector<8x16xf32> to vector<8xf32>
    %249 = vector.shape_cast %248 : vector<8xf32> to vector<8x1xf32>
    %250 = vector.broadcast %249 : vector<8x1xf32> to vector<8x16xf32>
    %251 = arith.subf %247, %250 : vector<8x16xf32>
    %252 = math.exp %251 : vector<8x16xf32>
    %cst_111 = arith.constant dense<0.000000e+00> : vector<8xf32>
    %253 = vector.multi_reduction <add>, %252, %cst_111 [1] : vector<8x16xf32> to vector<8xf32>
    %254 = vector.shape_cast %253 : vector<8xf32> to vector<8x1xf32>
    %255 = vector.broadcast %254 : vector<8x1xf32> to vector<8x16xf32>
    %256 = arith.divf %252, %255 : vector<8x16xf32>
    %257 = arith.truncf %256 : vector<8x16xf32> to vector<8x16xbf16>
    %258 = vector.extract_strided_slice %187 {offsets = [0, 96], sizes = [16, 32], strides = [1, 1]} : vector<16x128xbf16> to vector<16x32xbf16>
    %cst_112 = arith.constant dense<0.000000e+00> : vector<8x32xf32>
    %259 = tpu.matmul %257, %258, %cst_112 {dimension_numbers = #tpu.dot_dimension_numbers<[1], [0], [0], [1], [0, 0, 1, 1], [], []>} : vector<8x16xbf16>, vector<16x32xbf16>, vector<8x32xf32> -> vector<8x32xf32>
    %c0_113 = arith.constant 0 : index
    %c96_114 = arith.constant 96 : index
    %260 = vector.load %arg26[%c0_113, %c96_114] : memref<8x128xf32, #tpu.memory_space<vmem>>, vector<8x32xf32>
    tpu.vector_store %arg26[%c0_113, %c96_114], %259 {strides = array<i32>} : memref<8x128xf32, #tpu.memory_space<vmem>>, vector<8x32xf32>,
    %c0_115 = arith.constant 0 : index
    %c0_116 = arith.constant 0 : index
    %261 = vector.load %arg26[%c0_115, %c0_116] : memref<8x128xf32, #tpu.memory_space<vmem>>, vector<8x128xf32>
    %262 = arith.truncf %261 : vector<8x128xf32> to vector<8x128xbf16>
    %cst_117 = arith.constant dense<0.000000e+00> : vector<8x128xf32>
    %263 = tpu.matmul %262, %182, %cst_117 {dimension_numbers = #tpu.dot_dimension_numbers<[1], [0], [0], [1], [0, 0, 1, 1], [], []>} : vector<8x128xbf16>, vector<128x128xbf16>, vector<8x128xf32> -> vector<8x128xf32>
    %264 = vector.broadcast %184 : vector<1x128xf32> to vector<8x128xf32>
    %265 = arith.addf %263, %264 : vector<8x128xf32>
    %266 = arith.addf %138, %265 : vector<8x128xf32>
    %267 = vector.extract_strided_slice %18 {offsets = [2, 0], sizes = [1, 128], strides = [1, 1]} : vector<3x128xf32> to vector<1x128xf32>
    %268 = vector.extract_strided_slice %20 {offsets = [2, 0], sizes = [1, 128], strides = [1, 1]} : vector<3x128xf32> to vector<1x128xf32>
    %cst_118 = arith.constant dense<0.000000e+00> : vector<8xf32>
    %269 = vector.multi_reduction <add>, %266, %cst_118 [1] : vector<8x128xf32> to vector<8xf32>
    %270 = vector.shape_cast %269 : vector<8xf32> to vector<8x1xf32>
    %cst_119 = arith.constant 1.280000e+02 : f32
    %271 = vector.broadcast %cst_119 : f32 to vector<8x1xf32>
    %272 = arith.divf %270, %271 : vector<8x1xf32>
    %273 = vector.broadcast %272 : vector<8x1xf32> to vector<8x128xf32>
    %274 = arith.subf %266, %273 : vector<8x128xf32>
    %275 = arith.mulf %274, %274 : vector<8x128xf32>
    %cst_120 = arith.constant dense<0.000000e+00> : vector<8xf32>
    %276 = vector.multi_reduction <add>, %275, %cst_120 [1] : vector<8x128xf32> to vector<8xf32>
    %277 = vector.shape_cast %276 : vector<8xf32> to vector<8x1xf32>
    %cst_121 = arith.constant 0.00787401571 : f32
    %278 = vector.broadcast %cst_121 : f32 to vector<8x1xf32>
    %279 = arith.mulf %277, %278 : vector<8x1xf32>
    %280 = vector.broadcast %267 : vector<1x128xf32> to vector<8x128xf32>
    %281 = arith.mulf %280, %274 : vector<8x128xf32>
    %cst_122 = arith.constant 9.99999997E-7 : f32
    %282 = vector.broadcast %cst_122 : f32 to vector<8x1xf32>
    %283 = arith.addf %279, %282 : vector<8x1xf32>
    %284 = math.rsqrt %283 : vector<8x1xf32>
    %285 = vector.broadcast %284 : vector<8x1xf32> to vector<8x128xf32>
    %286 = arith.mulf %281, %285 : vector<8x128xf32>
    %287 = vector.broadcast %268 : vector<1x128xf32> to vector<8x128xf32>
    %288 = arith.addf %286, %287 : vector<8x128xf32>
    %c0_123 = arith.constant 0 : index
    %c0_124 = arith.constant 0 : index
    %c0_125 = arith.constant 0 : index
    %289 = vector.load %arg16[%c0_123, %c0_124, %c0_125] : memref<1x128x256xbf16, #tpu.memory_space<vmem>>, vector<1x128x256xbf16>
    %290 = vector.shape_cast %289 : vector<1x128x256xbf16> to vector<128x256xbf16>
    %c0_126 = arith.constant 0 : index
    %c0_127 = arith.constant 0 : index
    %c0_128 = arith.constant 0 : index
    %291 = vector.load %arg17[%c0_126, %c0_127, %c0_128] : memref<1x1x256xf32, #tpu.memory_space<vmem>>, vector<1x1x256xf32>
    %292 = vector.shape_cast %291 : vector<1x1x256xf32> to vector<1x256xf32>
    %293 = arith.truncf %288 : vector<8x128xf32> to vector<8x128xbf16>
    %cst_129 = arith.constant dense<0.000000e+00> : vector<8x256xf32>
    %294 = tpu.matmul %293, %290, %cst_129 {dimension_numbers = #tpu.dot_dimension_numbers<[1], [0], [0], [1], [0, 0, 1, 1], [], []>} : vector<8x128xbf16>, vector<128x256xbf16>, vector<8x256xf32> -> vector<8x256xf32>
    %295 = vector.broadcast %292 : vector<1x256xf32> to vector<8x256xf32>
    %296 = arith.addf %294, %295 : vector<8x256xf32>
    %cst_130 = arith.constant 0.000000e+00 : f32
    %297 = vector.broadcast %cst_130 : f32 to vector<8x256xf32>
    %298 = arith.maximumf %296, %297 : vector<8x256xf32>
    %c0_131 = arith.constant 0 : index
    %c0_132 = arith.constant 0 : index
    %c0_133 = arith.constant 0 : index
    %299 = vector.load %arg18[%c0_131, %c0_132, %c0_133] : memref<1x256x128xbf16, #tpu.memory_space<vmem>>, vector<1x256x128xbf16>
    %300 = vector.shape_cast %299 : vector<1x256x128xbf16> to vector<256x128xbf16>
    %c0_134 = arith.constant 0 : index
    %c0_135 = arith.constant 0 : index
    %c0_136 = arith.constant 0 : index
    %301 = vector.load %arg19[%c0_134, %c0_135, %c0_136] : memref<1x1x128xf32, #tpu.memory_space<vmem>>, vector<1x1x128xf32>
    %302 = vector.shape_cast %301 : vector<1x1x128xf32> to vector<1x128xf32>
    %303 = arith.truncf %298 : vector<8x256xf32> to vector<8x256xbf16>
    %cst_137 = arith.constant dense<0.000000e+00> : vector<8x128xf32>
    %304 = tpu.matmul %303, %300, %cst_137 {dimension_numbers = #tpu.dot_dimension_numbers<[1], [0], [0], [1], [0, 0, 1, 1], [], []>} : vector<8x256xbf16>, vector<256x128xbf16>, vector<8x128xf32> -> vector<8x128xf32>
    %305 = vector.broadcast %302 : vector<1x128xf32> to vector<8x128xf32>
    %306 = arith.addf %304, %305 : vector<8x128xf32>
    %307 = arith.addf %266, %306 : vector<8x128xf32>
    %c0_138 = arith.constant 0 : index
    %c0_139 = arith.constant 0 : index
    %308 = vector.load %arg25[%c0_138, %c0_139] : memref<8x128xf32, #tpu.memory_space<vmem>>, vector<8x128xf32>
    tpu.vector_store %arg25[%c0_138, %c0_139], %307 {strides = array<i32>} : memref<8x128xf32, #tpu.memory_space<vmem>>, vector<8x128xf32>,
    %c1_i32 = arith.constant 1 : i32
    %309 = arith.cmpi eq, %arg1, %c1_i32 : i32
    %310 = arith.extui %309 : i1 to i32
    %c0_i32_140 = arith.constant 0 : i32
    %311 = arith.cmpi ne, %310, %c0_i32_140 : i32
    scf.if %311 {
      %c0_141 = arith.constant 0 : index
      %c0_142 = arith.constant 0 : index
      %312 = vector.load %arg22[%c0_141, %c0_142] : memref<1x128xf32, #tpu.memory_space<vmem>>, vector<1x128xf32>
      %c0_143 = arith.constant 0 : index
      %c0_144 = arith.constant 0 : index
      %313 = vector.load %arg23[%c0_143, %c0_144] : memref<1x128xf32, #tpu.memory_space<vmem>>, vector<1x128xf32>
      %cst_145 = arith.constant dense<0.000000e+00> : vector<8xf32>
      %314 = vector.multi_reduction <add>, %307, %cst_145 [1] : vector<8x128xf32> to vector<8xf32>
      %315 = vector.shape_cast %314 : vector<8xf32> to vector<8x1xf32>
      %cst_146 = arith.constant 1.280000e+02 : f32
      %316 = vector.broadcast %cst_146 : f32 to vector<8x1xf32>
      %317 = arith.divf %315, %316 : vector<8x1xf32>
      %318 = vector.broadcast %317 : vector<8x1xf32> to vector<8x128xf32>
      %319 = arith.subf %307, %318 : vector<8x128xf32>
      %320 = arith.mulf %319, %319 : vector<8x128xf32>
      %cst_147 = arith.constant dense<0.000000e+00> : vector<8xf32>
      %321 = vector.multi_reduction <add>, %320, %cst_147 [1] : vector<8x128xf32> to vector<8xf32>
      %322 = vector.shape_cast %321 : vector<8xf32> to vector<8x1xf32>
      %cst_148 = arith.constant 0.00787401571 : f32
      %323 = vector.broadcast %cst_148 : f32 to vector<8x1xf32>
      %324 = arith.mulf %322, %323 : vector<8x1xf32>
      %325 = vector.broadcast %312 : vector<1x128xf32> to vector<8x128xf32>
      %326 = arith.mulf %325, %319 : vector<8x128xf32>
      %cst_149 = arith.constant 9.99999997E-7 : f32
      %327 = vector.broadcast %cst_149 : f32 to vector<8x1xf32>
      %328 = arith.addf %324, %327 : vector<8x1xf32>
      %329 = math.rsqrt %328 : vector<8x1xf32>
      %330 = vector.broadcast %329 : vector<8x1xf32> to vector<8x128xf32>
      %331 = arith.mulf %326, %330 : vector<8x128xf32>
      %332 = vector.broadcast %313 : vector<1x128xf32> to vector<8x128xf32>
      %333 = arith.addf %331, %332 : vector<8x128xf32>
      %334 = vector.shape_cast %333 : vector<8x128xf32> to vector<1x8x128xf32>
      %c0_150 = arith.constant 0 : index
      %c0_151 = arith.constant 0 : index
      %c0_152 = arith.constant 0 : index
      %335 = vector.load %arg24[%c0_150, %c0_151, %c0_152] : memref<1x8x128xf32, #tpu.memory_space<vmem>>, vector<1x8x128xf32>
      tpu.vector_store %arg24[%c0_150, %c0_151, %c0_152], %334 {strides = array<i32>} : memref<1x8x128xf32, #tpu.memory_space<vmem>>, vector<1x8x128xf32>,
    } else {
    }
    return
  }
  func.func @transform_0(%arg0: i32, %arg1: i32) -> (i32, i32, i32) {
    %c0_i32 = arith.constant 0 : i32
    %c0_i32_0 = arith.constant 0 : i32
    %c0_i32_1 = arith.constant 0 : i32
    return %arg0, %c0_i32, %c0_i32_0 : i32, i32, i32
  }
  func.func @transform_1(%arg0: i32, %arg1: i32) -> (i32, i32, i32) {
    %c0_i32 = arith.constant 0 : i32
    %c0_i32_0 = arith.constant 0 : i32
    %c0_i32_1 = arith.constant 0 : i32
    return %arg0, %c0_i32, %c0_i32_0 : i32, i32, i32
  }
  func.func @transform_2(%arg0: i32, %arg1: i32) -> (i32, i32, i32) {
    %c0_i32 = arith.constant 0 : i32
    %c0_i32_0 = arith.constant 0 : i32
    %c0_i32_1 = arith.constant 0 : i32
    return %arg0, %c0_i32, %c0_i32_0 : i32, i32, i32
  }
  func.func @transform_3(%arg0: i32, %arg1: i32) -> (i32, i32, i32) {
    %c0_i32 = arith.constant 0 : i32
    %c0_i32_0 = arith.constant 0 : i32
    %c0_i32_1 = arith.constant 0 : i32
    return %arg0, %c0_i32, %c0_i32_0 : i32, i32, i32
  }
  func.func @transform_4(%arg0: i32, %arg1: i32) -> (i32, i32, i32) {
    %c0_i32 = arith.constant 0 : i32
    %c0_i32_0 = arith.constant 0 : i32
    %c0_i32_1 = arith.constant 0 : i32
    return %arg1, %c0_i32, %c0_i32_0 : i32, i32, i32
  }
  func.func @transform_5(%arg0: i32, %arg1: i32) -> (i32, i32, i32) {
    %c0_i32 = arith.constant 0 : i32
    %c0_i32_0 = arith.constant 0 : i32
    %c0_i32_1 = arith.constant 0 : i32
    return %arg1, %c0_i32, %c0_i32_0 : i32, i32, i32
  }
  func.func @transform_6(%arg0: i32, %arg1: i32) -> (i32, i32, i32) {
    %c0_i32 = arith.constant 0 : i32
    %c0_i32_0 = arith.constant 0 : i32
    %c0_i32_1 = arith.constant 0 : i32
    return %arg1, %c0_i32, %c0_i32_0 : i32, i32, i32
  }
  func.func @transform_7(%arg0: i32, %arg1: i32) -> (i32, i32, i32) {
    %c0_i32 = arith.constant 0 : i32
    %c0_i32_0 = arith.constant 0 : i32
    %c0_i32_1 = arith.constant 0 : i32
    return %arg1, %c0_i32, %c0_i32_0 : i32, i32, i32
  }
  func.func @transform_8(%arg0: i32, %arg1: i32) -> (i32, i32, i32) {
    %c0_i32 = arith.constant 0 : i32
    %c0_i32_0 = arith.constant 0 : i32
    %c0_i32_1 = arith.constant 0 : i32
    return %arg1, %c0_i32, %c0_i32_0 : i32, i32, i32
  }
  func.func @transform_9(%arg0: i32, %arg1: i32) -> (i32, i32, i32) {
    %c0_i32 = arith.constant 0 : i32
    %c0_i32_0 = arith.constant 0 : i32
    %c0_i32_1 = arith.constant 0 : i32
    return %arg1, %c0_i32, %c0_i32_0 : i32, i32, i32
  }
  func.func @transform_10(%arg0: i32, %arg1: i32) -> (i32, i32, i32) {
    %c0_i32 = arith.constant 0 : i32
    %c0_i32_0 = arith.constant 0 : i32
    %c0_i32_1 = arith.constant 0 : i32
    return %arg1, %c0_i32, %c0_i32_0 : i32, i32, i32
  }
  func.func @transform_11(%arg0: i32, %arg1: i32) -> (i32, i32, i32) {
    %c0_i32 = arith.constant 0 : i32
    %c0_i32_0 = arith.constant 0 : i32
    %c0_i32_1 = arith.constant 0 : i32
    return %arg1, %c0_i32, %c0_i32_0 : i32, i32, i32
  }
  func.func @transform_12(%arg0: i32, %arg1: i32) -> (i32, i32, i32) {
    %c0_i32 = arith.constant 0 : i32
    %c0_i32_0 = arith.constant 0 : i32
    %c0_i32_1 = arith.constant 0 : i32
    return %arg1, %c0_i32, %c0_i32_0 : i32, i32, i32
  }
  func.func @transform_13(%arg0: i32, %arg1: i32) -> (i32, i32, i32) {
    %c0_i32 = arith.constant 0 : i32
    %c0_i32_0 = arith.constant 0 : i32
    %c0_i32_1 = arith.constant 0 : i32
    return %arg1, %c0_i32, %c0_i32_0 : i32, i32, i32
  }
  func.func @transform_14(%arg0: i32, %arg1: i32) -> (i32, i32, i32) {
    %c0_i32 = arith.constant 0 : i32
    %c0_i32_0 = arith.constant 0 : i32
    %c0_i32_1 = arith.constant 0 : i32
    return %arg1, %c0_i32, %c0_i32_0 : i32, i32, i32
  }
  func.func @transform_15(%arg0: i32, %arg1: i32) -> (i32, i32, i32) {
    %c0_i32 = arith.constant 0 : i32
    %c0_i32_0 = arith.constant 0 : i32
    %c0_i32_1 = arith.constant 0 : i32
    return %arg1, %c0_i32, %c0_i32_0 : i32, i32, i32
  }
  func.func @transform_16(%arg0: i32, %arg1: i32) -> (i32, i32, i32) {
    %c0_i32 = arith.constant 0 : i32
    %c0_i32_0 = arith.constant 0 : i32
    %c0_i32_1 = arith.constant 0 : i32
    return %arg1, %c0_i32, %c0_i32_0 : i32, i32, i32
  }
  func.func @transform_17(%arg0: i32, %arg1: i32) -> (i32, i32, i32) {
    %c0_i32 = arith.constant 0 : i32
    %c0_i32_0 = arith.constant 0 : i32
    %c0_i32_1 = arith.constant 0 : i32
    return %arg1, %c0_i32, %c0_i32_0 : i32, i32, i32
  }
  func.func @transform_18(%arg0: i32, %arg1: i32) -> (i32, i32, i32) {
    %c0_i32 = arith.constant 0 : i32
    %c0_i32_0 = arith.constant 0 : i32
    %c0_i32_1 = arith.constant 0 : i32
    return %arg1, %c0_i32, %c0_i32_0 : i32, i32, i32
  }
  func.func @transform_19(%arg0: i32, %arg1: i32) -> (i32, i32, i32) {
    %c0_i32 = arith.constant 0 : i32
    %c0_i32_0 = arith.constant 0 : i32
    %c0_i32_1 = arith.constant 0 : i32
    return %arg1, %c0_i32, %c0_i32_0 : i32, i32, i32
  }
  func.func @transform_20(%arg0: i32, %arg1: i32) -> (i32, i32) {
    %c0_i32 = arith.constant 0 : i32
    %c0_i32_0 = arith.constant 0 : i32
    %c0_i32_1 = arith.constant 0 : i32
    return %c0_i32, %c0_i32_0 : i32, i32
  }
  func.func @transform_21(%arg0: i32, %arg1: i32) -> (i32, i32) {
    %c0_i32 = arith.constant 0 : i32
    %c0_i32_0 = arith.constant 0 : i32
    %c0_i32_1 = arith.constant 0 : i32
    return %c0_i32, %c0_i32_0 : i32, i32
  }
  func.func @transform_22(%arg0: i32, %arg1: i32) -> (i32, i32, i32) {
    %c0_i32 = arith.constant 0 : i32
    %c0_i32_0 = arith.constant 0 : i32
    %c0_i32_1 = arith.constant 0 : i32
    return %arg0, %c0_i32, %c0_i32_0 : i32, i32, i32
  }
}

</mosaic_0001>

<llo_original>
// kernel: tpu_custom_call.1
$region0: #{tpu_custom_call.1}
  #allocation0 [shape = 'u32[]', space=smem, size = 0x4, offset = 0x4, fixed_abs, tag = 'smem constant byte address 0x4 - core index']
  #allocation1 [shape = 'u32[72,128]{1,0:T(1,128)}', space=vmem, size = 0x9000, scoped, tag = 'internal scratch']
  #allocation2 [shape = 'f32[8,128]{1,0:T(8,128)}', space=vmem, size = 0x1000, scoped, tag = 'scratch operand']
  #allocation3 [shape = 'f32[8,128]{1,0:T(8,128)}', space=vmem, size = 0x1000, scoped, tag = 'scratch operand']
  %s0 = inlined_call_operand.vmem [shape: f32[2,8,128], index: 0, kind: input, shape index: {}]
  %s1 = inlined_call_operand.hbm [shape: f32[2,16,128], index: 1, kind: input, shape index: {}]
  %s2 = inlined_call_operand.hbm [shape: f32[2,1,16], index: 2, kind: input, shape index: {}]
  %s3 = inlined_call_operand.hbm [shape: f32[2,8,8], index: 3, kind: input, shape index: {}]
  %s4 = inlined_call_operand.hbm [shape: bf16[2,128,384], index: 4, kind: input, shape index: {}]
  %s5 = inlined_call_operand.vmem [shape: f32[2,1,384], index: 5, kind: input, shape index: {}]
  %s6 = inlined_call_operand.hbm [shape: bf16[2,128,128], index: 6, kind: input, shape index: {}]
  %s7 = inlined_call_operand.hbm [shape: f32[2,1,128], index: 7, kind: input, shape index: {}]
  %s8 = inlined_call_operand.hbm [shape: bf16[2,128,128], index: 8, kind: input, shape index: {}]
  %s9 = inlined_call_operand.hbm [shape: f32[2,1,128], index: 9, kind: input, shape index: {}]
  %s10 = inlined_call_operand.hbm [shape: bf16[2,128,256], index: 10, kind: input, shape index: {}]
  %s11 = inlined_call_operand.vmem [shape: f32[2,1,256], index: 11, kind: input, shape index: {}]
  %s12 = inlined_call_operand.hbm [shape: bf16[2,128,128], index: 12, kind: input, shape index: {}]
  %s13 = inlined_call_operand.hbm [shape: f32[2,1,128], index: 13, kind: input, shape index: {}]
  %s14 = inlined_call_operand.hbm [shape: bf16[2,128,256], index: 14, kind: input, shape index: {}]
  %s15 = inlined_call_operand.vmem [shape: f32[2,1,256], index: 15, kind: input, shape index: {}]
  %s16 = inlined_call_operand.hbm [shape: bf16[2,256,128], index: 16, kind: input, shape index: {}]
  %s17 = inlined_call_operand.vmem [shape: f32[2,1,128], index: 17, kind: input, shape index: {}]
  %s18 = inlined_call_operand.vmem [shape: f32[2,3,128], index: 18, kind: input, shape index: {}]
  %s19 = inlined_call_operand.vmem [shape: f32[2,3,128], index: 19, kind: input, shape index: {}]
  %s20 = inlined_call_operand.vmem [shape: f32[1,128], index: 20, kind: input, shape index: {}]
  %s21 = inlined_call_operand.vmem [shape: f32[1,128], index: 21, kind: input, shape index: {}]
  %s22 = inlined_call_operand.hbm [shape: f32[2,8,128], index: 22, kind: output, shape index: {}]
  %s23 = sld [smem:[#allocation0]]
  $region181: #{tpu_custom_call.1} parent=0
    _
  %s25 = ssub.s32 1, %s23
  %s26 = scalar_select 0, %s25, %s23
  $region1: #{tpu_custom_call.1} parent=0
    #allocation4 [shape = 'u8[16384]{0}', space=vmem, size = 0x4000, scoped, tag = 'input window, operand 1']
    #allocation5 [shape = 's32[2]{0}', space=sflag, size = 0x8, scoped, tag = 'scoped memory for tpu_custom_call.1']
    #allocation6 [shape = 's32[2]{0}', space=sflag, size = 0x8, scoped, tag = 'scoped memory for tpu_custom_call.1']
    #allocation7 [shape = 'u8[1024]{0}', space=vmem, size = 0x400, scoped, tag = 'input window, operand 2']
    #allocation8 [shape = 's32[2]{0}', space=sflag, size = 0x8, scoped, tag = 'scoped memory for tpu_custom_call.1']
    #allocation9 [shape = 'u8[8192]{0}', space=vmem, size = 0x2000, scoped, tag = 'input window, operand 3']
    #allocation10 [shape = 'u8[196608]{0}', space=vmem, size = 0x30000, scoped, tag = 'input window, operand 4']
    #allocation11 [shape = 's32[2]{0}', space=sflag, size = 0x8, scoped, tag = 'scoped memory for tpu_custom_call.1']
    #allocation12 [shape = 'u8[65536]{0}', space=vmem, size = 0x10000, scoped, tag = 'input window, operand 6']
    #allocation13 [shape = 'u8[1024]{0}', space=vmem, size = 0x400, scoped, tag = 'input window, operand 7']
    #allocation14 [shape = 's32[2]{0}', space=sflag, size = 0x8, scoped, tag = 'scoped memory for tpu_custom_call.1']
    #allocation15 [shape = 'u8[65536]{0}', space=vmem, size = 0x10000, scoped, tag = 'input window, operand 8']
    #allocation16 [shape = 'u8[1024]{0}', space=vmem, size = 0x400, scoped, tag = 'input window, operand 9']
    #allocation17 [shape = 's32[2]{0}', space=sflag, size = 0x8, scoped, tag = 'scoped memory for tpu_custom_call.1']
    #allocation18 [shape = 'u8[131072]{0}', space=vmem, size = 0x20000, scoped, tag = 'input window, operand 10']
    #allocation19 [shape = 'u8[65536]{0}', space=vmem, size = 0x10000, scoped, tag = 'input window, operand 12']
    #allocation20 [shape = 's32[2]{0}', space=sflag, size = 0x8, scoped, tag = 'scoped memory for tpu_custom_call.1']
    #allocation21 [shape = 'u8[1024]{0}', space=vmem, size = 0x400, scoped, tag = 'input window, operand 13']
    #allocation22 [shape = 'u8[131072]{0}', space=vmem, size = 0x20000, scoped, tag = 'input window, operand 14']
    #allocation23 [shape = 's32[2]{0}', space=sflag, size = 0x8, scoped, tag = 'scoped memory for tpu_custom_call.1']
    #allocation24 [shape = 'u8[131072]{0}', space=vmem, size = 0x20000, scoped, tag = 'input window, operand 16']
    #allocation25 [shape = 'u8[8192]{0}', space=vmem, size = 0x2000, scoped, tag = 'output window, operand 0']
    %27 = vsyncpa [#allocation5], 0
    %s28 = scalar_lea.sflag [#allocation5], 1
    %29 = vsyncpa %s28, 0
    %30 = vsyncpa [#allocation8], 0
    %s31 = scalar_lea.sflag [#allocation8], 1
    %32 = vsyncpa %s31, 0
    %33 = vsyncpa [#allocation11], 0
    %s34 = scalar_lea.sflag [#allocation11], 1
    %35 = vsyncpa %s34, 0
    %36 = vsyncpa [#allocation14], 0
    %s37 = scalar_lea.sflag [#allocation14], 1
    %38 = vsyncpa %s37, 0
    %39 = vsyncpa [#allocation17], 0
    %s40 = scalar_lea.sflag [#allocation17], 1
    %41 = vsyncpa %s40, 0
    %42 = vsyncpa [#allocation20], 0
    %s43 = scalar_lea.sflag [#allocation20], 1
    %44 = vsyncpa %s43, 0
    %45 = vsyncpa [#allocation23], 0
    %s46 = scalar_lea.sflag [#allocation23], 1
    %47 = vsyncpa %s46, 0
    %48 = vsyncpa [#allocation6], 0
    %s49 = scalar_lea.sflag [#allocation6], 1
    %50 = vsyncpa %s49, 0
    loop: start=0, step=1, limit=6
    $region2: #{tpu_custom_call.1} parent=1 // loop_pre_header
      _
    $region3: #{tpu_custom_call.1} parent=1 // loop_header
      %s52 = sphi 0, %s56
      %p53 = scmp.ge.s32.totalorder %s52, 6
      %s59 = sphi 0, %s71
      %s60 = sphi 0, %s67
      %s61 = sphi 0, %s59
      %s62 = sphi 0, %s60
      %s63 = sphi 0, %s61
      %s64 = sphi 0, %s62
      %s74 = sphi 0, %s76
      %s77 = sphi 0, %s74
      %s78 = sphi 0, %s77
      %s94 = sphi 0, %s78
      %s100 = sphi 0, %s102
      %s103 = sphi 0, %s100
      %s104 = sphi 0, %s103
      %s120 = sphi 0, %s104
      %s126 = sphi 0, %s128
      %s129 = sphi 0, %s126
      %s130 = sphi 0, %s129
      %s146 = sphi 0, %s130
      %s152 = sphi 0, %s154
      %s155 = sphi 0, %s152
      %s156 = sphi 0, %s155
      %s172 = sphi 0, %s156
      %s178 = sphi 0, %s180
      %s181 = sphi 0, %s178
      %s182 = sphi 0, %s181
      %s198 = sphi 0, %s182
      %s204 = sphi 0, %s206
      %s207 = sphi 0, %s204
      %s208 = sphi 0, %s207
      %s224 = sphi 0, %s208
      %s230 = sphi 0, %s232
      %s233 = sphi 0, %s230
      %s234 = sphi 0, %s233
      %s250 = sphi 0, %s234
      %s256 = sphi 0, %s258
      %s259 = sphi 0, %s256
      %s260 = sphi 0, %s259
      %s276 = sphi 0, %s260
      %s282 = sphi 0, %s284
      %s285 = sphi 0, %s282
      %s286 = sphi 0, %s285
      %s302 = sphi 0, %s286
      %s308 = sphi 0, %s310
      %s311 = sphi 0, %s308
      %s312 = sphi 0, %s311
      %s328 = sphi 0, %s312
      %s334 = sphi 0, %s336
      %s337 = sphi 0, %s334
      %s338 = sphi 0, %s337
      %s354 = sphi 0, %s338
      %s360 = sphi 0, %s362
      %s363 = sphi 0, %s360
      %s364 = sphi 0, %s363
      %s380 = sphi 0, %s364
      %s386 = sphi 0, %s388
      %s389 = sphi 0, %s386
      %s390 = sphi 0, %s389
      %s406 = sphi 0, %s390
      %s412 = sphi 0, %s414
      %s415 = sphi 0, %s412
      %s416 = sphi 0, %s415
      %s432 = sphi 0, %s416
      %s438 = sphi 0, %s440
      %s441 = sphi 0, %s438
      %s442 = sphi 0, %s441
      %s458 = sphi 0, %s442
      %s464 = sphi 0, %s466
      %s467 = sphi 0, %s464
      %s468 = sphi 0, %s467
      %s484 = sphi 0, %s468
      %s490 = sphi 0, %s492
      %s493 = sphi 0, %s490
      %s494 = sphi 0, %s493
      %s510 = sphi 0, %s494
      %s516 = sphi 0, %s518
      %s519 = sphi 0, %s516
      %s520 = sphi 0, %s519
      %s536 = sphi 0, %s520
      %s542 = sphi 0, %s544
      %s545 = sphi 0, %s542
      %s546 = sphi 0, %s545
      %s562 = sphi 0, %s546
      %s568 = sphi 0, %s570
      %s571 = sphi 0, %s568
      %s572 = sphi 0, %s571
      %s588 = sphi 0, %s572
      %s592 = sphi 0, %s592
      %s594 = sphi 0, %s592
      %s595 = sphi 0, %s594
      %s609 = sphi 0, %s595
      %s613 = sphi 0, %s613
      %s615 = sphi 0, %s613
      %s616 = sphi 0, %s615
      %s630 = sphi 0, %s616
      %s636 = sphi 0, %s638
      %s639 = sphi 0, %s636
      %s640 = sphi 0, %s639
      %s656 = sphi 0, %s640
    $region4: #{tpu_custom_call.1} parent=1 // loop_header_branch
      %55 = sbr.rel (%p53) target = $region8
    $region5: #{tpu_custom_call.1} parent=1 // loop_body
      %s57 = ssub.s32 %s52, 1
      %s58 = ssub.s32 %s52, 2
      %s65 = sadd.s32 1, %s60
      %p66 = scmp.ge.s32.totalorder %s65, 2
      %s67 = scalar_select %p66, 0, %s65
      %s68 = sadd.s32 1, %s59
      %s69 = scalar_select %p66, %s68, %s59
      %p70 = scmp.ge.s32.totalorder %s69, 2
      %s71 = scalar_select %p70, 0, %s69
      %s72 = ssub.s32 %s59, %s71
      %p73 = scmp.eq.s32.totalorder %s72, 0
      %s75 = sadd.s32 %s74, 1
      %s76 = scalar_select %p73, %s74, %s75
      %p79 = pneg %p73
      %p80 = scmp.eq.s32.totalorder %s52, 3
      %p81 = por %p79, %p80
      %p82 = scmp.ne.s32.totalorder %s74, %s77
      %p83 = scmp.eq.s32.totalorder %s52, 0
      %p84 = por %p82, %p83
      %p85 = scmp.ne.s32.totalorder %s74, %s77
      %p86 = scmp.eq.s32.totalorder %s57, 3
      %p87 = por %p85, %p86
      %p88 = scmp.ne.s32.totalorder %s77, %s78
      %p89 = scmp.eq.s32.totalorder %s57, 0
      %p90 = por %p88, %p89
      %p91 = scmp.ne.s32.totalorder %s77, %s78
      %p92 = scmp.eq.s32.totalorder %s58, 3
      %p93 = por %p91, %p92
      %p95 = scmp.ne.s32.totalorder %s78, %s94
      %p96 = scmp.eq.s32.totalorder %s58, 0
      %p97 = por %p95, %p96
      %s98 = ssub.s32 %s59, %s71
      %p99 = scmp.eq.s32.totalorder %s98, 0
      %s101 = sadd.s32 %s100, 1
      %s102 = scalar_select %p99, %s100, %s101
      %p105 = pneg %p99
      %p106 = scmp.eq.s32.totalorder %s52, 3
      %p107 = por %p105, %p106
      %p108 = scmp.ne.s32.totalorder %s100, %s103
      %p109 = scmp.eq.s32.totalorder %s52, 0
      %p110 = por %p108, %p109
      %p111 = scmp.ne.s32.totalorder %s100, %s103
      %p112 = scmp.eq.s32.totalorder %s57, 3
      %p113 = por %p111, %p112
      %p114 = scmp.ne.s32.totalorder %s103, %s104
      %p115 = scmp.eq.s32.totalorder %s57, 0
      %p116 = por %p114, %p115
      %p117 = scmp.ne.s32.totalorder %s103, %s104
      %p118 = scmp.eq.s32.totalorder %s58, 3
      %p119 = por %p117, %p118
      %p121 = scmp.ne.s32.totalorder %s104, %s120
      %p122 = scmp.eq.s32.totalorder %s58, 0
      %p123 = por %p121, %p122
      %s124 = ssub.s32 %s59, %s71
      %p125 = scmp.eq.s32.totalorder %s124, 0
      %s127 = sadd.s32 %s126, 1
      %s128 = scalar_select %p125, %s126, %s127
      %p131 = pneg %p125
      %p132 = scmp.eq.s32.totalorder %s52, 3
      %p133 = por %p131, %p132
      %p134 = scmp.ne.s32.totalorder %s126, %s129
      %p135 = scmp.eq.s32.totalorder %s52, 0
      %p136 = por %p134, %p135
      %p137 = scmp.ne.s32.totalorder %s126, %s129
      %p138 = scmp.eq.s32.totalorder %s57, 3
      %p139 = por %p137, %p138
      %p140 = scmp.ne.s32.totalorder %s129, %s130
      %p141 = scmp.eq.s32.totalorder %s57, 0
      %p142 = por %p140, %p141
      %p143 = scmp.ne.s32.totalorder %s129, %s130
      %p144 = scmp.eq.s32.totalorder %s58, 3
      %p145 = por %p143, %p144
      %p147 = scmp.ne.s32.totalorder %s130, %s146
      %p148 = scmp.eq.s32.totalorder %s58, 0
      %p149 = por %p147, %p148
      %s150 = ssub.s32 %s59, %s71
      %p151 = scmp.eq.s32.totalorder %s150, 0
      %s153 = sadd.s32 %s152, 1
      %s154 = scalar_select %p151, %s152, %s153
      %p157 = pneg %p151
      %p158 = scmp.eq.s32.totalorder %s52, 3
      %p159 = por %p157, %p158
      %p160 = scmp.ne.s32.totalorder %s152, %s155
      %p161 = scmp.eq.s32.totalorder %s52, 0
      %p162 = por %p160, %p161
      %p163 = scmp.ne.s32.totalorder %s152, %s155
      %p164 = scmp.eq.s32.totalorder %s57, 3
      %p165 = por %p163, %p164
      %p166 = scmp.ne.s32.totalorder %s155, %s156
      %p167 = scmp.eq.s32.totalorder %s57, 0
      %p168 = por %p166, %p167
      %p169 = scmp.ne.s32.totalorder %s155, %s156
      %p170 = scmp.eq.s32.totalorder %s58, 3
      %p171 = por %p169, %p170
      %p173 = scmp.ne.s32.totalorder %s156, %s172
      %p174 = scmp.eq.s32.totalorder %s58, 0
      %p175 = por %p173, %p174
      %s176 = ssub.s32 %s60, %s67
      %p177 = scmp.eq.s32.totalorder %s176, 0
      %s179 = sadd.s32 %s178, 1
      %s180 = scalar_select %p177, %s178, %s179
      %p183 = pneg %p177
      %p184 = scmp.eq.s32.totalorder %s52, 3
      %p185 = por %p183, %p184
      %p186 = scmp.ne.s32.totalorder %s178, %s181
      %p187 = scmp.eq.s32.totalorder %s52, 0
      %p188 = por %p186, %p187
      %p189 = scmp.ne.s32.totalorder %s178, %s181
      %p190 = scmp.eq.s32.totalorder %s57, 3
      %p191 = por %p189, %p190
      %p192 = scmp.ne.s32.totalorder %s181, %s182
      %p193 = scmp.eq.s32.totalorder %s57, 0
      %p194 = por %p192, %p193
      %p195 = scmp.ne.s32.totalorder %s181, %s182
      %p196 = scmp.eq.s32.totalorder %s58, 3
      %p197 = por %p195, %p196
      %p199 = scmp.ne.s32.totalorder %s182, %s198
      %p200 = scmp.eq.s32.totalorder %s58, 0
      %p201 = por %p199, %p200
      %s202 = ssub.s32 %s60, %s67
      %p203 = scmp.eq.s32.totalorder %s202, 0
      %s205 = sadd.s32 %s204, 1
      %s206 = scalar_select %p203, %s204, %s205
      %p209 = pneg %p203
      %p210 = scmp.eq.s32.totalorder %s52, 3
      %p211 = por %p209, %p210
      %p212 = scmp.ne.s32.totalorder %s204, %s207
      %p213 = scmp.eq.s32.totalorder %s52, 0
      %p214 = por %p212, %p213
      %p215 = scmp.ne.s32.totalorder %s204, %s207
      %p216 = scmp.eq.s32.totalorder %s57, 3
      %p217 = por %p215, %p216
      %p218 = scmp.ne.s32.totalorder %s207, %s208
      %p219 = scmp.eq.s32.totalorder %s57, 0
      %p220 = por %p218, %p219
      %p221 = scmp.ne.s32.totalorder %s207, %s208
      %p222 = scmp.eq.s32.totalorder %s58, 3
      %p223 = por %p221, %p222
      %p225 = scmp.ne.s32.totalorder %s208, %s224
      %p226 = scmp.eq.s32.totalorder %s58, 0
      %p227 = por %p225, %p226
      %s228 = ssub.s32 %s60, %s67
      %p229 = scmp.eq.s32.totalorder %s228, 0
      %s231 = sadd.s32 %s230, 1
      %s232 = scalar_select %p229, %s230, %s231
      %p235 = pneg %p229
      %p236 = scmp.eq.s32.totalorder %s52, 3
      %p237 = por %p235, %p236
      %p238 = scmp.ne.s32.totalorder %s230, %s233
      %p239 = scmp.eq.s32.totalorder %s52, 0
      %p240 = por %p238, %p239
      %p241 = scmp.ne.s32.totalorder %s230, %s233
      %p242 = scmp.eq.s32.totalorder %s57, 3
      %p243 = por %p241, %p242
      %p244 = scmp.ne.s32.totalorder %s233, %s234
      %p245 = scmp.eq.s32.totalorder %s57, 0
      %p246 = por %p244, %p245
      %p247 = scmp.ne.s32.totalorder %s233, %s234
      %p248 = scmp.eq.s32.totalorder %s58, 3
      %p249 = por %p247, %p248
      %p251 = scmp.ne.s32.totalorder %s234, %s250
      %p252 = scmp.eq.s32.totalorder %s58, 0
      %p253 = por %p251, %p252
      %s254 = ssub.s32 %s60, %s67
      %p255 = scmp.eq.s32.totalorder %s254, 0
      %s257 = sadd.s32 %s256, 1
      %s258 = scalar_select %p255, %s256, %s257
      %p261 = pneg %p255
      %p262 = scmp.eq.s32.totalorder %s52, 3
      %p263 = por %p261, %p262
      %p264 = scmp.ne.s32.totalorder %s256, %s259
      %p265 = scmp.eq.s32.totalorder %s52, 0
      %p266 = por %p264, %p265
      %p267 = scmp.ne.s32.totalorder %s256, %s259
      %p268 = scmp.eq.s32.totalorder %s57, 3
      %p269 = por %p267, %p268
      %p270 = scmp.ne.s32.totalorder %s259, %s260
      %p271 = scmp.eq.s32.totalorder %s57, 0
      %p272 = por %p270, %p271
      %p273 = scmp.ne.s32.totalorder %s259, %s260
      %p274 = scmp.eq.s32.totalorder %s58, 3
      %p275 = por %p273, %p274
      %p277 = scmp.ne.s32.totalorder %s260, %s276
      %p278 = scmp.eq.s32.totalorder %s58, 0
      %p279 = por %p277, %p278
      %s280 = ssub.s32 %s60, %s67
      %p281 = scmp.eq.s32.totalorder %s280, 0
      %s283 = sadd.s32 %s282, 1
      %s284 = scalar_select %p281, %s282, %s283
      %p287 = pneg %p281
      %p288 = scmp.eq.s32.totalorder %s52, 3
      %p289 = por %p287, %p288
      %p290 = scmp.ne.s32.totalorder %s282, %s285
      %p291 = scmp.eq.s32.totalorder %s52, 0
      %p292 = por %p290, %p291
      %p293 = scmp.ne.s32.totalorder %s282, %s285
      %p294 = scmp.eq.s32.totalorder %s57, 3
      %p295 = por %p293, %p294
      %p296 = scmp.ne.s32.totalorder %s285, %s286
      %p297 = scmp.eq.s32.totalorder %s57, 0
      %p298 = por %p296, %p297
      %p299 = scmp.ne.s32.totalorder %s285, %s286
      %p300 = scmp.eq.s32.totalorder %s58, 3
      %p301 = por %p299, %p300
      %p303 = scmp.ne.s32.totalorder %s286, %s302
      %p304 = scmp.eq.s32.totalorder %s58, 0
      %p305 = por %p303, %p304
      %s306 = ssub.s32 %s60, %s67
      %p307 = scmp.eq.s32.totalorder %s306, 0
      %s309 = sadd.s32 %s308, 1
      %s310 = scalar_select %p307, %s308, %s309
      %p313 = pneg %p307
      %p314 = scmp.eq.s32.totalorder %s52, 3
      %p315 = por %p313, %p314
      %p316 = scmp.ne.s32.totalorder %s308, %s311
      %p317 = scmp.eq.s32.totalorder %s52, 0
      %p318 = por %p316, %p317
      %p319 = scmp.ne.s32.totalorder %s308, %s311
      %p320 = scmp.eq.s32.totalorder %s57, 3
      %p321 = por %p319, %p320
      %p322 = scmp.ne.s32.totalorder %s311, %s312
      %p323 = scmp.eq.s32.totalorder %s57, 0
      %p324 = por %p322, %p323
      %p325 = scmp.ne.s32.totalorder %s311, %s312
      %p326 = scmp.eq.s32.totalorder %s58, 3
      %p327 = por %p325, %p326
      %p329 = scmp.ne.s32.totalorder %s312, %s328
      %p330 = scmp.eq.s32.totalorder %s58, 0
      %p331 = por %p329, %p330
      %s332 = ssub.s32 %s60, %s67
      %p333 = scmp.eq.s32.totalorder %s332, 0
      %s335 = sadd.s32 %s334, 1
      %s336 = scalar_select %p333, %s334, %s335
      %p339 = pneg %p333
      %p340 = scmp.eq.s32.totalorder %s52, 3
      %p341 = por %p339, %p340
      %p342 = scmp.ne.s32.totalorder %s334, %s337
      %p343 = scmp.eq.s32.totalorder %s52, 0
      %p344 = por %p342, %p343
      %p345 = scmp.ne.s32.totalorder %s334, %s337
      %p346 = scmp.eq.s32.totalorder %s57, 3
      %p347 = por %p345, %p346
      %p348 = scmp.ne.s32.totalorder %s337, %s338
      %p349 = scmp.eq.s32.totalorder %s57, 0
      %p350 = por %p348, %p349
      %p351 = scmp.ne.s32.totalorder %s337, %s338
      %p352 = scmp.eq.s32.totalorder %s58, 3
      %p353 = por %p351, %p352
      %p355 = scmp.ne.s32.totalorder %s338, %s354
      %p356 = scmp.eq.s32.totalorder %s58, 0
      %p357 = por %p355, %p356
      %s358 = ssub.s32 %s60, %s67
      %p359 = scmp.eq.s32.totalorder %s358, 0
      %s361 = sadd.s32 %s360, 1
      %s362 = scalar_select %p359, %s360, %s361
      %p365 = pneg %p359
      %p366 = scmp.eq.s32.totalorder %s52, 3
      %p367 = por %p365, %p366
      %p368 = scmp.ne.s32.totalorder %s360, %s363
      %p369 = scmp.eq.s32.totalorder %s52, 0
      %p370 = por %p368, %p369
      %p371 = scmp.ne.s32.totalorder %s360, %s363
      %p372 = scmp.eq.s32.totalorder %s57, 3
      %p373 = por %p371, %p372
      %p374 = scmp.ne.s32.totalorder %s363, %s364
      %p375 = scmp.eq.s32.totalorder %s57, 0
      %p376 = por %p374, %p375
      %p377 = scmp.ne.s32.totalorder %s363, %s364
      %p378 = scmp.eq.s32.totalorder %s58, 3
      %p379 = por %p377, %p378
      %p381 = scmp.ne.s32.totalorder %s364, %s380
      %p382 = scmp.eq.s32.totalorder %s58, 0
      %p383 = por %p381, %p382
      %s384 = ssub.s32 %s60, %s67
      %p385 = scmp.eq.s32.totalorder %s384, 0
      %s387 = sadd.s32 %s386, 1
      %s388 = scalar_select %p385, %s386, %s387
      %p391 = pneg %p385
      %p392 = scmp.eq.s32.totalorder %s52, 3
      %p393 = por %p391, %p392
      %p394 = scmp.ne.s32.totalorder %s386, %s389
      %p395 = scmp.eq.s32.totalorder %s52, 0
      %p396 = por %p394, %p395
      %p397 = scmp.ne.s32.totalorder %s386, %s389
      %p398 = scmp.eq.s32.totalorder %s57, 3
      %p399 = por %p397, %p398
      %p400 = scmp.ne.s32.totalorder %s389, %s390
      %p401 = scmp.eq.s32.totalorder %s57, 0
      %p402 = por %p400, %p401
      %p403 = scmp.ne.s32.totalorder %s389, %s390
      %p404 = scmp.eq.s32.totalorder %s58, 3
      %p405 = por %p403, %p404
      %p407 = scmp.ne.s32.totalorder %s390, %s406
      %p408 = scmp.eq.s32.totalorder %s58, 0
      %p409 = por %p407, %p408
      %s410 = ssub.s32 %s60, %s67
      %p411 = scmp.eq.s32.totalorder %s410, 0
      %s413 = sadd.s32 %s412, 1
      %s414 = scalar_select %p411, %s412, %s413
      %p417 = pneg %p411
      %p418 = scmp.eq.s32.totalorder %s52, 3
      %p419 = por %p417, %p418
      %p420 = scmp.ne.s32.totalorder %s412, %s415
      %p421 = scmp.eq.s32.totalorder %s52, 0
      %p422 = por %p420, %p421
      %p423 = scmp.ne.s32.totalorder %s412, %s415
      %p424 = scmp.eq.s32.totalorder %s57, 3
      %p425 = por %p423, %p424
      %p426 = scmp.ne.s32.totalorder %s415, %s416
      %p427 = scmp.eq.s32.totalorder %s57, 0
      %p428 = por %p426, %p427
      %p429 = scmp.ne.s32.totalorder %s415, %s416
      %p430 = scmp.eq.s32.totalorder %s58, 3
      %p431 = por %p429, %p430
      %p433 = scmp.ne.s32.totalorder %s416, %s432
      %p434 = scmp.eq.s32.totalorder %s58, 0
      %p435 = por %p433, %p434
      %s436 = ssub.s32 %s60, %s67
      %p437 = scmp.eq.s32.totalorder %s436, 0
      %s439 = sadd.s32 %s438, 1
      %s440 = scalar_select %p437, %s438, %s439
      %p443 = pneg %p437
      %p444 = scmp.eq.s32.totalorder %s52, 3
      %p445 = por %p443, %p444
      %p446 = scmp.ne.s32.totalorder %s438, %s441
      %p447 = scmp.eq.s32.totalorder %s52, 0
      %p448 = por %p446, %p447
      %p449 = scmp.ne.s32.totalorder %s438, %s441
      %p450 = scmp.eq.s32.totalorder %s57, 3
      %p451 = por %p449, %p450
      %p452 = scmp.ne.s32.totalorder %s441, %s442
      %p453 = scmp.eq.s32.totalorder %s57, 0
      %p454 = por %p452, %p453
      %p455 = scmp.ne.s32.totalorder %s441, %s442
      %p456 = scmp.eq.s32.totalorder %s58, 3
      %p457 = por %p455, %p456
      %p459 = scmp.ne.s32.totalorder %s442, %s458
      %p460 = scmp.eq.s32.totalorder %s58, 0
      %p461 = por %p459, %p460
      %s462 = ssub.s32 %s60, %s67
      %p463 = scmp.eq.s32.totalorder %s462, 0
      %s465 = sadd.s32 %s464, 1
      %s466 = scalar_select %p463, %s464, %s465
      %p469 = pneg %p463
      %p470 = scmp.eq.s32.totalorder %s52, 3
      %p471 = por %p469, %p470
      %p472 = scmp.ne.s32.totalorder %s464, %s467
      %p473 = scmp.eq.s32.totalorder %s52, 0
      %p474 = por %p472, %p473
      %p475 = scmp.ne.s32.totalorder %s464, %s467
      %p476 = scmp.eq.s32.totalorder %s57, 3
      %p477 = por %p475, %p476
      %p478 = scmp.ne.s32.totalorder %s467, %s468
      %p479 = scmp.eq.s32.totalorder %s57, 0
      %p480 = por %p478, %p479
      %p481 = scmp.ne.s32.totalorder %s467, %s468
      %p482 = scmp.eq.s32.totalorder %s58, 3
      %p483 = por %p481, %p482
      %p485 = scmp.ne.s32.totalorder %s468, %s484
      %p486 = scmp.eq.s32.totalorder %s58, 0
      %p487 = por %p485, %p486
      %s488 = ssub.s32 %s60, %s67
      %p489 = scmp.eq.s32.totalorder %s488, 0
      %s491 = sadd.s32 %s490, 1
      %s492 = scalar_select %p489, %s490, %s491
      %p495 = pneg %p489
      %p496 = scmp.eq.s32.totalorder %s52, 3
      %p497 = por %p495, %p496
      %p498 = scmp.ne.s32.totalorder %s490, %s493
      %p499 = scmp.eq.s32.totalorder %s52, 0
      %p500 = por %p498, %p499
      %p501 = scmp.ne.s32.totalorder %s490, %s493
      %p502 = scmp.eq.s32.totalorder %s57, 3
      %p503 = por %p501, %p502
      %p504 = scmp.ne.s32.totalorder %s493, %s494
      %p505 = scmp.eq.s32.totalorder %s57, 0
      %p506 = por %p504, %p505
      %p507 = scmp.ne.s32.totalorder %s493, %s494
      %p508 = scmp.eq.s32.totalorder %s58, 3
      %p509 = por %p507, %p508
      %p511 = scmp.ne.s32.totalorder %s494, %s510
      %p512 = scmp.eq.s32.totalorder %s58, 0
      %p513 = por %p511, %p512
      %s514 = ssub.s32 %s60, %s67
      %p515 = scmp.eq.s32.totalorder %s514, 0
      %s517 = sadd.s32 %s516, 1
      %s518 = scalar_select %p515, %s516, %s517
      %p521 = pneg %p515
      %p522 = scmp.eq.s32.totalorder %s52, 3
      %p523 = por %p521, %p522
      %p524 = scmp.ne.s32.totalorder %s516, %s519
      %p525 = scmp.eq.s32.totalorder %s52, 0
      %p526 = por %p524, %p525
      %p527 = scmp.ne.s32.totalorder %s516, %s519
      %p528 = scmp.eq.s32.totalorder %s57, 3
      %p529 = por %p527, %p528
      %p530 = scmp.ne.s32.totalorder %s519, %s520
      %p531 = scmp.eq.s32.totalorder %s57, 0
      %p532 = por %p530, %p531
      %p533 = scmp.ne.s32.totalorder %s519, %s520
      %p534 = scmp.eq.s32.totalorder %s58, 3
      %p535 = por %p533, %p534
      %p537 = scmp.ne.s32.totalorder %s520, %s536
      %p538 = scmp.eq.s32.totalorder %s58, 0
      %p539 = por %p537, %p538
      %s540 = ssub.s32 %s60, %s67
      %p541 = scmp.eq.s32.totalorder %s540, 0
      %s543 = sadd.s32 %s542, 1
      %s544 = scalar_select %p541, %s542, %s543
      %p547 = pneg %p541
      %p548 = scmp.eq.s32.totalorder %s52, 3
      %p549 = por %p547, %p548
      %p550 = scmp.ne.s32.totalorder %s542, %s545
      %p551 = scmp.eq.s32.totalorder %s52, 0
      %p552 = por %p550, %p551
      %p553 = scmp.ne.s32.totalorder %s542, %s545
      %p554 = scmp.eq.s32.totalorder %s57, 3
      %p555 = por %p553, %p554
      %p556 = scmp.ne.s32.totalorder %s545, %s546
      %p557 = scmp.eq.s32.totalorder %s57, 0
      %p558 = por %p556, %p557
      %p559 = scmp.ne.s32.totalorder %s545, %s546
      %p560 = scmp.eq.s32.totalorder %s58, 3
      %p561 = por %p559, %p560
      %p563 = scmp.ne.s32.totalorder %s546, %s562
      %p564 = scmp.eq.s32.totalorder %s58, 0
      %p565 = por %p563, %p564
      %s566 = ssub.s32 %s60, %s67
      %p567 = scmp.eq.s32.totalorder %s566, 0
      %s569 = sadd.s32 %s568, 1
      %s570 = scalar_select %p567, %s568, %s569
      %p573 = pneg %p567
      %p574 = scmp.eq.s32.totalorder %s52, 3
      %p575 = por %p573, %p574
      %p576 = scmp.ne.s32.totalorder %s568, %s571
      %p577 = scmp.eq.s32.totalorder %s52, 0
      %p578 = por %p576, %p577
      %p579 = scmp.ne.s32.totalorder %s568, %s571
      %p580 = scmp.eq.s32.totalorder %s57, 3
      %p581 = por %p579, %p580
      %p582 = scmp.ne.s32.totalorder %s571, %s572
      %p583 = scmp.eq.s32.totalorder %s57, 0
      %p584 = por %p582, %p583
      %p585 = scmp.ne.s32.totalorder %s571, %s572
      %p586 = scmp.eq.s32.totalorder %s58, 3
      %p587 = por %p585, %p586
      %p589 = scmp.ne.s32.totalorder %s572, %s588
      %p590 = scmp.eq.s32.totalorder %s58, 0
      %p591 = por %p589, %p590
      %s593 = sadd.s32 %s592, 1
      %p596 = scmp.eq.s32.totalorder %s52, 3
      %p597 = scmp.ne.s32.totalorder %s592, %s594
      %p598 = scmp.eq.s32.totalorder %s52, 0
      %p599 = por %p597, %p598
      %p600 = scmp.ne.s32.totalorder %s592, %s594
      %p601 = scmp.eq.s32.totalorder %s57, 3
      %p602 = por %p600, %p601
      %p603 = scmp.ne.s32.totalorder %s594, %s595
      %p604 = scmp.eq.s32.totalorder %s57, 0
      %p605 = por %p603, %p604
      %p606 = scmp.ne.s32.totalorder %s594, %s595
      %p607 = scmp.eq.s32.totalorder %s58, 3
      %p608 = por %p606, %p607
      %p610 = scmp.ne.s32.totalorder %s595, %s609
      %p611 = scmp.eq.s32.totalorder %s58, 0
      %p612 = por %p610, %p611
      %s614 = sadd.s32 %s613, 1
      %p617 = scmp.eq.s32.totalorder %s52, 3
      %p618 = scmp.ne.s32.totalorder %s613, %s615
      %p619 = scmp.eq.s32.totalorder %s52, 0
      %p620 = por %p618, %p619
      %p621 = scmp.ne.s32.totalorder %s613, %s615
      %p622 = scmp.eq.s32.totalorder %s57, 3
      %p623 = por %p621, %p622
      %p624 = scmp.ne.s32.totalorder %s615, %s616
      %p625 = scmp.eq.s32.totalorder %s57, 0
      %p626 = por %p624, %p625
      %p627 = scmp.ne.s32.totalorder %s615, %s616
      %p628 = scmp.eq.s32.totalorder %s58, 3
      %p629 = por %p627, %p628
      %p631 = scmp.ne.s32.totalorder %s616, %s630
      %p632 = scmp.eq.s32.totalorder %s58, 0
      %p633 = por %p631, %p632
      %s634 = ssub.s32 %s59, %s71
      %p635 = scmp.eq.s32.totalorder %s634, 0
      %s637 = sadd.s32 %s636, 1
      %s638 = scalar_select %p635, %s636, %s637
      %p641 = pneg %p635
      %p642 = scmp.eq.s32.totalorder %s52, 3
      %p643 = por %p641, %p642
      %p644 = scmp.ne.s32.totalorder %s636, %s639
      %p645 = scmp.eq.s32.totalorder %s52, 0
      %p646 = por %p644, %p645
      %p647 = scmp.ne.s32.totalorder %s636, %s639
      %p648 = scmp.eq.s32.totalorder %s57, 3
      %p649 = por %p647, %p648
      %p650 = scmp.ne.s32.totalorder %s639, %s640
      %p651 = scmp.eq.s32.totalorder %s57, 0
      %p652 = por %p650, %p651
      %p653 = scmp.ne.s32.totalorder %s639, %s640
      %p654 = scmp.eq.s32.totalorder %s58, 3
      %p655 = por %p653, %p654
      %p657 = scmp.ne.s32.totalorder %s640, %s656
      %p658 = scmp.eq.s32.totalorder %s58, 0
      %p659 = por %p657, %p658
      %p660 = scmp.le.s32.totalorder 1, %s52
      %p661 = scmp.lt.s32.totalorder %s52, 5
      %p662 = pnand %p660, %p661
      %p663 = pneg %p662
      // Predicated region
      $region9: #{tpu_custom_call.1} parent=5 // pred_check
        _
      $region10: #{tpu_custom_call.1} parent=5 // pred_check_branch
        %665 = sbr.rel (%p662) target = $region12
      $region11: #{tpu_custom_call.1} parent=5 // pred_region
        %s666 = ssub.s32 %s52, 1
        // Predicated region
        $region13: #{tpu_custom_call.1} parent=11 // pred_check
          %p667 = pneg %p605
        $region14: #{tpu_custom_call.1} parent=11 // pred_check_branch
          %669 = sbr.rel (%p667) target = $region16
        $region15: #{tpu_custom_call.1} parent=11 // pred_region
          _
        $region16: #{tpu_custom_call.1} parent=11 // pred_fallthru
          _
        // Predicated region
        $region17: #{tpu_custom_call.1} parent=11 // pred_check
          %p670 = pneg %p626
        $region18: #{tpu_custom_call.1} parent=11 // pred_check_branch
          %672 = sbr.rel (%p670) target = $region20
        $region19: #{tpu_custom_call.1} parent=11 // pred_region
          _
        $region20: #{tpu_custom_call.1} parent=11 // pred_fallthru
          _
      $region12: #{tpu_custom_call.1} parent=5 // pred_fallthru
        _
      %p673 = scmp.lt.s32.totalorder %s52, 4
      // Predicated region
      $region21: #{tpu_custom_call.1} parent=5 // pred_check
        %p674 = pneg %p673
      $region22: #{tpu_custom_call.1} parent=5 // pred_check_branch
        %676 = sbr.rel (%p674) target = $region24
      $region23: #{tpu_custom_call.1} parent=5 // pred_region
        // Predicated region
        $region25: #{tpu_custom_call.1} parent=23 // pred_check
          %p677 = pneg %p84
        $region26: #{tpu_custom_call.1} parent=23 // pred_check_branch
          %679 = sbr.rel (%p677) target = $region28
        $region27: #{tpu_custom_call.1} parent=23 // pred_region
          %p680 = scmp.lt.s32.totalorder %s59, 1
          %s681 = scalar_select %p680, %s59, 1
          %s682 = smul.addr %s681, 8
          %s683 = scalar_lea.vmem %s0, %s682
        $region28: #{tpu_custom_call.1} parent=23 // pred_fallthru
          _
        // Predicated region
        $region29: #{tpu_custom_call.1} parent=23 // pred_check
          %p684 = pneg %p110
        $region30: #{tpu_custom_call.1} parent=23 // pred_check_branch
          %686 = sbr.rel (%p684) target = $region32
        $region31: #{tpu_custom_call.1} parent=23 // pred_region
          %s687 = sand.u32 %s100, 1
          %s688 = scalar_lea.sflag [#allocation5], %s687
          %s689 = sand.u32 %s100, 1
          %s690 = smul.addr %s689, 16
          %s691 = scalar_lea.vmem [#allocation4], %s690
          %693 = vsyncadd %s688, 0
          %s694 = smul.addr %s59, 2
          %s695 = smul.addr %s694, 8
          %s696 = scalar_lea.hbm %s1, %s695
          %s697 = sshll.u32 %s696, 4
          %s698 = int_to_ptr.hbm [resolvable:$true] %s697
          %s699 = sshll.u32 %s691, 4
          %s700 = int_to_ptr.vmem [resolvable:$true] %s699
          %705 = dma.hbm_to_vmem [thread:$0]  %s698, 256, %s700, %s688, 128, 128, 8
        $region32: #{tpu_custom_call.1} parent=23 // pred_fallthru
          _
        // Predicated region
        $region33: #{tpu_custom_call.1} parent=23 // pred_check
          %p706 = pneg %p136
        $region34: #{tpu_custom_call.1} parent=23 // pred_check_branch
          %708 = sbr.rel (%p706) target = $region36
        $region35: #{tpu_custom_call.1} parent=23 // pred_region
          %s709 = sand.u32 %s52, 1
          %s710 = scalar_lea.sflag [#allocation8], %s709
          %s711 = sand.u32 %s126, 1
          %s712 = scalar_lea.vmem [#allocation7], %s711
          %714 = vsyncadd %s710, 0
          %s715 = scalar_lea.hbm %s2, %s59
          %s717 = sshll.u32 %s715, 4
          %s718 = int_to_ptr.hbm [resolvable:$true] %s717
          %s719 = sshll.u32 %s712, 4
          %s720 = int_to_ptr.vmem [resolvable:$true] %s719
          %722 = dma.hbm_to_vmem [thread:$0]  %s718, 16, %s720, %s710
        $region36: #{tpu_custom_call.1} parent=23 // pred_fallthru
          _
        // Predicated region
        $region37: #{tpu_custom_call.1} parent=23 // pred_check
          %p723 = pneg %p162
        $region38: #{tpu_custom_call.1} parent=23 // pred_check_branch
          %725 = sbr.rel (%p723) target = $region40
        $region39: #{tpu_custom_call.1} parent=23 // pred_region
          %s726 = sand.u32 %s52, 1
          %s727 = scalar_lea.sflag [#allocation8], %s726
          %s728 = sand.u32 %s152, 1
          %s729 = smul.addr %s728, 8
          %s730 = scalar_lea.vmem [#allocation9], %s729
          %732 = vsyncadd %s727, 0
          %s733 = smul.addr %s59, 8
          %s734 = scalar_lea.hbm %s3, %s733
          %s736 = sshll.u32 %s734, 4
          %s737 = int_to_ptr.hbm [resolvable:$true] %s736
          %s738 = sshll.u32 %s730, 4
          %s739 = int_to_ptr.vmem [resolvable:$true] %s738
          %741 = dma.hbm_to_vmem [thread:$0]  %s737, 128, %s739, %s727
        $region40: #{tpu_custom_call.1} parent=23 // pred_fallthru
          _
        // Predicated region
        $region41: #{tpu_custom_call.1} parent=23 // pred_check
          %p742 = pneg %p188
        $region42: #{tpu_custom_call.1} parent=23 // pred_check_branch
          %744 = sbr.rel (%p742) target = $region44
        $region43: #{tpu_custom_call.1} parent=23 // pred_region
          %s745 = sand.u32 %s52, 1
          %s746 = scalar_lea.sflag [#allocation11], %s745
          %s747 = sand.u32 %s178, 1
          %s748 = smul.addr %s747, 192
          %s749 = scalar_lea.vmem [#allocation10], %s748
          %751 = vsyncadd %s746, 0
          %s752 = smul.addr %s60, 48
          %s753 = smul.addr %s752, 4
          %s754 = scalar_lea.hbm %s4, %s753
          %s755 = sshll.u32 %s754, 4
          %s756 = int_to_ptr.hbm [resolvable:$true] %s755
          %s757 = sshll.u32 %s749, 4
          %s758 = int_to_ptr.vmem [resolvable:$true] %s757
          %763 = dma.hbm_to_vmem [thread:$0]  %s756, 3072, %s758, %s746, 192, 192, 12
        $region44: #{tpu_custom_call.1} parent=23 // pred_fallthru
          _
        // Predicated region
        $region45: #{tpu_custom_call.1} parent=23 // pred_check
          %p764 = pneg %p214
        $region46: #{tpu_custom_call.1} parent=23 // pred_check_branch
          %766 = sbr.rel (%p764) target = $region48
        $region47: #{tpu_custom_call.1} parent=23 // pred_region
          %p767 = scmp.lt.s32.totalorder %s60, 1
          %s768 = scalar_select %p767, %s60, 1
          %s769 = smul.addr %s768, 3
          %s770 = scalar_lea.vmem %s5, %s769
        $region48: #{tpu_custom_call.1} parent=23 // pred_fallthru
          _
        // Predicated region
        $region49: #{tpu_custom_call.1} parent=23 // pred_check
          %p771 = pneg %p240
        $region50: #{tpu_custom_call.1} parent=23 // pred_check_branch
          %773 = sbr.rel (%p771) target = $region52
        $region51: #{tpu_custom_call.1} parent=23 // pred_region
          %s774 = sand.u32 %s52, 1
          %s775 = scalar_lea.sflag [#allocation11], %s774
          %s776 = sand.u32 %s230, 1
          %s777 = smul.addr %s776, 64
          %s778 = scalar_lea.vmem [#allocation12], %s777
          %780 = vsyncadd %s775, 0
          %s781 = smul.addr %s60, 16
          %s782 = smul.addr %s781, 4
          %s783 = scalar_lea.hbm %s6, %s782
          %s784 = sshll.u32 %s783, 4
          %s785 = int_to_ptr.hbm [resolvable:$true] %s784
          %s786 = sshll.u32 %s778, 4
          %s787 = int_to_ptr.vmem [resolvable:$true] %s786
          %792 = dma.hbm_to_vmem [thread:$0]  %s785, 1024, %s787, %s775, 64, 64, 4
        $region52: #{tpu_custom_call.1} parent=23 // pred_fallthru
          _
        // Predicated region
        $region53: #{tpu_custom_call.1} parent=23 // pred_check
          %p793 = pneg %p266
        $region54: #{tpu_custom_call.1} parent=23 // pred_check_branch
          %795 = sbr.rel (%p793) target = $region56
        $region55: #{tpu_custom_call.1} parent=23 // pred_region
          %s796 = sand.u32 %s52, 1
          %s797 = scalar_lea.sflag [#allocation14], %s796
          %s798 = sand.u32 %s256, 1
          %s799 = scalar_lea.vmem [#allocation13], %s798
          %801 = vsyncadd %s797, 0
          %s802 = scalar_lea.hbm %s7, %s60
          %s804 = sshll.u32 %s802, 4
          %s805 = int_to_ptr.hbm [resolvable:$true] %s804
          %s806 = sshll.u32 %s799, 4
          %s807 = int_to_ptr.vmem [resolvable:$true] %s806
          %809 = dma.hbm_to_vmem [thread:$0]  %s805, 16, %s807, %s797
        $region56: #{tpu_custom_call.1} parent=23 // pred_fallthru
          _
        // Predicated region
        $region57: #{tpu_custom_call.1} parent=23 // pred_check
          %p810 = pneg %p292
        $region58: #{tpu_custom_call.1} parent=23 // pred_check_branch
          %812 = sbr.rel (%p810) target = $region60
        $region59: #{tpu_custom_call.1} parent=23 // pred_region
          %s813 = sand.u32 %s52, 1
          %s814 = scalar_lea.sflag [#allocation14], %s813
          %s815 = sand.u32 %s282, 1
          %s816 = smul.addr %s815, 64
          %s817 = scalar_lea.vmem [#allocation15], %s816
          %819 = vsyncadd %s814, 0
          %s820 = smul.addr %s60, 16
          %s821 = smul.addr %s820, 4
          %s822 = scalar_lea.hbm %s8, %s821
          %s823 = sshll.u32 %s822, 4
          %s824 = int_to_ptr.hbm [resolvable:$true] %s823
          %s825 = sshll.u32 %s817, 4
          %s826 = int_to_ptr.vmem [resolvable:$true] %s825
          %831 = dma.hbm_to_vmem [thread:$0]  %s824, 1024, %s826, %s814, 64, 64, 4
        $region60: #{tpu_custom_call.1} parent=23 // pred_fallthru
          _
        // Predicated region
        $region61: #{tpu_custom_call.1} parent=23 // pred_check
          %p832 = pneg %p318
        $region62: #{tpu_custom_call.1} parent=23 // pred_check_branch
          %834 = sbr.rel (%p832) target = $region64
        $region63: #{tpu_custom_call.1} parent=23 // pred_region
          %s835 = sand.u32 %s52, 1
          %s836 = scalar_lea.sflag [#allocation17], %s835
          %s837 = sand.u32 %s308, 1
          %s838 = scalar_lea.vmem [#allocation16], %s837
          %840 = vsyncadd %s836, 0
          %s841 = scalar_lea.hbm %s9, %s60
          %s843 = sshll.u32 %s841, 4
          %s844 = int_to_ptr.hbm [resolvable:$true] %s843
          %s845 = sshll.u32 %s838, 4
          %s846 = int_to_ptr.vmem [resolvable:$true] %s845
          %848 = dma.hbm_to_vmem [thread:$0]  %s844, 16, %s846, %s836
        $region64: #{tpu_custom_call.1} parent=23 // pred_fallthru
          _
        // Predicated region
        $region65: #{tpu_custom_call.1} parent=23 // pred_check
          %p849 = pneg %p344
        $region66: #{tpu_custom_call.1} parent=23 // pred_check_branch
          %851 = sbr.rel (%p849) target = $region68
        $region67: #{tpu_custom_call.1} parent=23 // pred_region
          %s852 = sand.u32 %s52, 1
          %s853 = scalar_lea.sflag [#allocation17], %s852
          %s854 = sand.u32 %s334, 1
          %s855 = smul.addr %s854, 128
          %s856 = scalar_lea.vmem [#allocation18], %s855
          %858 = vsyncadd %s853, 0
          %s859 = smul.addr %s60, 32
          %s860 = smul.addr %s859, 4
          %s861 = scalar_lea.hbm %s10, %s860
          %s862 = sshll.u32 %s861, 4
          %s863 = int_to_ptr.hbm [resolvable:$true] %s862
          %s864 = sshll.u32 %s856, 4
          %s865 = int_to_ptr.vmem [resolvable:$true] %s864
          %870 = dma.hbm_to_vmem [thread:$0]  %s863, 2048, %s865, %s853, 128, 128, 8
        $region68: #{tpu_custom_call.1} parent=23 // pred_fallthru
          _
        // Predicated region
        $region69: #{tpu_custom_call.1} parent=23 // pred_check
          %p871 = pneg %p370
        $region70: #{tpu_custom_call.1} parent=23 // pred_check_branch
          %873 = sbr.rel (%p871) target = $region72
        $region71: #{tpu_custom_call.1} parent=23 // pred_region
          %p874 = scmp.lt.s32.totalorder %s60, 1
          %s875 = scalar_select %p874, %s60, 1
          %s876 = smul.addr %s875, 2
          %s877 = scalar_lea.vmem %s11, %s876
        $region72: #{tpu_custom_call.1} parent=23 // pred_fallthru
          _
        // Predicated region
        $region73: #{tpu_custom_call.1} parent=23 // pred_check
          %p878 = pneg %p396
        $region74: #{tpu_custom_call.1} parent=23 // pred_check_branch
          %880 = sbr.rel (%p878) target = $region76
        $region75: #{tpu_custom_call.1} parent=23 // pred_region
          %s881 = sand.u32 %s52, 1
          %s882 = scalar_lea.sflag [#allocation20], %s881
          %s883 = sand.u32 %s386, 1
          %s884 = smul.addr %s883, 64
          %s885 = scalar_lea.vmem [#allocation19], %s884
          %887 = vsyncadd %s882, 0
          %s888 = smul.addr %s60, 16
          %s889 = smul.addr %s888, 4
          %s890 = scalar_lea.hbm %s12, %s889
          %s891 = sshll.u32 %s890, 4
          %s892 = int_to_ptr.hbm [resolvable:$true] %s891
          %s893 = sshll.u32 %s885, 4
          %s894 = int_to_ptr.vmem [resolvable:$true] %s893
          %899 = dma.hbm_to_vmem [thread:$0]  %s892, 1024, %s894, %s882, 64, 64, 4
        $region76: #{tpu_custom_call.1} parent=23 // pred_fallthru
          _
        // Predicated region
        $region77: #{tpu_custom_call.1} parent=23 // pred_check
          %p900 = pneg %p422
        $region78: #{tpu_custom_call.1} parent=23 // pred_check_branch
          %902 = sbr.rel (%p900) target = $region80
        $region79: #{tpu_custom_call.1} parent=23 // pred_region
          %s903 = sand.u32 %s52, 1
          %s904 = scalar_lea.sflag [#allocation20], %s903
          %s905 = sand.u32 %s412, 1
          %s906 = scalar_lea.vmem [#allocation21], %s905
          %908 = vsyncadd %s904, 0
          %s909 = scalar_lea.hbm %s13, %s60
          %s911 = sshll.u32 %s909, 4
          %s912 = int_to_ptr.hbm [resolvable:$true] %s911
          %s913 = sshll.u32 %s906, 4
          %s914 = int_to_ptr.vmem [resolvable:$true] %s913
          %916 = dma.hbm_to_vmem [thread:$0]  %s912, 16, %s914, %s904
        $region80: #{tpu_custom_call.1} parent=23 // pred_fallthru
          _
        // Predicated region
        $region81: #{tpu_custom_call.1} parent=23 // pred_check
          %p917 = pneg %p448
        $region82: #{tpu_custom_call.1} parent=23 // pred_check_branch
          %919 = sbr.rel (%p917) target = $region84
        $region83: #{tpu_custom_call.1} parent=23 // pred_region
          %s920 = sand.u32 %s52, 1
          %s921 = scalar_lea.sflag [#allocation23], %s920
          %s922 = sand.u32 %s438, 1
          %s923 = smul.addr %s922, 128
          %s924 = scalar_lea.vmem [#allocation22], %s923
          %926 = vsyncadd %s921, 0
          %s927 = smul.addr %s60, 32
          %s928 = smul.addr %s927, 4
          %s929 = scalar_lea.hbm %s14, %s928
          %s930 = sshll.u32 %s929, 4
          %s931 = int_to_ptr.hbm [resolvable:$true] %s930
          %s932 = sshll.u32 %s924, 4
          %s933 = int_to_ptr.vmem [resolvable:$true] %s932
          %938 = dma.hbm_to_vmem [thread:$0]  %s931, 2048, %s933, %s921, 128, 128, 8
        $region84: #{tpu_custom_call.1} parent=23 // pred_fallthru
          _
        // Predicated region
        $region85: #{tpu_custom_call.1} parent=23 // pred_check
          %p939 = pneg %p474
        $region86: #{tpu_custom_call.1} parent=23 // pred_check_branch
          %941 = sbr.rel (%p939) target = $region88
        $region87: #{tpu_custom_call.1} parent=23 // pred_region
          %p942 = scmp.lt.s32.totalorder %s60, 1
          %s943 = scalar_select %p942, %s60, 1
          %s944 = smul.addr %s943, 2
          %s945 = scalar_lea.vmem %s15, %s944
        $region88: #{tpu_custom_call.1} parent=23 // pred_fallthru
          _
        // Predicated region
        $region89: #{tpu_custom_call.1} parent=23 // pred_check
          %p946 = pneg %p500
        $region90: #{tpu_custom_call.1} parent=23 // pred_check_branch
          %948 = sbr.rel (%p946) target = $region92
        $region91: #{tpu_custom_call.1} parent=23 // pred_region
          %s949 = sand.u32 %s52, 1
          %s950 = scalar_lea.sflag [#allocation23], %s949
          %s951 = sand.u32 %s490, 1
          %s952 = smul.addr %s951, 128
          %s953 = scalar_lea.vmem [#allocation24], %s952
          %955 = vsyncadd %s950, 0
          %s956 = smul.addr %s60, 32
          %s957 = smul.addr %s956, 4
          %s958 = scalar_lea.hbm %s16, %s957
          %s959 = sshll.u32 %s958, 4
          %s960 = int_to_ptr.hbm [resolvable:$true] %s959
          %s961 = sshll.u32 %s953, 4
          %s962 = int_to_ptr.vmem [resolvable:$true] %s961
          %967 = dma.hbm_to_vmem [thread:$0]  %s960, 2048, %s962, %s950, 64, 64, 4
        $region92: #{tpu_custom_call.1} parent=23 // pred_fallthru
          _
        // Predicated region
        $region93: #{tpu_custom_call.1} parent=23 // pred_check
          %p968 = pneg %p526
        $region94: #{tpu_custom_call.1} parent=23 // pred_check_branch
          %970 = sbr.rel (%p968) target = $region96
        $region95: #{tpu_custom_call.1} parent=23 // pred_region
          %p971 = scmp.lt.s32.totalorder %s60, 1
          %s972 = scalar_select %p971, %s60, 1
          %s973 = scalar_lea.vmem %s17, %s972
        $region96: #{tpu_custom_call.1} parent=23 // pred_fallthru
          _
        // Predicated region
        $region97: #{tpu_custom_call.1} parent=23 // pred_check
          %p974 = pneg %p552
        $region98: #{tpu_custom_call.1} parent=23 // pred_check_branch
          %976 = sbr.rel (%p974) target = $region100
        $region99: #{tpu_custom_call.1} parent=23 // pred_region
          %p977 = scmp.lt.s32.totalorder %s60, 1
          %s978 = scalar_select %p977, %s60, 1
          %s979 = smul.addr %s978, 4
          %s980 = scalar_lea.vmem %s18, %s979
        $region100: #{tpu_custom_call.1} parent=23 // pred_fallthru
          _
        // Predicated region
        $region101: #{tpu_custom_call.1} parent=23 // pred_check
          %p981 = pneg %p578
        $region102: #{tpu_custom_call.1} parent=23 // pred_check_branch
          %983 = sbr.rel (%p981) target = $region104
        $region103: #{tpu_custom_call.1} parent=23 // pred_region
          %p984 = scmp.lt.s32.totalorder %s60, 1
          %s985 = scalar_select %p984, %s60, 1
          %s986 = smul.addr %s985, 4
          %s987 = scalar_lea.vmem %s19, %s986
        $region104: #{tpu_custom_call.1} parent=23 // pred_fallthru
          _
      $region24: #{tpu_custom_call.1} parent=5 // pred_fallthru
        _
      %p988 = scmp.le.s32.totalorder 1, %s52
      %p989 = scmp.lt.s32.totalorder %s52, 5
      %p990 = pnand %p988, %p989
      %p991 = pneg %p990
      // Predicated region
      $region105: #{tpu_custom_call.1} parent=5 // pred_check
        _
      $region106: #{tpu_custom_call.1} parent=5 // pred_check_branch
        %993 = sbr.rel (%p990) target = $region108
      $region107: #{tpu_custom_call.1} parent=5 // pred_region
        %s994 = ssub.s32 %s52, 1
        %s995 = sand.u32 %s103, 1
        %s996 = scalar_lea.sflag [#allocation5], %s995
        %s997 = sand.u32 %s103, 1
        %s998 = smul.addr %s997, 16
        %s999 = scalar_lea.vmem [#allocation4], %s998
        // Predicated region
        $region109: #{tpu_custom_call.1} parent=107 // pred_check
          %p1000 = pneg %p116
        $region110: #{tpu_custom_call.1} parent=107 // pred_check_branch
          %1002 = sbr.rel (%p1000) target = $region112
        $region111: #{tpu_custom_call.1} parent=107 // pred_region
          %1004 = dma.done %s996, 256
        $region112: #{tpu_custom_call.1} parent=107 // pred_fallthru
          _
        %s1005 = sand.u32 %s57, 1
        %s1006 = scalar_lea.sflag [#allocation8], %s1005
        %s1007 = sand.u32 %s129, 1
        %s1008 = scalar_lea.vmem [#allocation7], %s1007
        // Predicated region
        $region113: #{tpu_custom_call.1} parent=107 // pred_check
          %p1009 = pneg %p142
        $region114: #{tpu_custom_call.1} parent=107 // pred_check_branch
          %1011 = sbr.rel (%p1009) target = $region116
        $region115: #{tpu_custom_call.1} parent=107 // pred_region
          %1013 = dma.done %s1006, 16
        $region116: #{tpu_custom_call.1} parent=107 // pred_fallthru
          _
        %s1014 = sand.u32 %s57, 1
        %s1015 = scalar_lea.sflag [#allocation8], %s1014
        %s1016 = sand.u32 %s155, 1
        %s1017 = smul.addr %s1016, 8
        %s1018 = scalar_lea.vmem [#allocation9], %s1017
        // Predicated region
        $region117: #{tpu_custom_call.1} parent=107 // pred_check
          %p1019 = pneg %p168
        $region118: #{tpu_custom_call.1} parent=107 // pred_check_branch
          %1021 = sbr.rel (%p1019) target = $region120
        $region119: #{tpu_custom_call.1} parent=107 // pred_region
          %1023 = dma.done %s1015, 128
        $region120: #{tpu_custom_call.1} parent=107 // pred_fallthru
          _
        %s1024 = sand.u32 %s57, 1
        %s1025 = scalar_lea.sflag [#allocation11], %s1024
        %s1026 = sand.u32 %s181, 1
        %s1027 = smul.addr %s1026, 192
        %s1028 = scalar_lea.vmem [#allocation10], %s1027
        // Predicated region
        $region121: #{tpu_custom_call.1} parent=107 // pred_check
          %p1029 = pneg %p194
        $region122: #{tpu_custom_call.1} parent=107 // pred_check_branch
          %1031 = sbr.rel (%p1029) target = $region124
        $region123: #{tpu_custom_call.1} parent=107 // pred_region
          %1033 = dma.done %s1025, 3072
        $region124: #{tpu_custom_call.1} parent=107 // pred_fallthru
          _
        %s1034 = sand.u32 %s57, 1
        %s1035 = scalar_lea.sflag [#allocation11], %s1034
        %s1036 = sand.u32 %s233, 1
        %s1037 = smul.addr %s1036, 64
        %s1038 = scalar_lea.vmem [#allocation12], %s1037
        // Predicated region
        $region125: #{tpu_custom_call.1} parent=107 // pred_check
          %p1039 = pneg %p246
        $region126: #{tpu_custom_call.1} parent=107 // pred_check_branch
          %1041 = sbr.rel (%p1039) target = $region128
        $region127: #{tpu_custom_call.1} parent=107 // pred_region
          %1043 = dma.done %s1035, 1024
        $region128: #{tpu_custom_call.1} parent=107 // pred_fallthru
          _
        %s1044 = sand.u32 %s57, 1
        %s1045 = scalar_lea.sflag [#allocation14], %s1044
        %s1046 = sand.u32 %s259, 1
        %s1047 = scalar_lea.vmem [#allocation13], %s1046
        // Predicated region
        $region129: #{tpu_custom_call.1} parent=107 // pred_check
          %p1048 = pneg %p272
        $region130: #{tpu_custom_call.1} parent=107 // pred_check_branch
          %1050 = sbr.rel (%p1048) target = $region132
        $region131: #{tpu_custom_call.1} parent=107 // pred_region
          %1052 = dma.done %s1045, 16
        $region132: #{tpu_custom_call.1} parent=107 // pred_fallthru
          _
        %s1053 = sand.u32 %s57, 1
        %s1054 = scalar_lea.sflag [#allocation14], %s1053
        %s1055 = sand.u32 %s285, 1
        %s1056 = smul.addr %s1055, 64
        %s1057 = scalar_lea.vmem [#allocation15], %s1056
        // Predicated region
        $region133: #{tpu_custom_call.1} parent=107 // pred_check
          %p1058 = pneg %p298
        $region134: #{tpu_custom_call.1} parent=107 // pred_check_branch
          %1060 = sbr.rel (%p1058) target = $region136
        $region135: #{tpu_custom_call.1} parent=107 // pred_region
          %1062 = dma.done %s1054, 1024
        $region136: #{tpu_custom_call.1} parent=107 // pred_fallthru
          _
        %s1063 = sand.u32 %s57, 1
        %s1064 = scalar_lea.sflag [#allocation17], %s1063
        %s1065 = sand.u32 %s311, 1
        %s1066 = scalar_lea.vmem [#allocation16], %s1065
        // Predicated region
        $region137: #{tpu_custom_call.1} parent=107 // pred_check
          %p1067 = pneg %p324
        $region138: #{tpu_custom_call.1} parent=107 // pred_check_branch
          %1069 = sbr.rel (%p1067) target = $region140
        $region139: #{tpu_custom_call.1} parent=107 // pred_region
          %1071 = dma.done %s1064, 16
        $region140: #{tpu_custom_call.1} parent=107 // pred_fallthru
          _
        %s1072 = sand.u32 %s57, 1
        %s1073 = scalar_lea.sflag [#allocation17], %s1072
        %s1074 = sand.u32 %s337, 1
        %s1075 = smul.addr %s1074, 128
        %s1076 = scalar_lea.vmem [#allocation18], %s1075
        // Predicated region
        $region141: #{tpu_custom_call.1} parent=107 // pred_check
          %p1077 = pneg %p350
        $region142: #{tpu_custom_call.1} parent=107 // pred_check_branch
          %1079 = sbr.rel (%p1077) target = $region144
        $region143: #{tpu_custom_call.1} parent=107 // pred_region
          %1081 = dma.done %s1073, 2048
        $region144: #{tpu_custom_call.1} parent=107 // pred_fallthru
          _
        %s1082 = sand.u32 %s57, 1
        %s1083 = scalar_lea.sflag [#allocation20], %s1082
        %s1084 = sand.u32 %s389, 1
        %s1085 = smul.addr %s1084, 64
        %s1086 = scalar_lea.vmem [#allocation19], %s1085
        // Predicated region
        $region145: #{tpu_custom_call.1} parent=107 // pred_check
          %p1087 = pneg %p402
        $region146: #{tpu_custom_call.1} parent=107 // pred_check_branch
          %1089 = sbr.rel (%p1087) target = $region148
        $region147: #{tpu_custom_call.1} parent=107 // pred_region
          %1091 = dma.done %s1083, 1024
        $region148: #{tpu_custom_call.1} parent=107 // pred_fallthru
          _
        %s1092 = sand.u32 %s57, 1
        %s1093 = scalar_lea.sflag [#allocation20], %s1092
        %s1094 = sand.u32 %s415, 1
        %s1095 = scalar_lea.vmem [#allocation21], %s1094
        // Predicated region
        $region149: #{tpu_custom_call.1} parent=107 // pred_check
          %p1096 = pneg %p428
        $region150: #{tpu_custom_call.1} parent=107 // pred_check_branch
          %1098 = sbr.rel (%p1096) target = $region152
        $region151: #{tpu_custom_call.1} parent=107 // pred_region
          %1100 = dma.done %s1093, 16
        $region152: #{tpu_custom_call.1} parent=107 // pred_fallthru
          _
        %s1101 = sand.u32 %s57, 1
        %s1102 = scalar_lea.sflag [#allocation23], %s1101
        %s1103 = sand.u32 %s441, 1
        %s1104 = smul.addr %s1103, 128
        %s1105 = scalar_lea.vmem [#allocation22], %s1104
        // Predicated region
        $region153: #{tpu_custom_call.1} parent=107 // pred_check
          %p1106 = pneg %p454
        $region154: #{tpu_custom_call.1} parent=107 // pred_check_branch
          %1108 = sbr.rel (%p1106) target = $region156
        $region155: #{tpu_custom_call.1} parent=107 // pred_region
          %1110 = dma.done %s1102, 2048
        $region156: #{tpu_custom_call.1} parent=107 // pred_fallthru
          _
        %s1111 = sand.u32 %s57, 1
        %s1112 = scalar_lea.sflag [#allocation23], %s1111
        %s1113 = sand.u32 %s493, 1
        %s1114 = smul.addr %s1113, 128
        %s1115 = scalar_lea.vmem [#allocation24], %s1114
        // Predicated region
        $region157: #{tpu_custom_call.1} parent=107 // pred_check
          %p1116 = pneg %p506
        $region158: #{tpu_custom_call.1} parent=107 // pred_check_branch
          %1118 = sbr.rel (%p1116) target = $region160
        $region159: #{tpu_custom_call.1} parent=107 // pred_region
          %1120 = dma.done %s1112, 2048
        $region160: #{tpu_custom_call.1} parent=107 // pred_fallthru
          _
        %p1121 = scmp.lt.s32.totalorder %s61, 1
        %s1122 = scalar_select %p1121, %s61, 1
        %s1123 = smul.addr %s1122, 8
        %s1124 = scalar_lea.vmem %s0, %s1123
        %p1125 = pneg %p90
        %p1126 = pneg %p87
        %s1127 = sand.u32 %s103, 1
        %s1128 = scalar_lea.sflag [#allocation5], %s1127
        %s1129 = sand.u32 %s103, 1
        %s1130 = smul.addr %s1129, 16
        %s1131 = scalar_lea.vmem [#allocation4], %s1130
        %p1132 = pneg %p116
        %p1133 = pneg %p113
        %s1134 = sand.u32 %s57, 1
        %s1135 = scalar_lea.sflag [#allocation8], %s1134
        %s1136 = sand.u32 %s129, 1
        %s1137 = scalar_lea.vmem [#allocation7], %s1136
        %p1138 = pneg %p142
        %p1139 = pneg %p139
        %s1140 = sand.u32 %s57, 1
        %s1141 = scalar_lea.sflag [#allocation8], %s1140
        %s1142 = sand.u32 %s155, 1
        %s1143 = smul.addr %s1142, 8
        %s1144 = scalar_lea.vmem [#allocation9], %s1143
        %p1145 = pneg %p168
        %p1146 = pneg %p165
        %s1147 = sand.u32 %s57, 1
        %s1148 = scalar_lea.sflag [#allocation11], %s1147
        %s1149 = sand.u32 %s181, 1
        %s1150 = smul.addr %s1149, 192
        %s1151 = scalar_lea.vmem [#allocation10], %s1150
        %p1152 = pneg %p194
        %p1153 = pneg %p191
        %p1154 = scmp.lt.s32.totalorder %s62, 1
        %s1155 = scalar_select %p1154, %s62, 1
        %s1156 = smul.addr %s1155, 3
        %s1157 = scalar_lea.vmem %s5, %s1156
        %p1158 = pneg %p220
        %p1159 = pneg %p217
        %s1160 = sand.u32 %s57, 1
        %s1161 = scalar_lea.sflag [#allocation11], %s1160
        %s1162 = sand.u32 %s233, 1
        %s1163 = smul.addr %s1162, 64
        %s1164 = scalar_lea.vmem [#allocation12], %s1163
        %p1165 = pneg %p246
        %p1166 = pneg %p243
        %s1167 = sand.u32 %s57, 1
        %s1168 = scalar_lea.sflag [#allocation14], %s1167
        %s1169 = sand.u32 %s259, 1
        %s1170 = scalar_lea.vmem [#allocation13], %s1169
        %p1171 = pneg %p272
        %p1172 = pneg %p269
        %s1173 = sand.u32 %s57, 1
        %s1174 = scalar_lea.sflag [#allocation14], %s1173
        %s1175 = sand.u32 %s285, 1
        %s1176 = smul.addr %s1175, 64
        %s1177 = scalar_lea.vmem [#allocation15], %s1176
        %p1178 = pneg %p298
        %p1179 = pneg %p295
        %s1180 = sand.u32 %s57, 1
        %s1181 = scalar_lea.sflag [#allocation17], %s1180
        %s1182 = sand.u32 %s311, 1
        %s1183 = scalar_lea.vmem [#allocation16], %s1182
        %p1184 = pneg %p324
        %p1185 = pneg %p321
        %s1186 = sand.u32 %s57, 1
        %s1187 = scalar_lea.sflag [#allocation17], %s1186
        %s1188 = sand.u32 %s337, 1
        %s1189 = smul.addr %s1188, 128
        %s1190 = scalar_lea.vmem [#allocation18], %s1189
        %p1191 = pneg %p350
        %p1192 = pneg %p347
        %p1193 = scmp.lt.s32.totalorder %s62, 1
        %s1194 = scalar_select %p1193, %s62, 1
        %s1195 = smul.addr %s1194, 2
        %s1196 = scalar_lea.vmem %s11, %s1195
        %p1197 = pneg %p376
        %p1198 = pneg %p373
        %s1199 = sand.u32 %s57, 1
        %s1200 = scalar_lea.sflag [#allocation20], %s1199
        %s1201 = sand.u32 %s389, 1
        %s1202 = smul.addr %s1201, 64
        %s1203 = scalar_lea.vmem [#allocation19], %s1202
        %p1204 = pneg %p402
        %p1205 = pneg %p399
        %s1206 = sand.u32 %s57, 1
        %s1207 = scalar_lea.sflag [#allocation20], %s1206
        %s1208 = sand.u32 %s415, 1
        %s1209 = scalar_lea.vmem [#allocation21], %s1208
        %p1210 = pneg %p428
        %p1211 = pneg %p425
        %s1212 = sand.u32 %s57, 1
        %s1213 = scalar_lea.sflag [#allocation23], %s1212
        %s1214 = sand.u32 %s441, 1
        %s1215 = smul.addr %s1214, 128
        %s1216 = scalar_lea.vmem [#allocation22], %s1215
        %p1217 = pneg %p454
        %p1218 = pneg %p451
        %p1219 = scmp.lt.s32.totalorder %s62, 1
        %s1220 = scalar_select %p1219, %s62, 1
        %s1221 = smul.addr %s1220, 2
        %s1222 = scalar_lea.vmem %s15, %s1221
        %p1223 = pneg %p480
        %p1224 = pneg %p477
        %s1225 = sand.u32 %s57, 1
        %s1226 = scalar_lea.sflag [#allocation23], %s1225
        %s1227 = sand.u32 %s493, 1
        %s1228 = smul.addr %s1227, 128
        %s1229 = scalar_lea.vmem [#allocation24], %s1228
        %p1230 = pneg %p506
        %p1231 = pneg %p503
        %p1232 = scmp.lt.s32.totalorder %s62, 1
        %s1233 = scalar_select %p1232, %s62, 1
        %s1234 = scalar_lea.vmem %s17, %s1233
        %p1235 = pneg %p532
        %p1236 = pneg %p529
        %p1237 = scmp.lt.s32.totalorder %s62, 1
        %s1238 = scalar_select %p1237, %s62, 1
        %s1239 = smul.addr %s1238, 4
        %s1240 = scalar_lea.vmem %s18, %s1239
        %p1241 = pneg %p558
        %p1242 = pneg %p555
        %p1243 = scmp.lt.s32.totalorder %s62, 1
        %s1244 = scalar_select %p1243, %s62, 1
        %s1245 = smul.addr %s1244, 4
        %s1246 = scalar_lea.vmem %s19, %s1245
        %p1247 = pneg %p584
        %p1248 = pneg %p581
        %p1249 = pneg %p605
        %p1250 = pneg %p602
        %p1251 = pneg %p626
        %p1252 = pneg %p623
        %p1253 = pneg %p652
        %p1254 = pneg %p649
        %s1255 = sand.u32 %s639, 1
        %s1256 = scalar_lea.sflag [#allocation6], %s1255
        %s1257 = sand.u32 %s639, 1
        %s1258 = smul.addr %s1257, 8
        %s1259 = scalar_lea.vmem [#allocation25], %s1258
        %p1260 = scmp.lt.s32.totalorder %s61, 1
        %s1261 = scalar_select %p1260, %s61, 1
        %s1262 = smul.addr %s1261, 8
        %s1263 = scalar_lea.vmem %s0, %s1262
        %p1264 = scmp.lt.s32.totalorder %s62, 1
        %s1265 = scalar_select %p1264, %s62, 1
        %s1266 = smul.addr %s1265, 3
        %s1267 = scalar_lea.vmem %s5, %s1266
        %p1268 = scmp.lt.s32.totalorder %s62, 1
        %s1269 = scalar_select %p1268, %s62, 1
        %s1270 = smul.addr %s1269, 2
        %s1271 = scalar_lea.vmem %s11, %s1270
        %p1272 = scmp.lt.s32.totalorder %s62, 1
        %s1273 = scalar_select %p1272, %s62, 1
        %s1274 = smul.addr %s1273, 2
        %s1275 = scalar_lea.vmem %s15, %s1274
        %p1276 = scmp.lt.s32.totalorder %s62, 1
        %s1277 = scalar_select %p1276, %s62, 1
        %s1278 = scalar_lea.vmem %s17, %s1277
        %p1279 = scmp.lt.s32.totalorder %s62, 1
        %s1280 = scalar_select %p1279, %s62, 1
        %s1281 = smul.addr %s1280, 4
        %s1282 = scalar_lea.vmem %s18, %s1281
        %p1283 = scmp.lt.s32.totalorder %s62, 1
        %s1284 = scalar_select %p1283, %s62, 1
        %s1285 = smul.addr %s1284, 4
        %s1286 = scalar_lea.vmem %s19, %s1285
        %p1288 = scmp.eq.s32.totalorder %s62, 0
        // Predicated region
        $region161: #{tpu_custom_call.1} parent=107 // pred_check
          %p1289 = pneg %p1288
        $region162: #{tpu_custom_call.1} parent=107 // pred_check_branch
          %1291 = sbr.rel (%p1289) target = $region164
        $region163: #{tpu_custom_call.1} parent=107 // pred_region
          %v1292 = vld [vmem:[%s1263] sm:$0xff]
          %1293 = vst [vmem:[#allocation2] sm:$0xff] %v1292
        $region164: #{tpu_custom_call.1} parent=107 // pred_fallthru
          _
        %v1294 = vld [vmem:[%s1018] sm:$0xff]
        %vm1295 = vcmp.eq.f32.partialorder %v1294, 0.0
        %v1296 = vsel %vm1295, -1e+09, 0.0
        %v1297 = vld [vmem:[%s1008] sm:$0x1]
        %vm1298 = vcmp.eq.f32.partialorder %v1297, 0.0
        %v1299 = vsel %vm1298, -1e+09, 0.0
        %v1300 = vld [vmem:[%s999] sm:$0xff]
        %v1301 = vld [vmem:[%s999 + $0x8] sm:$0xff]
        %v1302 = vld [vmem:[%s1282] sm:$0x7]
        %v1303 = vld [vmem:[%s1286] sm:$0x7]
        %v1304 = vld [vmem:[#allocation2] sm:$0xff]
        %1305 = vadd.xlane.f32.xlu0 %v1304
        %v1306 = vpop.xlane.xlu0 %1305
        %v1307 = vrcp.pop 128.0
        %v1308 = vmul.f32 128.0, %v1307
        %v1309 = vsub.f32 1.0, %v1308
        %v1310 = vmul.f32 %v1307, %v1309
        %v1311 = vadd.f32 %v1307, %v1310
        %vm1312 = vweird.f32 %v1307
        %v1313 = vsel %vm1312, %v1307, %v1311
        %v1314 = vmul.f32 %v1306, %v1313
        %v1315 = vsub.f32 %v1304, %v1314
        %v1316 = vmul.f32 %v1315, %v1315
        %1317 = vadd.xlane.f32.xlu0 %v1316
        %v1318 = vpop.xlane.xlu0 %1317
        %v1319 = vmul.f32 %v1318, 0.007874016
        %v1320 = vperm.slane %v1302, 0
        %v1321 = vmul.f32 %v1320, %v1315
        %v1322 = vadd.f32 %v1319, 1e-06
        %v1323 = vrsqrt.pop %v1322
        %v1324 = vmul.f32 %v1323, %v1322
        %v1325 = vmul.f32 %v1324, %v1323
        %v1326 = vmul.f32 0.5, %v1325
        %v1327 = vsub.f32 1.5, %v1326
        %v1328 = vmul.f32 %v1323, %v1327
        %vm1329 = vweird.f32 %v1322
        %vm1330 = vweird.f32 %v1323
        %vm1331 = vmor %vm1329, %vm1330
        %v1332 = vsel %vm1331, %v1323, %v1328
        %v1333 = vmul.f32 %v1321, %v1332
        %v1334 = vperm.slane %v1303, 0
        %v1335 = vadd.f32 %v1333, %v1334
        %v1336 = vld [vmem:[%s1028] sm:$0xff]
        %v1337 = vld [vmem:[%s1028 + $0x8] sm:$0xf]
        %v1338 = vld [vmem:[%s1028 + $0xc] sm:$0xff]
        %v1339 = vld [vmem:[%s1028 + $0x14] sm:$0xf]
        %v1340 = vld [vmem:[%s1028 + $0x18] sm:$0xff]
        %v1341 = vld [vmem:[%s1028 + $0x20] sm:$0xf]
        %v1342 = vld [vmem:[%s1028 + $0x24] sm:$0xff]
        %v1343 = vld [vmem:[%s1028 + $0x2c] sm:$0xf]
        %v1344 = vld [vmem:[%s1028 + $0x30] sm:$0xff]
        %v1345 = vld [vmem:[%s1028 + $0x38] sm:$0xf]
        %v1346 = vld [vmem:[%s1028 + $0x3c] sm:$0xff]
        %v1347 = vld [vmem:[%s1028 + $0x44] sm:$0xf]
        %v1348 = vld [vmem:[%s1028 + $0x48] sm:$0xff]
        %v1349 = vld [vmem:[%s1028 + $0x50] sm:$0xf]
        %v1350 = vld [vmem:[%s1028 + $0x54] sm:$0xff]
        %v1351 = vld [vmem:[%s1028 + $0x5c] sm:$0xf]
        %v1352 = vld [vmem:[%s1028 + $0x60] sm:$0xff]
        %v1353 = vld [vmem:[%s1028 + $0x68] sm:$0xf]
        %v1354 = vld [vmem:[%s1028 + $0x6c] sm:$0xff]
        %v1355 = vld [vmem:[%s1028 + $0x74] sm:$0xf]
        %v1356 = vld [vmem:[%s1028 + $0x78] sm:$0xff]
        %v1357 = vld [vmem:[%s1028 + $0x80] sm:$0xf]
        %v1358 = vld [vmem:[%s1028 + $0x84] sm:$0xff]
        %v1359 = vld [vmem:[%s1028 + $0x8c] sm:$0xf]
        %v1360 = vld [vmem:[%s1028 + $0x90] sm:$0xff]
        %v1361 = vld [vmem:[%s1028 + $0x98] sm:$0xf]
        %v1362 = vld [vmem:[%s1028 + $0x9c] sm:$0xff]
        %v1363 = vld [vmem:[%s1028 + $0xa4] sm:$0xf]
        %v1364 = vld [vmem:[%s1028 + $0xa8] sm:$0xff]
        %v1365 = vld [vmem:[%s1028 + $0xb0] sm:$0xf]
        %v1366 = vld [vmem:[%s1028 + $0xb4] sm:$0xff]
        %v1367 = vld [vmem:[%s1028 + $0xbc] sm:$0xf]
        %v1368 = vld [vmem:[%s1267] sm:$0x7]
        %v1369 = vpack.c.bf16 %v1335, %v1335
        %v1371 = vperm.slane %v1368, 0
        %v1372 = vperm.slane %v1368, 1
        %v1373 = vperm.slane %v1368, 2
        %v1409 = vunpack.c.l.b16 %v1336
        %v1410 = vunpack.c.h.b16 %v1336
        %v1411 = vunpack.c.l.b16 %v1337
        %v1412 = vunpack.c.l.b16 %v1338
        %v1413 = vunpack.c.h.b16 %v1338
        %v1414 = vunpack.c.l.b16 %v1339
        %v1415 = vunpack.c.l.b16 %v1340
        %v1416 = vunpack.c.h.b16 %v1340
        %v1417 = vunpack.c.l.b16 %v1341
        %v1418 = vunpack.c.l.b16 %v1342
        %v1419 = vunpack.c.h.b16 %v1342
        %v1420 = vunpack.c.l.b16 %v1343
        %v1421 = vunpack.c.l.b16 %v1344
        %v1422 = vunpack.c.h.b16 %v1344
        %v1423 = vunpack.c.l.b16 %v1345
        %v1424 = vunpack.c.l.b16 %v1346
        %v1425 = vunpack.c.h.b16 %v1346
        %v1426 = vunpack.c.l.b16 %v1347
        %v1427 = vunpack.c.l.b16 %v1348
        %v1428 = vunpack.c.h.b16 %v1348
        %v1429 = vunpack.c.l.b16 %v1349
        %v1430 = vunpack.c.l.b16 %v1350
        %v1431 = vunpack.c.h.b16 %v1350
        %v1432 = vunpack.c.l.b16 %v1351
        %v1433 = vunpack.c.l.b16 %v1352
        %v1434 = vunpack.c.h.b16 %v1352
        %v1435 = vunpack.c.l.b16 %v1353
        %v1436 = vunpack.c.l.b16 %v1354
        %v1437 = vunpack.c.h.b16 %v1354
        %v1438 = vunpack.c.l.b16 %v1355
        %v1439 = vunpack.c.l.b16 %v1356
        %v1440 = vunpack.c.h.b16 %v1356
        %v1441 = vunpack.c.l.b16 %v1357
        %v1442 = vunpack.c.l.b16 %v1358
        %v1443 = vunpack.c.h.b16 %v1358
        %v1444 = vunpack.c.l.b16 %v1359
        %v1445 = vunpack.c.l.b16 %v1360
        %v1446 = vunpack.c.h.b16 %v1360
        %v1447 = vunpack.c.l.b16 %v1361
        %v1448 = vunpack.c.l.b16 %v1362
        %v1449 = vunpack.c.h.b16 %v1362
        %v1450 = vunpack.c.l.b16 %v1363
        %v1451 = vunpack.c.l.b16 %v1364
        %v1452 = vunpack.c.h.b16 %v1364
        %v1453 = vunpack.c.l.b16 %v1365
        %v1454 = vunpack.c.l.b16 %v1366
        %v1455 = vunpack.c.h.b16 %v1366
        %v1456 = vunpack.c.l.b16 %v1367
        %v1457 = vpack.c.b16 %v1412, %v1409
        %v1458 = vpack.c.b16 %v1413, %v1410
        %v1459 = vpack.c.b16 %v1414, %v1411
        %v1460 = vpack.c.b16 %v1418, %v1415
        %v1461 = vpack.c.b16 %v1419, %v1416
        %v1462 = vpack.c.b16 %v1420, %v1417
        %v1463 = vpack.c.b16 %v1424, %v1421
        %v1464 = vpack.c.b16 %v1425, %v1422
        %v1465 = vpack.c.b16 %v1426, %v1423
        %v1466 = vpack.c.b16 %v1430, %v1427
        %v1467 = vpack.c.b16 %v1431, %v1428
        %v1468 = vpack.c.b16 %v1432, %v1429
        %v1469 = vpack.c.b16 %v1436, %v1433
        %v1470 = vpack.c.b16 %v1437, %v1434
        %v1471 = vpack.c.b16 %v1438, %v1435
        %v1472 = vpack.c.b16 %v1442, %v1439
        %v1473 = vpack.c.b16 %v1443, %v1440
        %v1474 = vpack.c.b16 %v1444, %v1441
        %v1475 = vpack.c.b16 %v1448, %v1445
        %v1476 = vpack.c.b16 %v1449, %v1446
        %v1477 = vpack.c.b16 %v1450, %v1447
        %v1478 = vpack.c.b16 %v1454, %v1451
        %v1479 = vpack.c.b16 %v1455, %v1452
        %v1480 = vpack.c.b16 %v1456, %v1453
        %1505 = vmatpush.bf16.msra.mxu0 %v1478
        %1506 = vmatpush.bf16.msra.mxu0 %v1475
        %1507 = vmatpush.bf16.msra.mxu0 %v1472
        %1508 = vmatpush.bf16.msra.mxu0 %v1469
        %1509 = vmatpush.bf16.msra.mxu0 %v1466
        %1510 = vmatpush.bf16.msra.mxu0 %v1463
        %1511 = vmatpush.bf16.msra.mxu0 %v1460
        %1512 = vmatpush.bf16.msra.mxu0 %v1457
        %1513 = vmatmul.bf16.gmra.mxu0 %v1369
        %v1514 = vpop.f32.mrf.mxu0
        %v1515 = vadd.f32 %v1371, %v1514
        %v1516 = vpop.f32.mrf.mxu0
        %1517 = vdwg.mxu0
        %1518 = vmatpush.bf16.msra.mxu0 %v1479
        %1519 = vmatpush.bf16.msra.mxu0 %v1476
        %1520 = vmatpush.bf16.msra.mxu0 %v1473
        %1521 = vmatpush.bf16.msra.mxu0 %v1470
        %1522 = vmatpush.bf16.msra.mxu0 %v1467
        %1523 = vmatpush.bf16.msra.mxu0 %v1464
        %1524 = vmatpush.bf16.msra.mxu0 %v1461
        %1525 = vmatpush.bf16.msra.mxu0 %v1458
        %1526 = vmatmul.bf16.gmra.mxu0 %v1369
        %v1527 = vpop.f32.mrf.mxu0
        %v1528 = vadd.f32 %v1372, %v1527
        %v1529 = vpop.f32.mrf.mxu0
        %1530 = vdwg.mxu0
        %1531 = vmatpush.bf16.msra.mxu0 %v1480
        %1532 = vmatpush.bf16.msra.mxu0 %v1477
        %1533 = vmatpush.bf16.msra.mxu0 %v1474
        %1534 = vmatpush.bf16.msra.mxu0 %v1471
        %1535 = vmatpush.bf16.msra.mxu0 %v1468
        %1536 = vmatpush.bf16.msra.mxu0 %v1465
        %1537 = vmatpush.bf16.msra.mxu0 %v1462
        %1538 = vmatpush.bf16.msra.mxu0 %v1459
        %1539 = vmatmul.bf16.gmra.mxu0 %v1369
        %v1540 = vpop.f32.mrf.mxu0
        %v1541 = vadd.f32 %v1373, %v1540
        %v1542 = vpop.f32.mrf.mxu0
        %1543 = vdwg.mxu0
        %v1544 = vmul.f32 %v1515, 0.17677669
        %v1545 = vld [vmem:[%s1038] sm:$0xf]
        %v1546 = vld [vmem:[%s1038 + $0x4] sm:$0xf]
        %v1547 = vld [vmem:[%s1038 + $0x8] sm:$0xf]
        %v1548 = vld [vmem:[%s1038 + $0xc] sm:$0xf]
        %v1549 = vld [vmem:[%s1038 + $0x10] sm:$0xf]
        %v1550 = vld [vmem:[%s1038 + $0x14] sm:$0xf]
        %v1551 = vld [vmem:[%s1038 + $0x18] sm:$0xf]
        %v1552 = vld [vmem:[%s1038 + $0x1c] sm:$0xf]
        %v1553 = vld [vmem:[%s1038 + $0x20] sm:$0xf]
        %v1554 = vld [vmem:[%s1038 + $0x24] sm:$0xf]
        %v1555 = vld [vmem:[%s1038 + $0x28] sm:$0xf]
        %v1556 = vld [vmem:[%s1038 + $0x2c] sm:$0xf]
        %v1557 = vld [vmem:[%s1038 + $0x30] sm:$0xf]
        %v1558 = vld [vmem:[%s1038 + $0x34] sm:$0xf]
        %v1559 = vld [vmem:[%s1038 + $0x38] sm:$0xf]
        %v1560 = vld [vmem:[%s1038 + $0x3c] sm:$0xf]
        %v1561 = vld [vmem:[%s1047] sm:$0x1]
        %v1562 = vpack.c.bf16 %v1544, %v1544
        %v1563 = vpack.c.bf16 %v1528, %v1528
        %v1564 = vpack.c.bf16 %v1541, %v1541
        %vm1565 = vcmask 261120
        %v1567 = vsel %vm1565, %v1562, 0
        %v1570 = vsel %vm1565, %v1563, 0
        %1572 = vmatpush.bf16.xpose.msra.mxu0 0
        %1573 = vmatpush.bf16.xpose.msra.mxu0 0
        %1574 = vmatpush.bf16.xpose.msra.mxu0 0
        %1575 = vmatpush.bf16.xpose.msra.mxu0 0
        %1576 = vmatpush.bf16.xpose.msra.mxu0 0
        %1577 = vmatpush.bf16.xpose.msra.mxu0 0
        %1578 = vmatpush.bf16.xpose.msra.mxu0 0
        %1579 = vmatpush.bf16.xpose.msra.mxu0 %v1570
        %1580 = vmatmul.bf16.gmra.mxu0 %v1567
        %v1581 = vpop.f32.mrf.mxu0
        %v1582 = vadd.f32 %v1296, %v1581
        %v1583 = vpop.f32.mrf.mxu0
        %1584 = vdwg.mxu0
        %vm1585 = vcmask 64512
        %v1586 = vsel %vm1585, %v1582, -inf
        %1587 = vmax.xlane.f32.xlu0 %v1586
        %v1588 = vpop.xlane.xlu0 %1587
        %v1589 = vsub.f32 %v1582, %v1588
        %v1590 = vmul.f32 %v1589, 1.442695
        %v1591 = vpow.pop %v1590
        %v1592 = vsel %vm1585, %v1591, 0.0
        %1593 = vadd.xlane.f32.xlu0 %v1592
        %v1594 = vpop.xlane.xlu0 %1593
        %v1595 = vrcp.pop %v1594
        %v1596 = vmul.f32 %v1594, %v1595
        %v1597 = vsub.f32 1.0, %v1596
        %v1598 = vmul.f32 %v1595, %v1597
        %v1599 = vadd.f32 %v1595, %v1598
        %vm1600 = vweird.f32 %v1594
        %vm1601 = vweird.f32 %v1595
        %vm1602 = vmor %vm1600, %vm1601
        %v1603 = vsel %vm1602, %v1595, %v1599
        %v1604 = vand.u32 2147483647, %v1594
        %vm1605 = vcmp.eq.f32.partialorder %v1604, 8.507059e+37
        %v1606 = vand.u32 %v1594, 2147483648
        %v1607 = vor.u32 1.1754944e-38, %v1606
        %v1608 = vsel %vm1605, %v1607, %v1603
        %v1609 = vmul.f32 %v1591, %v1608
        %v1610 = vpack.c.bf16 %v1609, %v1609
        %v1612 = vsel %vm1585, %v1610, 0
        %vm1614 = vcmask 1043456
        %v1616 = vsel %vm1614, %v1564, 0
        %1618 = vmatpush.bf16.msra.mxu0 0
        %1619 = vmatpush.bf16.msra.mxu0 0
        %1620 = vmatpush.bf16.msra.mxu0 0
        %1621 = vmatpush.bf16.msra.mxu0 0
        %1622 = vmatpush.bf16.msra.mxu0 0
        %1623 = vmatpush.bf16.msra.mxu0 0
        %1624 = vmatpush.bf16.msra.mxu0 0
        %1625 = vmatpush.bf16.msra.mxu0 %v1616
        %1626 = vmatmul.bf16.gmra.mxu0 %v1612
        %v1627 = vpop.f32.mrf.mxu0
        %v1628 = vadd.f32 0.0, %v1627
        %v1629 = vpop.f32.mrf.mxu0
        %1630 = vdwg.mxu0
        %1631 = vst.msk [vmem:[#allocation3] sm:$0xff] %vm1565, %v1628
        %v1633 = vunpack.c.l.b16 %v1562
        %v1634 = vpack.c.b16 %v1633, %v1633
        %1635 = vrot.lane.b32.xlu0 %v1634, 96
        %v1636 = vpop.permute.xlu0 %1635
        %v1638 = vunpack.c.l.b16 %v1563
        %v1639 = vpack.c.b16 %v1638, %v1638
        %1640 = vrot.lane.b32.xlu0 %v1639, 96
        %v1641 = vpop.permute.xlu0 %1640
        %v1643 = vsel %vm1565, %v1636, 0
        %v1646 = vsel %vm1565, %v1641, 0
        %1648 = vmatpush.bf16.xpose.msra.mxu0 0
        %1649 = vmatpush.bf16.xpose.msra.mxu0 0
        %1650 = vmatpush.bf16.xpose.msra.mxu0 0
        %1651 = vmatpush.bf16.xpose.msra.mxu0 0
        %1652 = vmatpush.bf16.xpose.msra.mxu0 0
        %1653 = vmatpush.bf16.xpose.msra.mxu0 0
        %1654 = vmatpush.bf16.xpose.msra.mxu0 0
        %1655 = vmatpush.bf16.xpose.msra.mxu0 %v1646
        %1656 = vmatmul.bf16.gmra.mxu0 %v1643
        %v1657 = vpop.f32.mrf.mxu0
        %v1658 = vadd.f32 %v1296, %v1657
        %v1659 = vpop.f32.mrf.mxu0
        %1660 = vdwg.mxu0
        %v1661 = vsel %vm1585, %v1658, -inf
        %1662 = vmax.xlane.f32.xlu0 %v1661
        %v1663 = vpop.xlane.xlu0 %1662
        %v1664 = vsub.f32 %v1658, %v1663
        %v1665 = vmul.f32 %v1664, 1.442695
        %v1666 = vpow.pop %v1665
        %v1667 = vsel %vm1585, %v1666, 0.0
        %1668 = vadd.xlane.f32.xlu0 %v1667
        %v1669 = vpop.xlane.xlu0 %1668
        %v1670 = vrcp.pop %v1669
        %v1671 = vmul.f32 %v1669, %v1670
        %v1672 = vsub.f32 1.0, %v1671
        %v1673 = vmul.f32 %v1670, %v1672
        %v1674 = vadd.f32 %v1670, %v1673
        %vm1675 = vweird.f32 %v1669
        %vm1676 = vweird.f32 %v1670
        %vm1677 = vmor %vm1675, %vm1676
        %v1678 = vsel %vm1677, %v1670, %v1674
        %v1679 = vand.u32 2147483647, %v1669
        %vm1680 = vcmp.eq.f32.partialorder %v1679, 8.507059e+37
        %v1681 = vand.u32 %v1669, 2147483648
        %v1682 = vor.u32 1.1754944e-38, %v1681
        %v1683 = vsel %vm1680, %v1682, %v1678
        %v1684 = vmul.f32 %v1666, %v1683
        %v1685 = vpack.c.bf16 %v1684, %v1684
        %v1687 = vunpack.c.l.b16 %v1564
        %v1688 = vpack.c.b16 %v1687, %v1687
        %1689 = vrot.lane.b32.xlu0 %v1688, 96
        %v1690 = vpop.permute.xlu0 %1689
        %v1692 = vsel %vm1585, %v1685, 0
        %v1695 = vsel %vm1614, %v1690, 0
        %1697 = vmatpush.bf16.msra.mxu0 0
        %1698 = vmatpush.bf16.msra.mxu0 0
        %1699 = vmatpush.bf16.msra.mxu0 0
        %1700 = vmatpush.bf16.msra.mxu0 0
        %1701 = vmatpush.bf16.msra.mxu0 0
        %1702 = vmatpush.bf16.msra.mxu0 0
        %1703 = vmatpush.bf16.msra.mxu0 0
        %1704 = vmatpush.bf16.msra.mxu0 %v1695
        %1705 = vmatmul.bf16.gmra.mxu0 %v1692
        %v1706 = vpop.f32.mrf.mxu0
        %v1707 = vadd.f32 0.0, %v1706
        %v1708 = vpop.f32.mrf.mxu0
        %1709 = vdwg.mxu0
        %1711 = vrot.lane.b32.xlu0 %v1707, 32
        %v1712 = vpop.permute.xlu0 %1711
        %vm1714 = vcmask 523520
        %1715 = vst.msk [vmem:[#allocation3] sm:$0xff] %vm1714, %v1712
        %1716 = vrot.lane.b32.xlu0 %v1634, 64
        %v1717 = vpop.permute.xlu0 %1716
        %1718 = vrot.lane.b32.xlu0 %v1639, 64
        %v1719 = vpop.permute.xlu0 %1718
        %v1721 = vsel %vm1565, %v1717, 0
        %v1724 = vsel %vm1565, %v1719, 0
        %1726 = vmatpush.bf16.xpose.msra.mxu0 0
        %1727 = vmatpush.bf16.xpose.msra.mxu0 0
        %1728 = vmatpush.bf16.xpose.msra.mxu0 0
        %1729 = vmatpush.bf16.xpose.msra.mxu0 0
        %1730 = vmatpush.bf16.xpose.msra.mxu0 0
        %1731 = vmatpush.bf16.xpose.msra.mxu0 0
        %1732 = vmatpush.bf16.xpose.msra.mxu0 0
        %1733 = vmatpush.bf16.xpose.msra.mxu0 %v1724
        %1734 = vmatmul.bf16.gmra.mxu0 %v1721
        %v1735 = vpop.f32.mrf.mxu0
        %v1736 = vadd.f32 %v1296, %v1735
        %v1737 = vpop.f32.mrf.mxu0
        %1738 = vdwg.mxu0
        %v1739 = vsel %vm1585, %v1736, -inf
        %1740 = vmax.xlane.f32.xlu0 %v1739
        %v1741 = vpop.xlane.xlu0 %1740
        %v1742 = vsub.f32 %v1736, %v1741
        %v1743 = vmul.f32 %v1742, 1.442695
        %v1744 = vpow.pop %v1743
        %v1745 = vsel %vm1585, %v1744, 0.0
        %1746 = vadd.xlane.f32.xlu0 %v1745
        %v1747 = vpop.xlane.xlu0 %1746
        %v1748 = vrcp.pop %v1747
        %v1749 = vmul.f32 %v1747, %v1748
        %v1750 = vsub.f32 1.0, %v1749
        %v1751 = vmul.f32 %v1748, %v1750
        %v1752 = vadd.f32 %v1748, %v1751
        %vm1753 = vweird.f32 %v1747
        %vm1754 = vweird.f32 %v1748
        %vm1755 = vmor %vm1753, %vm1754
        %v1756 = vsel %vm1755, %v1748, %v1752
        %v1757 = vand.u32 2147483647, %v1747
        %vm1758 = vcmp.eq.f32.partialorder %v1757, 8.507059e+37
        %v1759 = vand.u32 %v1747, 2147483648
        %v1760 = vor.u32 1.1754944e-38, %v1759
        %v1761 = vsel %vm1758, %v1760, %v1756
        %v1762 = vmul.f32 %v1744, %v1761
        %v1763 = vpack.c.bf16 %v1762, %v1762
        %1764 = vrot.lane.b32.xlu0 %v1688, 64
        %v1765 = vpop.permute.xlu0 %1764
        %v1767 = vsel %vm1585, %v1763, 0
        %v1770 = vsel %vm1614, %v1765, 0
        %1772 = vmatpush.bf16.msra.mxu0 0
        %1773 = vmatpush.bf16.msra.mxu0 0
        %1774 = vmatpush.bf16.msra.mxu0 0
        %1775 = vmatpush.bf16.msra.mxu0 0
        %1776 = vmatpush.bf16.msra.mxu0 0
        %1777 = vmatpush.bf16.msra.mxu0 0
        %1778 = vmatpush.bf16.msra.mxu0 0
        %1779 = vmatpush.bf16.msra.mxu0 %v1770
        %1780 = vmatmul.bf16.gmra.mxu0 %v1767
        %v1781 = vpop.f32.mrf.mxu0
        %v1782 = vadd.f32 0.0, %v1781
        %v1783 = vpop.f32.mrf.mxu0
        %1784 = vdwg.mxu0
        %1786 = vrot.lane.b32.xlu0 %v1782, 64
        %v1787 = vpop.permute.xlu0 %1786
        %vm1789 = vcmask 785920
        %1790 = vst.msk [vmem:[#allocation3] sm:$0xff] %vm1789, %v1787
        %1791 = vrot.lane.b32.xlu0 %v1634, 32
        %v1792 = vpop.permute.xlu0 %1791
        %1793 = vrot.lane.b32.xlu0 %v1639, 32
        %v1794 = vpop.permute.xlu0 %1793
        %v1796 = vsel %vm1565, %v1792, 0
        %v1799 = vsel %vm1565, %v1794, 0
        %1801 = vmatpush.bf16.xpose.msra.mxu0 0
        %1802 = vmatpush.bf16.xpose.msra.mxu0 0
        %1803 = vmatpush.bf16.xpose.msra.mxu0 0
        %1804 = vmatpush.bf16.xpose.msra.mxu0 0
        %1805 = vmatpush.bf16.xpose.msra.mxu0 0
        %1806 = vmatpush.bf16.xpose.msra.mxu0 0
        %1807 = vmatpush.bf16.xpose.msra.mxu0 0
        %1808 = vmatpush.bf16.xpose.msra.mxu0 %v1799
        %1809 = vmatmul.bf16.gmra.mxu0 %v1796
        %v1810 = vpop.f32.mrf.mxu0
        %v1811 = vadd.f32 %v1296, %v1810
        %v1812 = vpop.f32.mrf.mxu0
        %1813 = vdwg.mxu0
        %v1814 = vsel %vm1585, %v1811, -inf
        %1815 = vmax.xlane.f32.xlu0 %v1814
        %v1816 = vpop.xlane.xlu0 %1815
        %v1817 = vsub.f32 %v1811, %v1816
        %v1818 = vmul.f32 %v1817, 1.442695
        %v1819 = vpow.pop %v1818
        %v1820 = vsel %vm1585, %v1819, 0.0
        %1821 = vadd.xlane.f32.xlu0 %v1820
        %v1822 = vpop.xlane.xlu0 %1821
        %v1823 = vrcp.pop %v1822
        %v1824 = vmul.f32 %v1822, %v1823
        %v1825 = vsub.f32 1.0, %v1824
        %v1826 = vmul.f32 %v1823, %v1825
        %v1827 = vadd.f32 %v1823, %v1826
        %vm1828 = vweird.f32 %v1822
        %vm1829 = vweird.f32 %v1823
        %vm1830 = vmor %vm1828, %vm1829
        %v1831 = vsel %vm1830, %v1823, %v1827
        %v1832 = vand.u32 2147483647, %v1822
        %vm1833 = vcmp.eq.f32.partialorder %v1832, 8.507059e+37
        %v1834 = vand.u32 %v1822, 2147483648
        %v1835 = vor.u32 1.1754944e-38, %v1834
        %v1836 = vsel %vm1833, %v1835, %v1831
        %v1837 = vmul.f32 %v1819, %v1836
        %v1838 = vpack.c.bf16 %v1837, %v1837
        %1839 = vrot.lane.b32.xlu0 %v1688, 32
        %v1840 = vpop.permute.xlu0 %1839
        %v1842 = vsel %vm1585, %v1838, 0
        %v1845 = vsel %vm1614, %v1840, 0
        %1847 = vmatpush.bf16.msra.mxu0 0
        %1848 = vmatpush.bf16.msra.mxu0 0
        %1849 = vmatpush.bf16.msra.mxu0 0
        %1850 = vmatpush.bf16.msra.mxu0 0
        %1851 = vmatpush.bf16.msra.mxu0 0
        %1852 = vmatpush.bf16.msra.mxu0 0
        %1853 = vmatpush.bf16.msra.mxu0 0
        %1854 = vmatpush.bf16.msra.mxu0 %v1845
        %1855 = vmatmul.bf16.gmra.mxu0 %v1842
        %v1856 = vpop.f32.mrf.mxu0
        %v1857 = vadd.f32 0.0, %v1856
        %v1858 = vpop.f32.mrf.mxu0
        %1859 = vdwg.mxu0
        %1861 = vrot.lane.b32.xlu0 %v1857, 96
        %v1862 = vpop.permute.xlu0 %1861
        %vm1864 = vcmask 1048320
        %1865 = vst.msk [vmem:[#allocation3] sm:$0xff] %vm1864, %v1862
        %v1866 = vld [vmem:[#allocation3] sm:$0xff]
        %v1867 = vpack.c.bf16 %v1866, %v1866
        %v1869 = vperm.slane %v1561, 0
        %v1887 = vunpack.c.l.b16 %v1545
        %v1888 = vunpack.c.l.b16 %v1546
        %v1889 = vunpack.c.l.b16 %v1547
        %v1890 = vunpack.c.l.b16 %v1548
        %v1891 = vunpack.c.l.b16 %v1549
        %v1892 = vunpack.c.l.b16 %v1550
        %v1893 = vunpack.c.l.b16 %v1551
        %v1894 = vunpack.c.l.b16 %v1552
        %v1895 = vunpack.c.l.b16 %v1553
        %v1896 = vunpack.c.l.b16 %v1554
        %v1897 = vunpack.c.l.b16 %v1555
        %v1898 = vunpack.c.l.b16 %v1556
        %v1899 = vunpack.c.l.b16 %v1557
        %v1900 = vunpack.c.l.b16 %v1558
        %v1901 = vunpack.c.l.b16 %v1559
        %v1902 = vunpack.c.l.b16 %v1560
        %v1903 = vpack.c.b16 %v1888, %v1887
        %v1904 = vpack.c.b16 %v1890, %v1889
        %v1905 = vpack.c.b16 %v1892, %v1891
        %v1906 = vpack.c.b16 %v1894, %v1893
        %v1907 = vpack.c.b16 %v1896, %v1895
        %v1908 = vpack.c.b16 %v1898, %v1897
        %v1909 = vpack.c.b16 %v1900, %v1899
        %v1910 = vpack.c.b16 %v1902, %v1901
        %1919 = vmatpush.bf16.msra.mxu0 %v1910
        %1920 = vmatpush.bf16.msra.mxu0 %v1909
        %1921 = vmatpush.bf16.msra.mxu0 %v1908
        %1922 = vmatpush.bf16.msra.mxu0 %v1907
        %1923 = vmatpush.bf16.msra.mxu0 %v1906
        %1924 = vmatpush.bf16.msra.mxu0 %v1905
        %1925 = vmatpush.bf16.msra.mxu0 %v1904
        %1926 = vmatpush.bf16.msra.mxu0 %v1903
        %1927 = vmatmul.bf16.gmra.mxu0 %v1867
        %v1928 = vpop.f32.mrf.mxu0
        %v1929 = vadd.f32 %v1869, %v1928
        %v1930 = vpop.f32.mrf.mxu0
        %1931 = vdwg.mxu0
        %v1932 = vadd.f32 %v1304, %v1929
        %1933 = vadd.xlane.f32.xlu0 %v1932
        %v1934 = vpop.xlane.xlu0 %1933
        %v1935 = vmul.f32 %v1934, %v1313
        %v1936 = vsub.f32 %v1932, %v1935
        %v1937 = vmul.f32 %v1936, %v1936
        %1938 = vadd.xlane.f32.xlu0 %v1937
        %v1939 = vpop.xlane.xlu0 %1938
        %v1940 = vmul.f32 %v1939, 0.007874016
        %v1941 = vperm.slane %v1302, 1
        %v1942 = vmul.f32 %v1941, %v1936
        %v1943 = vadd.f32 %v1940, 1e-06
        %v1944 = vrsqrt.pop %v1943
        %v1945 = vmul.f32 %v1944, %v1943
        %v1946 = vmul.f32 %v1945, %v1944
        %v1947 = vmul.f32 0.5, %v1946
        %v1948 = vsub.f32 1.5, %v1947
        %v1949 = vmul.f32 %v1944, %v1948
        %vm1950 = vweird.f32 %v1943
        %vm1951 = vweird.f32 %v1944
        %vm1952 = vmor %vm1950, %vm1951
        %v1953 = vsel %vm1952, %v1944, %v1949
        %v1954 = vmul.f32 %v1942, %v1953
        %v1955 = vperm.slane %v1303, 1
        %v1956 = vadd.f32 %v1954, %v1955
        %v1957 = vld [vmem:[%s1057] sm:$0xf]
        %v1958 = vld [vmem:[%s1057 + $0x4] sm:$0xf]
        %v1959 = vld [vmem:[%s1057 + $0x8] sm:$0xf]
        %v1960 = vld [vmem:[%s1057 + $0xc] sm:$0xf]
        %v1961 = vld [vmem:[%s1057 + $0x10] sm:$0xf]
        %v1962 = vld [vmem:[%s1057 + $0x14] sm:$0xf]
        %v1963 = vld [vmem:[%s1057 + $0x18] sm:$0xf]
        %v1964 = vld [vmem:[%s1057 + $0x1c] sm:$0xf]
        %v1965 = vld [vmem:[%s1057 + $0x20] sm:$0xf]
        %v1966 = vld [vmem:[%s1057 + $0x24] sm:$0xf]
        %v1967 = vld [vmem:[%s1057 + $0x28] sm:$0xf]
        %v1968 = vld [vmem:[%s1057 + $0x2c] sm:$0xf]
        %v1969 = vld [vmem:[%s1057 + $0x30] sm:$0xf]
        %v1970 = vld [vmem:[%s1057 + $0x34] sm:$0xf]
        %v1971 = vld [vmem:[%s1057 + $0x38] sm:$0xf]
        %v1972 = vld [vmem:[%s1057 + $0x3c] sm:$0xf]
        %v1973 = vld [vmem:[%s1066] sm:$0x1]
        %v1974 = vpack.c.bf16 %v1956, %v1956
        %v1976 = vperm.slane %v1973, 0
        %v1994 = vunpack.c.l.b16 %v1957
        %v1995 = vunpack.c.l.b16 %v1958
        %v1996 = vunpack.c.l.b16 %v1959
        %v1997 = vunpack.c.l.b16 %v1960
        %v1998 = vunpack.c.l.b16 %v1961
        %v1999 = vunpack.c.l.b16 %v1962
        %v2000 = vunpack.c.l.b16 %v1963
        %v2001 = vunpack.c.l.b16 %v1964
        %v2002 = vunpack.c.l.b16 %v1965
        %v2003 = vunpack.c.l.b16 %v1966
        %v2004 = vunpack.c.l.b16 %v1967
        %v2005 = vunpack.c.l.b16 %v1968
        %v2006 = vunpack.c.l.b16 %v1969
        %v2007 = vunpack.c.l.b16 %v1970
        %v2008 = vunpack.c.l.b16 %v1971
        %v2009 = vunpack.c.l.b16 %v1972
        %v2010 = vpack.c.b16 %v1995, %v1994
        %v2011 = vpack.c.b16 %v1997, %v1996
        %v2012 = vpack.c.b16 %v1999, %v1998
        %v2013 = vpack.c.b16 %v2001, %v2000
        %v2014 = vpack.c.b16 %v2003, %v2002
        %v2015 = vpack.c.b16 %v2005, %v2004
        %v2016 = vpack.c.b16 %v2007, %v2006
        %v2017 = vpack.c.b16 %v2009, %v2008
        %2026 = vmatpush.bf16.msra.mxu0 %v2017
        %2027 = vmatpush.bf16.msra.mxu0 %v2016
        %2028 = vmatpush.bf16.msra.mxu0 %v2015
        %2029 = vmatpush.bf16.msra.mxu0 %v2014
        %2030 = vmatpush.bf16.msra.mxu0 %v2013
        %2031 = vmatpush.bf16.msra.mxu0 %v2012
        %2032 = vmatpush.bf16.msra.mxu0 %v2011
        %2033 = vmatpush.bf16.msra.mxu0 %v2010
        %2034 = vmatmul.bf16.gmra.mxu0 %v1974
        %v2035 = vpop.f32.mrf.mxu0
        %v2036 = vadd.f32 %v1976, %v2035
        %v2037 = vpop.f32.mrf.mxu0
        %2038 = vdwg.mxu0
        %v2039 = vmul.f32 %v2036, 0.17677669
        %v2040 = vld [vmem:[%s1076] sm:$0xff]
        %v2041 = vld [vmem:[%s1076 + $0x8] sm:$0xff]
        %v2042 = vld [vmem:[%s1076 + $0x10] sm:$0xff]
        %v2043 = vld [vmem:[%s1076 + $0x18] sm:$0xff]
        %v2044 = vld [vmem:[%s1076 + $0x20] sm:$0xff]
        %v2045 = vld [vmem:[%s1076 + $0x28] sm:$0xff]
        %v2046 = vld [vmem:[%s1076 + $0x30] sm:$0xff]
        %v2047 = vld [vmem:[%s1076 + $0x38] sm:$0xff]
        %v2048 = vld [vmem:[%s1076 + $0x40] sm:$0xff]
        %v2049 = vld [vmem:[%s1076 + $0x48] sm:$0xff]
        %v2050 = vld [vmem:[%s1076 + $0x50] sm:$0xff]
        %v2051 = vld [vmem:[%s1076 + $0x58] sm:$0xff]
        %v2052 = vld [vmem:[%s1076 + $0x60] sm:$0xff]
        %v2053 = vld [vmem:[%s1076 + $0x68] sm:$0xff]
        %v2054 = vld [vmem:[%s1076 + $0x70] sm:$0xff]
        %v2055 = vld [vmem:[%s1076 + $0x78] sm:$0xff]
        %v2056 = vld [vmem:[%s1271] sm:$0x3]
        %v2057 = vpack.c.bf16 %v1301, %v1300
        %v2059 = vperm.slane %v2056, 0
        %v2060 = vperm.slane %v2056, 1
        %v2079 = vunpack.c.l.b16 %v2040
        %v2080 = vunpack.c.h.b16 %v2040
        %v2081 = vunpack.c.l.b16 %v2041
        %v2082 = vunpack.c.h.b16 %v2041
        %v2083 = vunpack.c.l.b16 %v2042
        %v2084 = vunpack.c.h.b16 %v2042
        %v2085 = vunpack.c.l.b16 %v2043
        %v2086 = vunpack.c.h.b16 %v2043
        %v2087 = vunpack.c.l.b16 %v2044
        %v2088 = vunpack.c.h.b16 %v2044
        %v2089 = vunpack.c.l.b16 %v2045
        %v2090 = vunpack.c.h.b16 %v2045
        %v2091 = vunpack.c.l.b16 %v2046
        %v2092 = vunpack.c.h.b16 %v2046
        %v2093 = vunpack.c.l.b16 %v2047
        %v2094 = vunpack.c.h.b16 %v2047
        %v2095 = vunpack.c.l.b16 %v2048
        %v2096 = vunpack.c.h.b16 %v2048
        %v2097 = vunpack.c.l.b16 %v2049
        %v2098 = vunpack.c.h.b16 %v2049
        %v2099 = vunpack.c.l.b16 %v2050
        %v2100 = vunpack.c.h.b16 %v2050
        %v2101 = vunpack.c.l.b16 %v2051
        %v2102 = vunpack.c.h.b16 %v2051
        %v2103 = vunpack.c.l.b16 %v2052
        %v2104 = vunpack.c.h.b16 %v2052
        %v2105 = vunpack.c.l.b16 %v2053
        %v2106 = vunpack.c.h.b16 %v2053
        %v2107 = vunpack.c.l.b16 %v2054
        %v2108 = vunpack.c.h.b16 %v2054
        %v2109 = vunpack.c.l.b16 %v2055
        %v2110 = vunpack.c.h.b16 %v2055
        %v2111 = vpack.c.b16 %v2081, %v2079
        %v2112 = vpack.c.b16 %v2082, %v2080
        %v2113 = vpack.c.b16 %v2085, %v2083
        %v2114 = vpack.c.b16 %v2086, %v2084
        %v2115 = vpack.c.b16 %v2089, %v2087
        %v2116 = vpack.c.b16 %v2090, %v2088
        %v2117 = vpack.c.b16 %v2093, %v2091
        %v2118 = vpack.c.b16 %v2094, %v2092
        %v2119 = vpack.c.b16 %v2097, %v2095
        %v2120 = vpack.c.b16 %v2098, %v2096
        %v2121 = vpack.c.b16 %v2101, %v2099
        %v2122 = vpack.c.b16 %v2102, %v2100
        %v2123 = vpack.c.b16 %v2105, %v2103
        %v2124 = vpack.c.b16 %v2106, %v2104
        %v2125 = vpack.c.b16 %v2109, %v2107
        %v2126 = vpack.c.b16 %v2110, %v2108
        %2143 = vmatpush.bf16.msra.mxu0 %v2125
        %2144 = vmatpush.bf16.msra.mxu0 %v2123
        %2145 = vmatpush.bf16.msra.mxu0 %v2121
        %2146 = vmatpush.bf16.msra.mxu0 %v2119
        %2147 = vmatpush.bf16.msra.mxu0 %v2117
        %2148 = vmatpush.bf16.msra.mxu0 %v2115
        %2149 = vmatpush.bf16.msra.mxu0 %v2113
        %2150 = vmatpush.bf16.msra.mxu0 %v2111
        %2151 = vmatmul.bf16.gmra.mxu0 %v2057
        %v2152 = vpop.f32.mrf.mxu0
        %v2153 = vadd.f32 %v2059, %v2152
        %v2154 = vpop.f32.mrf.mxu0
        %v2155 = vadd.f32 %v2059, %v2154
        %2156 = vdwg.mxu0
        %2157 = vmatpush.bf16.msra.mxu0 %v2126
        %2158 = vmatpush.bf16.msra.mxu0 %v2124
        %2159 = vmatpush.bf16.msra.mxu0 %v2122
        %2160 = vmatpush.bf16.msra.mxu0 %v2120
        %2161 = vmatpush.bf16.msra.mxu0 %v2118
        %2162 = vmatpush.bf16.msra.mxu0 %v2116
        %2163 = vmatpush.bf16.msra.mxu0 %v2114
        %2164 = vmatpush.bf16.msra.mxu0 %v2112
        %2165 = vmatmul.bf16.gmra.mxu0 %v2057
        %v2166 = vpop.f32.mrf.mxu0
        %v2167 = vadd.f32 %v2060, %v2166
        %v2168 = vpop.f32.mrf.mxu0
        %v2169 = vadd.f32 %v2060, %v2168
        %2170 = vdwg.mxu0
        %v2171 = vld [vmem:[%s1086] sm:$0xf]
        %v2172 = vld [vmem:[%s1086 + $0x4] sm:$0xf]
        %v2173 = vld [vmem:[%s1086 + $0x8] sm:$0xf]
        %v2174 = vld [vmem:[%s1086 + $0xc] sm:$0xf]
        %v2175 = vld [vmem:[%s1086 + $0x10] sm:$0xf]
        %v2176 = vld [vmem:[%s1086 + $0x14] sm:$0xf]
        %v2177 = vld [vmem:[%s1086 + $0x18] sm:$0xf]
        %v2178 = vld [vmem:[%s1086 + $0x1c] sm:$0xf]
        %v2179 = vld [vmem:[%s1086 + $0x20] sm:$0xf]
        %v2180 = vld [vmem:[%s1086 + $0x24] sm:$0xf]
        %v2181 = vld [vmem:[%s1086 + $0x28] sm:$0xf]
        %v2182 = vld [vmem:[%s1086 + $0x2c] sm:$0xf]
        %v2183 = vld [vmem:[%s1086 + $0x30] sm:$0xf]
        %v2184 = vld [vmem:[%s1086 + $0x34] sm:$0xf]
        %v2185 = vld [vmem:[%s1086 + $0x38] sm:$0xf]
        %v2186 = vld [vmem:[%s1086 + $0x3c] sm:$0xf]
        %v2187 = vld [vmem:[%s1095] sm:$0x1]
        %v2188 = vpack.c.bf16 %v2039, %v2039
        %v2189 = vpack.c.bf16 %v2153, %v2153
        %v2190 = vpack.c.bf16 %v2155, %v2155
        %v2191 = vpack.c.bf16 %v2167, %v2167
        %v2192 = vpack.c.bf16 %v2169, %v2169
        %v2194 = vperm.slane %v1299, 0
        %v2198 = vunpack.c.l.b16 %v2189
        %v2199 = vunpack.c.l.b16 %v2190
        %v2200 = vpack.c.b16 %v2199, %v2198
        %v2202 = vsel %vm1565, %v2188, 0
        %v2205 = vsel %vm1565, %v2200, 0
        %2207 = vmatpush.bf16.xpose.msra.mxu0 0
        %2208 = vmatpush.bf16.xpose.msra.mxu0 0
        %2209 = vmatpush.bf16.xpose.msra.mxu0 0
        %2210 = vmatpush.bf16.xpose.msra.mxu0 0
        %2211 = vmatpush.bf16.xpose.msra.mxu0 0
        %2212 = vmatpush.bf16.xpose.msra.mxu0 0
        %2213 = vmatpush.bf16.xpose.msra.mxu0 0
        %2214 = vmatpush.bf16.xpose.msra.mxu0 %v2205
        %2215 = vmatmul.bf16.gmra.mxu0 %v2202
        %v2216 = vpop.f32.mrf.mxu0
        %v2217 = vadd.f32 %v2194, %v2216
        %v2218 = vpop.f32.mrf.mxu0
        %2219 = vdwg.mxu0
        %vm2220 = vcmask 130048
        %v2221 = vsel %vm2220, %v2217, -inf
        %2222 = vmax.xlane.f32.xlu0 %v2221
        %v2223 = vpop.xlane.xlu0 %2222
        %v2224 = vsub.f32 %v2217, %v2223
        %v2225 = vmul.f32 %v2224, 1.442695
        %v2226 = vpow.pop %v2225
        %v2227 = vsel %vm2220, %v2226, 0.0
        %2228 = vadd.xlane.f32.xlu0 %v2227
        %v2229 = vpop.xlane.xlu0 %2228
        %v2230 = vrcp.pop %v2229
        %v2231 = vmul.f32 %v2229, %v2230
        %v2232 = vsub.f32 1.0, %v2231
        %v2233 = vmul.f32 %v2230, %v2232
        %v2234 = vadd.f32 %v2230, %v2233
        %vm2235 = vweird.f32 %v2229
        %vm2236 = vweird.f32 %v2230
        %vm2237 = vmor %vm2235, %vm2236
        %v2238 = vsel %vm2237, %v2230, %v2234
        %v2239 = vand.u32 2147483647, %v2229
        %vm2240 = vcmp.eq.f32.partialorder %v2239, 8.507059e+37
        %v2241 = vand.u32 %v2229, 2147483648
        %v2242 = vor.u32 1.1754944e-38, %v2241
        %v2243 = vsel %vm2240, %v2242, %v2238
        %v2244 = vmul.f32 %v2226, %v2243
        %v2245 = vpack.c.bf16 %v2244, %v2244
        %v2248 = vunpack.c.l.b16 %v2191
        %v2249 = vunpack.c.l.b16 %v2192
        %v2250 = vpack.c.b16 %v2249, %v2248
        %v2253 = vsel %vm2220, %v2245, 0
        %2255 = vmatpush.bf16.msra.mxu0 0
        %2256 = vmatpush.bf16.msra.mxu0 0
        %2257 = vmatpush.bf16.msra.mxu0 0
        %2258 = vmatpush.bf16.msra.mxu0 0
        %2259 = vmatpush.bf16.msra.mxu0 0
        %2260 = vmatpush.bf16.msra.mxu0 0
        %2261 = vmatpush.bf16.msra.mxu0 0
        %2262 = vmatpush.bf16.msra.mxu0 %v2250
        %2263 = vmatmul.bf16.gmra.mxu0 %v2253
        %v2264 = vpop.f32.mrf.mxu0
        %v2265 = vadd.f32 0.0, %v2264
        %v2266 = vpop.f32.mrf.mxu0
        %2267 = vdwg.mxu0
        %2268 = vst.msk [vmem:[#allocation3] sm:$0xff] %vm1565, %v2265
        %v2270 = vunpack.c.l.b16 %v2188
        %v2271 = vpack.c.b16 %v2270, %v2270
        %2272 = vrot.lane.b32.xlu0 %v2271, 96
        %v2273 = vpop.permute.xlu0 %2272
        %2274 = vrot.lane.b32.xlu0 %v2200, 96
        %v2275 = vpop.permute.xlu0 %2274
        %v2277 = vsel %vm1565, %v2273, 0
        %v2280 = vsel %vm1565, %v2275, 0
        %2282 = vmatpush.bf16.xpose.msra.mxu0 0
        %2283 = vmatpush.bf16.xpose.msra.mxu0 0
        %2284 = vmatpush.bf16.xpose.msra.mxu0 0
        %2285 = vmatpush.bf16.xpose.msra.mxu0 0
        %2286 = vmatpush.bf16.xpose.msra.mxu0 0
        %2287 = vmatpush.bf16.xpose.msra.mxu0 0
        %2288 = vmatpush.bf16.xpose.msra.mxu0 0
        %2289 = vmatpush.bf16.xpose.msra.mxu0 %v2280
        %2290 = vmatmul.bf16.gmra.mxu0 %v2277
        %v2291 = vpop.f32.mrf.mxu0
        %v2292 = vadd.f32 %v2194, %v2291
        %v2293 = vpop.f32.mrf.mxu0
        %2294 = vdwg.mxu0
        %v2295 = vsel %vm2220, %v2292, -inf
        %2296 = vmax.xlane.f32.xlu0 %v2295
        %v2297 = vpop.xlane.xlu0 %2296
        %v2298 = vsub.f32 %v2292, %v2297
        %v2299 = vmul.f32 %v2298, 1.442695
        %v2300 = vpow.pop %v2299
        %v2301 = vsel %vm2220, %v2300, 0.0
        %2302 = vadd.xlane.f32.xlu0 %v2301
        %v2303 = vpop.xlane.xlu0 %2302
        %v2304 = vrcp.pop %v2303
        %v2305 = vmul.f32 %v2303, %v2304
        %v2306 = vsub.f32 1.0, %v2305
        %v2307 = vmul.f32 %v2304, %v2306
        %v2308 = vadd.f32 %v2304, %v2307
        %vm2309 = vweird.f32 %v2303
        %vm2310 = vweird.f32 %v2304
        %vm2311 = vmor %vm2309, %vm2310
        %v2312 = vsel %vm2311, %v2304, %v2308
        %v2313 = vand.u32 2147483647, %v2303
        %vm2314 = vcmp.eq.f32.partialorder %v2313, 8.507059e+37
        %v2315 = vand.u32 %v2303, 2147483648
        %v2316 = vor.u32 1.1754944e-38, %v2315
        %v2317 = vsel %vm2314, %v2316, %v2312
        %v2318 = vmul.f32 %v2300, %v2317
        %v2319 = vpack.c.bf16 %v2318, %v2318
        %2320 = vrot.lane.b32.xlu0 %v2250, 96
        %v2321 = vpop.permute.xlu0 %2320
        %v2324 = vsel %vm2220, %v2319, 0
        %2326 = vmatpush.bf16.msra.mxu0 0
        %2327 = vmatpush.bf16.msra.mxu0 0
        %2328 = vmatpush.bf16.msra.mxu0 0
        %2329 = vmatpush.bf16.msra.mxu0 0
        %2330 = vmatpush.bf16.msra.mxu0 0
        %2331 = vmatpush.bf16.msra.mxu0 0
        %2332 = vmatpush.bf16.msra.mxu0 0
        %2333 = vmatpush.bf16.msra.mxu0 %v2321
        %2334 = vmatmul.bf16.gmra.mxu0 %v2324
        %v2335 = vpop.f32.mrf.mxu0
        %v2336 = vadd.f32 0.0, %v2335
        %v2337 = vpop.f32.mrf.mxu0
        %2338 = vdwg.mxu0
        %2340 = vrot.lane.b32.xlu0 %v2336, 32
        %v2341 = vpop.permute.xlu0 %2340
        %2343 = vst.msk [vmem:[#allocation3] sm:$0xff] %vm1714, %v2341
        %2344 = vrot.lane.b32.xlu0 %v2271, 64
        %v2345 = vpop.permute.xlu0 %2344
        %2346 = vrot.lane.b32.xlu0 %v2200, 64
        %v2347 = vpop.permute.xlu0 %2346
        %v2349 = vsel %vm1565, %v2345, 0
        %v2352 = vsel %vm1565, %v2347, 0
        %2354 = vmatpush.bf16.xpose.msra.mxu0 0
        %2355 = vmatpush.bf16.xpose.msra.mxu0 0
        %2356 = vmatpush.bf16.xpose.msra.mxu0 0
        %2357 = vmatpush.bf16.xpose.msra.mxu0 0
        %2358 = vmatpush.bf16.xpose.msra.mxu0 0
        %2359 = vmatpush.bf16.xpose.msra.mxu0 0
        %2360 = vmatpush.bf16.xpose.msra.mxu0 0
        %2361 = vmatpush.bf16.xpose.msra.mxu0 %v2352
        %2362 = vmatmul.bf16.gmra.mxu0 %v2349
        %v2363 = vpop.f32.mrf.mxu0
        %v2364 = vadd.f32 %v2194, %v2363
        %v2365 = vpop.f32.mrf.mxu0
        %2366 = vdwg.mxu0
        %v2367 = vsel %vm2220, %v2364, -inf
        %2368 = vmax.xlane.f32.xlu0 %v2367
        %v2369 = vpop.xlane.xlu0 %2368
        %v2370 = vsub.f32 %v2364, %v2369
        %v2371 = vmul.f32 %v2370, 1.442695
        %v2372 = vpow.pop %v2371
        %v2373 = vsel %vm2220, %v2372, 0.0
        %2374 = vadd.xlane.f32.xlu0 %v2373
        %v2375 = vpop.xlane.xlu0 %2374
        %v2376 = vrcp.pop %v2375
        %v2377 = vmul.f32 %v2375, %v2376
        %v2378 = vsub.f32 1.0, %v2377
        %v2379 = vmul.f32 %v2376, %v2378
        %v2380 = vadd.f32 %v2376, %v2379
        %vm2381 = vweird.f32 %v2375
        %vm2382 = vweird.f32 %v2376
        %vm2383 = vmor %vm2381, %vm2382
        %v2384 = vsel %vm2383, %v2376, %v2380
        %v2385 = vand.u32 2147483647, %v2375
        %vm2386 = vcmp.eq.f32.partialorder %v2385, 8.507059e+37
        %v2387 = vand.u32 %v2375, 2147483648
        %v2388 = vor.u32 1.1754944e-38, %v2387
        %v2389 = vsel %vm2386, %v2388, %v2384
        %v2390 = vmul.f32 %v2372, %v2389
        %v2391 = vpack.c.bf16 %v2390, %v2390
        %2392 = vrot.lane.b32.xlu0 %v2250, 64
        %v2393 = vpop.permute.xlu0 %2392
        %v2396 = vsel %vm2220, %v2391, 0
        %2398 = vmatpush.bf16.msra.mxu0 0
        %2399 = vmatpush.bf16.msra.mxu0 0
        %2400 = vmatpush.bf16.msra.mxu0 0
        %2401 = vmatpush.bf16.msra.mxu0 0
        %2402 = vmatpush.bf16.msra.mxu0 0
        %2403 = vmatpush.bf16.msra.mxu0 0
        %2404 = vmatpush.bf16.msra.mxu0 0
        %2405 = vmatpush.bf16.msra.mxu0 %v2393
        %2406 = vmatmul.bf16.gmra.mxu0 %v2396
        %v2407 = vpop.f32.mrf.mxu0
        %v2408 = vadd.f32 0.0, %v2407
        %v2409 = vpop.f32.mrf.mxu0
        %2410 = vdwg.mxu0
        %2412 = vrot.lane.b32.xlu0 %v2408, 64
        %v2413 = vpop.permute.xlu0 %2412
        %2415 = vst.msk [vmem:[#allocation3] sm:$0xff] %vm1789, %v2413
        %2416 = vrot.lane.b32.xlu0 %v2271, 32
        %v2417 = vpop.permute.xlu0 %2416
        %2418 = vrot.lane.b32.xlu0 %v2200, 32
        %v2419 = vpop.permute.xlu0 %2418
        %v2421 = vsel %vm1565, %v2417, 0
        %v2424 = vsel %vm1565, %v2419, 0
        %2426 = vmatpush.bf16.xpose.msra.mxu0 0
        %2427 = vmatpush.bf16.xpose.msra.mxu0 0
        %2428 = vmatpush.bf16.xpose.msra.mxu0 0
        %2429 = vmatpush.bf16.xpose.msra.mxu0 0
        %2430 = vmatpush.bf16.xpose.msra.mxu0 0
        %2431 = vmatpush.bf16.xpose.msra.mxu0 0
        %2432 = vmatpush.bf16.xpose.msra.mxu0 0
        %2433 = vmatpush.bf16.xpose.msra.mxu0 %v2424
        %2434 = vmatmul.bf16.gmra.mxu0 %v2421
        %v2435 = vpop.f32.mrf.mxu0
        %v2436 = vadd.f32 %v2194, %v2435
        %v2437 = vpop.f32.mrf.mxu0
        %2438 = vdwg.mxu0
        %v2439 = vsel %vm2220, %v2436, -inf
        %2440 = vmax.xlane.f32.xlu0 %v2439
        %v2441 = vpop.xlane.xlu0 %2440
        %v2442 = vsub.f32 %v2436, %v2441
        %v2443 = vmul.f32 %v2442, 1.442695
        %v2444 = vpow.pop %v2443
        %v2445 = vsel %vm2220, %v2444, 0.0
        %2446 = vadd.xlane.f32.xlu0 %v2445
        %v2447 = vpop.xlane.xlu0 %2446
        %v2448 = vrcp.pop %v2447
        %v2449 = vmul.f32 %v2447, %v2448
        %v2450 = vsub.f32 1.0, %v2449
        %v2451 = vmul.f32 %v2448, %v2450
        %v2452 = vadd.f32 %v2448, %v2451
        %vm2453 = vweird.f32 %v2447
        %vm2454 = vweird.f32 %v2448
        %vm2455 = vmor %vm2453, %vm2454
        %v2456 = vsel %vm2455, %v2448, %v2452
        %v2457 = vand.u32 2147483647, %v2447
        %vm2458 = vcmp.eq.f32.partialorder %v2457, 8.507059e+37
        %v2459 = vand.u32 %v2447, 2147483648
        %v2460 = vor.u32 1.1754944e-38, %v2459
        %v2461 = vsel %vm2458, %v2460, %v2456
        %v2462 = vmul.f32 %v2444, %v2461
        %v2463 = vpack.c.bf16 %v2462, %v2462
        %2464 = vrot.lane.b32.xlu0 %v2250, 32
        %v2465 = vpop.permute.xlu0 %2464
        %v2468 = vsel %vm2220, %v2463, 0
        %2470 = vmatpush.bf16.msra.mxu0 0
        %2471 = vmatpush.bf16.msra.mxu0 0
        %2472 = vmatpush.bf16.msra.mxu0 0
        %2473 = vmatpush.bf16.msra.mxu0 0
        %2474 = vmatpush.bf16.msra.mxu0 0
        %2475 = vmatpush.bf16.msra.mxu0 0
        %2476 = vmatpush.bf16.msra.mxu0 0
        %2477 = vmatpush.bf16.msra.mxu0 %v2465
        %2478 = vmatmul.bf16.gmra.mxu0 %v2468
        %v2479 = vpop.f32.mrf.mxu0
        %v2480 = vadd.f32 0.0, %v2479
        %v2481 = vpop.f32.mrf.mxu0
        %2482 = vdwg.mxu0
        %2484 = vrot.lane.b32.xlu0 %v2480, 96
        %v2485 = vpop.permute.xlu0 %2484
        %2487 = vst.msk [vmem:[#allocation3] sm:$0xff] %vm1864, %v2485
        %v2488 = vld [vmem:[#allocation3] sm:$0xff]
        %v2489 = vpack.c.bf16 %v2488, %v2488
        %v2491 = vperm.slane %v2187, 0
        %v2509 = vunpack.c.l.b16 %v2171
        %v2510 = vunpack.c.l.b16 %v2172
        %v2511 = vunpack.c.l.b16 %v2173
        %v2512 = vunpack.c.l.b16 %v2174
        %v2513 = vunpack.c.l.b16 %v2175
        %v2514 = vunpack.c.l.b16 %v2176
        %v2515 = vunpack.c.l.b16 %v2177
        %v2516 = vunpack.c.l.b16 %v2178
        %v2517 = vunpack.c.l.b16 %v2179
        %v2518 = vunpack.c.l.b16 %v2180
        %v2519 = vunpack.c.l.b16 %v2181
        %v2520 = vunpack.c.l.b16 %v2182
        %v2521 = vunpack.c.l.b16 %v2183
        %v2522 = vunpack.c.l.b16 %v2184
        %v2523 = vunpack.c.l.b16 %v2185
        %v2524 = vunpack.c.l.b16 %v2186
        %v2525 = vpack.c.b16 %v2510, %v2509
        %v2526 = vpack.c.b16 %v2512, %v2511
        %v2527 = vpack.c.b16 %v2514, %v2513
        %v2528 = vpack.c.b16 %v2516, %v2515
        %v2529 = vpack.c.b16 %v2518, %v2517
        %v2530 = vpack.c.b16 %v2520, %v2519
        %v2531 = vpack.c.b16 %v2522, %v2521
        %v2532 = vpack.c.b16 %v2524, %v2523
        %2541 = vmatpush.bf16.msra.mxu0 %v2532
        %2542 = vmatpush.bf16.msra.mxu0 %v2531
        %2543 = vmatpush.bf16.msra.mxu0 %v2530
        %2544 = vmatpush.bf16.msra.mxu0 %v2529
        %2545 = vmatpush.bf16.msra.mxu0 %v2528
        %2546 = vmatpush.bf16.msra.mxu0 %v2527
        %2547 = vmatpush.bf16.msra.mxu0 %v2526
        %2548 = vmatpush.bf16.msra.mxu0 %v2525
        %2549 = vmatmul.bf16.gmra.mxu0 %v2489
        %v2550 = vpop.f32.mrf.mxu0
        %v2551 = vadd.f32 %v2491, %v2550
        %v2552 = vpop.f32.mrf.mxu0
        %2553 = vdwg.mxu0
        %v2554 = vadd.f32 %v1932, %v2551
        %2555 = vadd.xlane.f32.xlu0 %v2554
        %v2556 = vpop.xlane.xlu0 %2555
        %v2557 = vmul.f32 %v2556, %v1313
        %v2558 = vsub.f32 %v2554, %v2557
        %v2559 = vmul.f32 %v2558, %v2558
        %2560 = vadd.xlane.f32.xlu0 %v2559
        %v2561 = vpop.xlane.xlu0 %2560
        %v2562 = vmul.f32 %v2561, 0.007874016
        %v2563 = vperm.slane %v1302, 2
        %v2564 = vmul.f32 %v2563, %v2558
        %v2565 = vadd.f32 %v2562, 1e-06
        %v2566 = vrsqrt.pop %v2565
        %v2567 = vmul.f32 %v2566, %v2565
        %v2568 = vmul.f32 %v2567, %v2566
        %v2569 = vmul.f32 0.5, %v2568
        %v2570 = vsub.f32 1.5, %v2569
        %v2571 = vmul.f32 %v2566, %v2570
        %vm2572 = vweird.f32 %v2565
        %vm2573 = vweird.f32 %v2566
        %vm2574 = vmor %vm2572, %vm2573
        %v2575 = vsel %vm2574, %v2566, %v2571
        %v2576 = vmul.f32 %v2564, %v2575
        %v2577 = vperm.slane %v1303, 2
        %v2578 = vadd.f32 %v2576, %v2577
        %v2579 = vld [vmem:[%s1105] sm:$0xff]
        %v2580 = vld [vmem:[%s1105 + $0x8] sm:$0xff]
        %v2581 = vld [vmem:[%s1105 + $0x10] sm:$0xff]
        %v2582 = vld [vmem:[%s1105 + $0x18] sm:$0xff]
        %v2583 = vld [vmem:[%s1105 + $0x20] sm:$0xff]
        %v2584 = vld [vmem:[%s1105 + $0x28] sm:$0xff]
        %v2585 = vld [vmem:[%s1105 + $0x30] sm:$0xff]
        %v2586 = vld [vmem:[%s1105 + $0x38] sm:$0xff]
        %v2587 = vld [vmem:[%s1105 + $0x40] sm:$0xff]
        %v2588 = vld [vmem:[%s1105 + $0x48] sm:$0xff]
        %v2589 = vld [vmem:[%s1105 + $0x50] sm:$0xff]
        %v2590 = vld [vmem:[%s1105 + $0x58] sm:$0xff]
        %v2591 = vld [vmem:[%s1105 + $0x60] sm:$0xff]
        %v2592 = vld [vmem:[%s1105 + $0x68] sm:$0xff]
        %v2593 = vld [vmem:[%s1105 + $0x70] sm:$0xff]
        %v2594 = vld [vmem:[%s1105 + $0x78] sm:$0xff]
        %v2595 = vld [vmem:[%s1275] sm:$0x3]
        %v2596 = vpack.c.bf16 %v2578, %v2578
        %v2598 = vperm.slane %v2595, 0
        %v2599 = vperm.slane %v2595, 1
        %v2618 = vunpack.c.l.b16 %v2579
        %v2619 = vunpack.c.h.b16 %v2579
        %v2620 = vunpack.c.l.b16 %v2580
        %v2621 = vunpack.c.h.b16 %v2580
        %v2622 = vunpack.c.l.b16 %v2581
        %v2623 = vunpack.c.h.b16 %v2581
        %v2624 = vunpack.c.l.b16 %v2582
        %v2625 = vunpack.c.h.b16 %v2582
        %v2626 = vunpack.c.l.b16 %v2583
        %v2627 = vunpack.c.h.b16 %v2583
        %v2628 = vunpack.c.l.b16 %v2584
        %v2629 = vunpack.c.h.b16 %v2584
        %v2630 = vunpack.c.l.b16 %v2585
        %v2631 = vunpack.c.h.b16 %v2585
        %v2632 = vunpack.c.l.b16 %v2586
        %v2633 = vunpack.c.h.b16 %v2586
        %v2634 = vunpack.c.l.b16 %v2587
        %v2635 = vunpack.c.h.b16 %v2587
        %v2636 = vunpack.c.l.b16 %v2588
        %v2637 = vunpack.c.h.b16 %v2588
        %v2638 = vunpack.c.l.b16 %v2589
        %v2639 = vunpack.c.h.b16 %v2589
        %v2640 = vunpack.c.l.b16 %v2590
        %v2641 = vunpack.c.h.b16 %v2590
        %v2642 = vunpack.c.l.b16 %v2591
        %v2643 = vunpack.c.h.b16 %v2591
        %v2644 = vunpack.c.l.b16 %v2592
        %v2645 = vunpack.c.h.b16 %v2592
        %v2646 = vunpack.c.l.b16 %v2593
        %v2647 = vunpack.c.h.b16 %v2593
        %v2648 = vunpack.c.l.b16 %v2594
        %v2649 = vunpack.c.h.b16 %v2594
        %v2650 = vpack.c.b16 %v2620, %v2618
        %v2651 = vpack.c.b16 %v2621, %v2619
        %v2652 = vpack.c.b16 %v2624, %v2622
        %v2653 = vpack.c.b16 %v2625, %v2623
        %v2654 = vpack.c.b16 %v2628, %v2626
        %v2655 = vpack.c.b16 %v2629, %v2627
        %v2656 = vpack.c.b16 %v2632, %v2630
        %v2657 = vpack.c.b16 %v2633, %v2631
        %v2658 = vpack.c.b16 %v2636, %v2634
        %v2659 = vpack.c.b16 %v2637, %v2635
        %v2660 = vpack.c.b16 %v2640, %v2638
        %v2661 = vpack.c.b16 %v2641, %v2639
        %v2662 = vpack.c.b16 %v2644, %v2642
        %v2663 = vpack.c.b16 %v2645, %v2643
        %v2664 = vpack.c.b16 %v2648, %v2646
        %v2665 = vpack.c.b16 %v2649, %v2647
        %2682 = vmatpush.bf16.msra.mxu0 %v2664
        %2683 = vmatpush.bf16.msra.mxu0 %v2662
        %2684 = vmatpush.bf16.msra.mxu0 %v2660
        %2685 = vmatpush.bf16.msra.mxu0 %v2658
        %2686 = vmatpush.bf16.msra.mxu0 %v2656
        %2687 = vmatpush.bf16.msra.mxu0 %v2654
        %2688 = vmatpush.bf16.msra.mxu0 %v2652
        %2689 = vmatpush.bf16.msra.mxu0 %v2650
        %2690 = vmatmul.bf16.gmra.mxu0 %v2596
        %v2691 = vpop.f32.mrf.mxu0
        %v2692 = vadd.f32 %v2598, %v2691
        %v2693 = vpop.f32.mrf.mxu0
        %2694 = vdwg.mxu0
        %2695 = vmatpush.bf16.msra.mxu0 %v2665
        %2696 = vmatpush.bf16.msra.mxu0 %v2663
        %2697 = vmatpush.bf16.msra.mxu0 %v2661
        %2698 = vmatpush.bf16.msra.mxu0 %v2659
        %2699 = vmatpush.bf16.msra.mxu0 %v2657
        %2700 = vmatpush.bf16.msra.mxu0 %v2655
        %2701 = vmatpush.bf16.msra.mxu0 %v2653
        %2702 = vmatpush.bf16.msra.mxu0 %v2651
        %2703 = vmatmul.bf16.gmra.mxu0 %v2596
        %v2704 = vpop.f32.mrf.mxu0
        %v2705 = vadd.f32 %v2599, %v2704
        %v2706 = vpop.f32.mrf.mxu0
        %2707 = vdwg.mxu0
        %v2708 = vmax.f32 %v2692, 0.0
        %v2709 = vmax.f32 %v2705, 0.0
        %v2710 = vld [vmem:[%s1115] sm:$0xf]
        %v2711 = vld [vmem:[%s1115 + $0x4] sm:$0xf]
        %v2712 = vld [vmem:[%s1115 + $0x8] sm:$0xf]
        %v2713 = vld [vmem:[%s1115 + $0xc] sm:$0xf]
        %v2714 = vld [vmem:[%s1115 + $0x10] sm:$0xf]
        %v2715 = vld [vmem:[%s1115 + $0x14] sm:$0xf]
        %v2716 = vld [vmem:[%s1115 + $0x18] sm:$0xf]
        %v2717 = vld [vmem:[%s1115 + $0x1c] sm:$0xf]
        %v2718 = vld [vmem:[%s1115 + $0x20] sm:$0xf]
        %v2719 = vld [vmem:[%s1115 + $0x24] sm:$0xf]
        %v2720 = vld [vmem:[%s1115 + $0x28] sm:$0xf]
        %v2721 = vld [vmem:[%s1115 + $0x2c] sm:$0xf]
        %v2722 = vld [vmem:[%s1115 + $0x30] sm:$0xf]
        %v2723 = vld [vmem:[%s1115 + $0x34] sm:$0xf]
        %v2724 = vld [vmem:[%s1115 + $0x38] sm:$0xf]
        %v2725 = vld [vmem:[%s1115 + $0x3c] sm:$0xf]
        %v2726 = vld [vmem:[%s1115 + $0x40] sm:$0xf]
        %v2727 = vld [vmem:[%s1115 + $0x44] sm:$0xf]
        %v2728 = vld [vmem:[%s1115 + $0x48] sm:$0xf]
        %v2729 = vld [vmem:[%s1115 + $0x4c] sm:$0xf]
        %v2730 = vld [vmem:[%s1115 + $0x50] sm:$0xf]
        %v2731 = vld [vmem:[%s1115 + $0x54] sm:$0xf]
        %v2732 = vld [vmem:[%s1115 + $0x58] sm:$0xf]
        %v2733 = vld [vmem:[%s1115 + $0x5c] sm:$0xf]
        %v2734 = vld [vmem:[%s1115 + $0x60] sm:$0xf]
        %v2735 = vld [vmem:[%s1115 + $0x64] sm:$0xf]
        %v2736 = vld [vmem:[%s1115 + $0x68] sm:$0xf]
        %v2737 = vld [vmem:[%s1115 + $0x6c] sm:$0xf]
        %v2738 = vld [vmem:[%s1115 + $0x70] sm:$0xf]
        %v2739 = vld [vmem:[%s1115 + $0x74] sm:$0xf]
        %v2740 = vld [vmem:[%s1115 + $0x78] sm:$0xf]
        %v2741 = vld [vmem:[%s1115 + $0x7c] sm:$0xf]
        %v2742 = vld [vmem:[%s1278] sm:$0x1]
        %v2743 = vpack.c.bf16 %v2708, %v2708
        %v2744 = vpack.c.bf16 %v2709, %v2709
        %v2746 = vperm.slane %v2742, 0
        %v2780 = vunpack.c.l.b16 %v2710
        %v2781 = vunpack.c.l.b16 %v2711
        %v2782 = vunpack.c.l.b16 %v2712
        %v2783 = vunpack.c.l.b16 %v2713
        %v2784 = vunpack.c.l.b16 %v2714
        %v2785 = vunpack.c.l.b16 %v2715
        %v2786 = vunpack.c.l.b16 %v2716
        %v2787 = vunpack.c.l.b16 %v2717
        %v2788 = vunpack.c.l.b16 %v2718
        %v2789 = vunpack.c.l.b16 %v2719
        %v2790 = vunpack.c.l.b16 %v2720
        %v2791 = vunpack.c.l.b16 %v2721
        %v2792 = vunpack.c.l.b16 %v2722
        %v2793 = vunpack.c.l.b16 %v2723
        %v2794 = vunpack.c.l.b16 %v2724
        %v2795 = vunpack.c.l.b16 %v2725
        %v2796 = vunpack.c.l.b16 %v2726
        %v2797 = vunpack.c.l.b16 %v2727
        %v2798 = vunpack.c.l.b16 %v2728
        %v2799 = vunpack.c.l.b16 %v2729
        %v2800 = vunpack.c.l.b16 %v2730
        %v2801 = vunpack.c.l.b16 %v2731
        %v2802 = vunpack.c.l.b16 %v2732
        %v2803 = vunpack.c.l.b16 %v2733
        %v2804 = vunpack.c.l.b16 %v2734
        %v2805 = vunpack.c.l.b16 %v2735
        %v2806 = vunpack.c.l.b16 %v2736
        %v2807 = vunpack.c.l.b16 %v2737
        %v2808 = vunpack.c.l.b16 %v2738
        %v2809 = vunpack.c.l.b16 %v2739
        %v2810 = vunpack.c.l.b16 %v2740
        %v2811 = vunpack.c.l.b16 %v2741
        %v2812 = vpack.c.b16 %v2781, %v2780
        %v2813 = vpack.c.b16 %v2783, %v2782
        %v2814 = vpack.c.b16 %v2785, %v2784
        %v2815 = vpack.c.b16 %v2787, %v2786
        %v2816 = vpack.c.b16 %v2789, %v2788
        %v2817 = vpack.c.b16 %v2791, %v2790
        %v2818 = vpack.c.b16 %v2793, %v2792
        %v2819 = vpack.c.b16 %v2795, %v2794
        %v2820 = vpack.c.b16 %v2797, %v2796
        %v2821 = vpack.c.b16 %v2799, %v2798
        %v2822 = vpack.c.b16 %v2801, %v2800
        %v2823 = vpack.c.b16 %v2803, %v2802
        %v2824 = vpack.c.b16 %v2805, %v2804
        %v2825 = vpack.c.b16 %v2807, %v2806
        %v2826 = vpack.c.b16 %v2809, %v2808
        %v2827 = vpack.c.b16 %v2811, %v2810
        %2844 = vmatpush.bf16.msra.mxu0 %v2819
        %2845 = vmatpush.bf16.msra.mxu0 %v2818
        %2846 = vmatpush.bf16.msra.mxu0 %v2817
        %2847 = vmatpush.bf16.msra.mxu0 %v2816
        %2848 = vmatpush.bf16.msra.mxu0 %v2815
        %2849 = vmatpush.bf16.msra.mxu0 %v2814
        %2850 = vmatpush.bf16.msra.mxu0 %v2813
        %2851 = vmatpush.bf16.msra.mxu0 %v2812
        %2852 = vmatmul.bf16.gmra.mxu0 %v2743
        %v2853 = vpop.f32.mrf.mxu0
        %v2854 = vadd.f32 %v2746, %v2853
        %v2855 = vpop.f32.mrf.mxu0
        %2856 = vdwg.mxu0
        %2857 = vmatpush.bf16.msra.mxu0 %v2827
        %2858 = vmatpush.bf16.msra.mxu0 %v2826
        %2859 = vmatpush.bf16.msra.mxu0 %v2825
        %2860 = vmatpush.bf16.msra.mxu0 %v2824
        %2861 = vmatpush.bf16.msra.mxu0 %v2823
        %2862 = vmatpush.bf16.msra.mxu0 %v2822
        %2863 = vmatpush.bf16.msra.mxu0 %v2821
        %2864 = vmatpush.bf16.msra.mxu0 %v2820
        %2865 = vmatmul.bf16.gmra.mxu0 %v2744
        %v2866 = vpop.f32.mrf.mxu0
        %v2867 = vadd.f32 %v2854, %v2866
        %v2868 = vpop.f32.mrf.mxu0
        %2869 = vdwg.mxu0
        %v2870 = vadd.f32 %v2554, %v2867
        %2871 = vst [vmem:[#allocation2] sm:$0xff] %v2870
        %p2872 = scmp.eq.s32.totalorder %s62, 1
        // Predicated region
        $region165: #{tpu_custom_call.1} parent=107 // pred_check
          %p2873 = pneg %p2872
        $region166: #{tpu_custom_call.1} parent=107 // pred_check_branch
          %2875 = sbr.rel (%p2873) target = $region168
        $region167: #{tpu_custom_call.1} parent=107 // pred_region
          %v2876 = vld [vmem:[%s20] sm:$0x1]
          %v2877 = vld [vmem:[%s21] sm:$0x1]
          %2878 = vadd.xlane.f32.xlu0 %v2870
          %v2879 = vpop.xlane.xlu0 %2878
          %v2880 = vmul.f32 %v2879, %v1313
          %v2881 = vsub.f32 %v2870, %v2880
          %v2882 = vmul.f32 %v2881, %v2881
          %2883 = vadd.xlane.f32.xlu0 %v2882
          %v2884 = vpop.xlane.xlu0 %2883
          %v2885 = vmul.f32 %v2884, 0.007874016
          %v2887 = vperm.slane %v2876, 0
          %v2889 = vmul.f32 %v2887, %v2881
          %v2890 = vadd.f32 %v2885, 1e-06
          %v2891 = vrsqrt.pop %v2890
          %v2892 = vmul.f32 %v2891, %v2890
          %v2893 = vmul.f32 %v2892, %v2891
          %v2894 = vmul.f32 0.5, %v2893
          %v2895 = vsub.f32 1.5, %v2894
          %v2896 = vmul.f32 %v2891, %v2895
          %vm2897 = vweird.f32 %v2890
          %vm2898 = vweird.f32 %v2891
          %vm2899 = vmor %vm2897, %vm2898
          %v2900 = vsel %vm2899, %v2891, %v2896
          %v2901 = vmul.f32 %v2889, %v2900
          %v2903 = vperm.slane %v2877, 0
          %v2905 = vadd.f32 %v2901, %v2903
          %2906 = vst [vmem:[%s1259] sm:$0xff] %v2905
        $region168: #{tpu_custom_call.1} parent=107 // pred_fallthru
          _
        %s2907 = sand.u32 %s639, 1
        %s2908 = scalar_lea.sflag [#allocation6], %s2907
        %s2909 = sand.u32 %s639, 1
        %s2910 = smul.addr %s2909, 8
        %s2911 = scalar_lea.vmem [#allocation25], %s2910
        // Predicated region
        $region169: #{tpu_custom_call.1} parent=107 // pred_check
          %p2912 = pneg %p649
        $region170: #{tpu_custom_call.1} parent=107 // pred_check_branch
          %2914 = sbr.rel (%p2912) target = $region172
        $region171: #{tpu_custom_call.1} parent=107 // pred_region
          %2916 = vsyncadd %s2908, 0
          %s2917 = smul.addr %s61, 8
          %s2918 = scalar_lea.hbm %s22, %s2917
          %s2920 = sshll.u32 %s2911, 4
          %s2921 = int_to_ptr.vmem [resolvable:$true] %s2920
          %s2922 = sshll.u32 %s2918, 4
          %s2923 = int_to_ptr.hbm [resolvable:$true] %s2922
          %2925 = dma.vmem_to_hbm [thread:$0]  %s2921, 128, %s2923, %s2908
        $region172: #{tpu_custom_call.1} parent=107 // pred_fallthru
          _
      $region108: #{tpu_custom_call.1} parent=5 // pred_fallthru
        _
      %p2926 = scmp.le.s32.totalorder 2, %s52
      // Predicated region
      $region173: #{tpu_custom_call.1} parent=5 // pred_check
        %p2927 = pneg %p2926
      $region174: #{tpu_custom_call.1} parent=5 // pred_check_branch
        %2929 = sbr.rel (%p2927) target = $region176
      $region175: #{tpu_custom_call.1} parent=5 // pred_region
        %s2930 = ssub.s32 %s52, 2
        // Predicated region
        $region177: #{tpu_custom_call.1} parent=175 // pred_check
          %p2931 = pneg %p655
        $region178: #{tpu_custom_call.1} parent=175 // pred_check_branch
          %2933 = sbr.rel (%p2931) target = $region180
        $region179: #{tpu_custom_call.1} parent=175 // pred_region
          %s2934 = sand.u32 %s640, 1
          %s2935 = scalar_lea.sflag [#allocation6], %s2934
          %s2936 = sand.u32 %s640, 1
          %s2937 = smul.addr %s2936, 8
          %s2938 = scalar_lea.vmem [#allocation25], %s2937
          %2940 = dma.done %s2935, 128
        $region180: #{tpu_custom_call.1} parent=175 // pred_fallthru
          _
      $region176: #{tpu_custom_call.1} parent=5 // pred_fallthru
        _
    $region6: #{tpu_custom_call.1} parent=1 // loop_footer
      %s56 = sadd.s32 1, %s52
    $region7: #{tpu_custom_call.1} parent=1 // loop_footer_branch
      %51 = sbr.rel target = $region3
    $region8: #{tpu_custom_call.1} parent=1 // loop_exit
      _
    %2941 = vsyncpa [#allocation5], 1
    %s2942 = scalar_lea.sflag [#allocation5], 1
    %2943 = vsyncpa %s2942, 1
    %2944 = vsyncpa [#allocation8], 1
    %s2945 = scalar_lea.sflag [#allocation8], 1
    %2946 = vsyncpa %s2945, 1
    %2947 = vsyncpa [#allocation11], 1
    %s2948 = scalar_lea.sflag [#allocation11], 1
    %2949 = vsyncpa %s2948, 1
    %2950 = vsyncpa [#allocation14], 1
    %s2951 = scalar_lea.sflag [#allocation14], 1
    %2952 = vsyncpa %s2951, 1
    %2953 = vsyncpa [#allocation17], 1
    %s2954 = scalar_lea.sflag [#allocation17], 1
    %2955 = vsyncpa %s2954, 1
    %2956 = vsyncpa [#allocation20], 1
    %s2957 = scalar_lea.sflag [#allocation20], 1
    %2958 = vsyncpa %s2957, 1
    %2959 = vsyncpa [#allocation23], 1
    %s2960 = scalar_lea.sflag [#allocation23], 1
    %2961 = vsyncpa %s2960, 1
    %2962 = vsyncpa [#allocation6], 1
    %s2963 = scalar_lea.sflag [#allocation6], 1
    %2964 = vsyncpa %s2963, 1

</llo_original>
